<compile_context>
chip_gen: v7x
topology: tpu7x:2x2x1
jax: 0.10.0
libtpu: 0.0.40
codegen_flags: <defaults>
</compile_context>

<pallas_src>
import functools
import math

import jax
import jax.numpy as jnp
from jax.experimental import pallas as pl
from jax.experimental.pallas import tpu as pltpu

IMG_NORM_MEAN = jnp.array([0.485, 0.456, 0.406], dtype=jnp.float32)
IMG_NORM_STD = jnp.array([0.229, 0.224, 0.225], dtype=jnp.float32)

# ---- scaled-down "dinov2_vits14"-style config (synthetic weights) ----
PATCH_SIZE = 4        # dinov2_vits14 uses 14; 4 keeps the example small
EMBED_DIM = 32        # dinov2_vits14 uses 384
DEPTH = 2             # dinov2_vits14 uses 12
NUM_HEADS = 2
MLP_RATIO = 4
LN_EPS = 1e-6         # DINOv2 uses LayerNorm(eps=1e-6)
MATMUL_DTYPE = jnp.bfloat16   # MXU operand dtype; accumulation stays f32
NEG_INF = -1e30


# --------------------------------------------------------------------------
# In-kernel math helpers (pure jnp, traced inside the Pallas kernel)
# --------------------------------------------------------------------------
def _layernorm(x, g, b):
    mu = jnp.mean(x, axis=-1, keepdims=True)
    var = jnp.mean(jnp.square(x - mu), axis=-1, keepdims=True)
    return (x - mu) * jax.lax.rsqrt(var + LN_EPS) * g + b


def _gelu_tanh(x):
    # tanh-approx GELU: tanh lowers to the (otherwise idle) EUP slot instead of
    # a long VALU erf polynomial.  |diff| vs exact-erf GELU is ~1e-3.
    c = math.sqrt(2.0 / math.pi)
    return 0.5 * x * (1.0 + jnp.tanh(c * (x + 0.044715 * x * x * x)))


# --------------------------------------------------------------------------
# Single fused kernel: one grid step == one image, whole encoder in VMEM/vregs
# --------------------------------------------------------------------------
def dinov2_fused_kernel(
    patches_ref, pw_ref, pb_ref, clspos_ref,
    ln1_g_ref, ln1_b_ref,
    wq_ref, bq_ref, wk_ref, bk_ref, wv_ref, bv_ref, wo_ref, bo_ref, g1_ref,
    ln2_g_ref, ln2_b_ref, w1_ref, b1_ref, w2_ref, b2_ref, g2_ref,
    normg_ref, normb_ref,
    out_ref, *, depth, num_heads, t_real):
    t_pad, d = clspos_ref.shape
    dh = d // num_heads
    att_scale = 1.0 / math.sqrt(dh)
    cdt = MATMUL_DTYPE

    # Patch embedding (ImageNet normalization folded into pw/pb by the wrapper).
    # patches row 0 (cls slot) and the pad rows are zeros; the wrapper compensates
    # the bias on the cls row inside clspos, so x row 0 == cls + pos[0] exactly.
    pt = patches_ref[0].astype(cdt)                                   # [T_pad, K]
    emb = (jnp.dot(pt, pw_ref[...], preferred_element_type=jnp.float32)
           + pb_ref[...])                                             # [T_pad, D]
    x = emb + clspos_ref[...]                                         # [T_pad, D]

    # Additive key mask so padded tokens never contribute to any softmax.
    key_ids = jax.lax.broadcasted_iota(jnp.int32, (1, t_pad), 1)
    kmask = jnp.where(key_ids < t_real, 0.0, NEG_INF).astype(jnp.float32)

    for l in range(depth):                      # DEPTH is small -> static unroll
        # --- attention branch: x = x + ls1 * Wo(attn(norm1(x))) ---
        xn = _layernorm(x, ln1_g_ref[l], ln1_b_ref[l]).astype(cdt)
        attn = None
        for hd in range(num_heads):             # per-head weights pre-split: no lane slicing
            i = l * num_heads + hd
            q = (jnp.dot(xn, wq_ref[i], preferred_element_type=jnp.float32)
                 + bq_ref[i])                                         # [T_pad, dh]
            k = (jnp.dot(xn, wk_ref[i], preferred_element_type=jnp.float32)
                 + bk_ref[i])
            v = (jnp.dot(xn, wv_ref[i], preferred_element_type=jnp.float32)
                 + bv_ref[i])
            s = (jnp.dot(q.astype(cdt), k.T.astype(cdt),
                         preferred_element_type=jnp.float32) * att_scale
                 + kmask)                                             # [T_pad, T_pad]
            s = s - jnp.max(s, axis=-1, keepdims=True)
            p = jnp.exp(s)
            p = p * pl.reciprocal(jnp.sum(p, axis=-1, keepdims=True), approx=True)
            o = jnp.dot(p.astype(cdt), v.astype(cdt),
                        preferred_element_type=jnp.float32)           # [T_pad, dh]
            c = jnp.dot(o.astype(cdt), wo_ref[i],
                        preferred_element_type=jnp.float32)           # [T_pad, D]
            attn = c if attn is None else attn + c                    # sum == concat + Wo
        x = x + g1_ref[l] * (attn + bo_ref[l])

        # --- MLP branch: x = x + ls2 * fc2(gelu(fc1(norm2(x)))) ---
        xn2 = _layernorm(x, ln2_g_ref[l], ln2_b_ref[l]).astype(cdt)
        h1 = (jnp.dot(xn2, w1_ref[l], preferred_element_type=jnp.float32)
              + b1_ref[l])
        h1 = _gelu_tanh(h1)
        h2 = (jnp.dot(h1.astype(cdt), w2_ref[l], preferred_element_type=jnp.float32)
              + b2_ref[l])
        x = x + g2_ref[l] * h2

    # Final LayerNorm (get_intermediate_layers default norm=True).
    out_ref[0] = _layernorm(x, normg_ref[...], normb_ref[...])


# --------------------------------------------------------------------------
# Parameters (deterministic synthetic init)
# --------------------------------------------------------------------------
def init_params(key, num_patches):
    # TODO(synk): torch.hub.load('facebookresearch/dinov2', ...) pretrained weight
    # loading has no in-script equivalent; deterministic synthetic weights are used.
    D = EMBED_DIM
    K = 3 * PATCH_SIZE * PATCH_SIZE
    Dm = D * MLP_RATIO
    keys = iter(jax.random.split(key, 3 + DEPTH * 4))

    def nrm(shape, scale=0.02):
        return (scale * jax.random.normal(next(keys), shape)).astype(jnp.float32)

    params = {
        "patch_w": nrm((K, D)),                      # Conv2d weight, flattened (c,ph,pw)
        "patch_b": jnp.zeros((1, D), jnp.float32),
        "cls": nrm((1, 1, D)),
        "pos": nrm((1, 1 + num_patches, D)),
        "norm_g": jnp.ones((1, D), jnp.float32),
        "norm_b": jnp.zeros((1, D), jnp.float32),
        "blocks": [],
    }
    for _ in range(DEPTH):
        params["blocks"].append({
            "ln1_g": jnp.ones((1, D), jnp.float32),
            "ln1_b": jnp.zeros((1, D), jnp.float32),
            "wqkv": nrm((D, 3 * D)),                 # columns [q | k | v], head-major
            "bqkv": jnp.zeros((1, 3 * D), jnp.float32),
            "wo": nrm((D, D)),
            "bo": jnp.zeros((1, D), jnp.float32),
            "gamma1": jnp.ones((1, D), jnp.float32),  # DINOv2 LayerScale
            "ln2_g": jnp.ones((1, D), jnp.float32),
            "ln2_b": jnp.zeros((1, D), jnp.float32),
            "w1": nrm((D, Dm)),
            "b1": jnp.zeros((1, Dm), jnp.float32),
            "w2": nrm((Dm, D)),
            "b2": jnp.zeros((1, D), jnp.float32),
            "gamma2": jnp.ones((1, D), jnp.float32),
        })
    return params


def _stack(blocks, key):
    return jnp.stack([blk[key] for blk in blocks], axis=0)


# --------------------------------------------------------------------------
# Forward pass (mirrors Dinov2Backbone.forward); all restructuring outside the
# kernel is one-time weight/layout glue in plain XLA.
# --------------------------------------------------------------------------
@functools.partial(jax.jit, static_argnames=("norm",))
def dinov2_backbone_forward(x, params, norm=True):
    B, H, W, C = x.shape
    p = PATCH_SIZE
    h, w = H // p, W // p
    hw = h * w
    D = EMBED_DIM
    dh = D // NUM_HEADS
    K = C * p * p
    L = DEPTH
    T = 1 + hw
    T_pad = ((T + 7) // 8) * 8               # sublane-align the token axis

    # Patchify: [B,H,W,C] -> [B, hw, K] with (c, ph, pw) column order, matching
    # Conv2d(3, D, kernel=p, stride=p) weight flattening; then pad the token axis:
    # row 0 = cls slot (zeros), tail rows = padding (zeros).
    patches = x.reshape(B, h, p, w, p, C).transpose(0, 1, 3, 5, 2, 4)
    patches = patches.reshape(B, hw, K)
    patches = jnp.pad(patches, ((0, 0), (1, T_pad - 1 - hw), (0, 0)))

    # Fold (x/255 - mean)/std into the patch-embed weight/bias (per-column affine).
    if norm:
        ch_scale = 1.0 / (255.0 * IMG_NORM_STD)
        ch_shift = -IMG_NORM_MEAN / IMG_NORM_STD
    else:
        ch_scale = jnp.ones((3,), jnp.float32)
        ch_shift = jnp.zeros((3,), jnp.float32)
    scale_cols = jnp.repeat(ch_scale, p * p)                       # [K]
    shift_cols = jnp.repeat(ch_shift, p * p)                       # [K]
    pw = (params["patch_w"] * scale_cols[:, None]).astype(MATMUL_DTYPE)
    pb = params["patch_b"] + shift_cols[None, :] @ params["patch_w"]   # [1, D] f32

    # cls token + positional embedding as one additive [T_pad, D] slab.
    # Row 0 compensates the patch-embed bias the kernel adds to the (zero) cls row.
    clspos = jnp.concatenate(
        [params["cls"][0] + params["pos"][0, :1] - pb,
         params["pos"][0, 1:],
         jnp.zeros((T_pad - T, D), jnp.float32)], axis=0)          # [T_pad, D]

    blocks = params["blocks"]
    wqkv = _stack(blocks, "wqkv")                                  # [L, D, 3D]
    bqkv = _stack(blocks, "bqkv")                                  # [L, 1, 3D]

    def split_heads_w(wfull):            # [L, D, D] -> [L*NH, D, dh] (head-major cols)
        return (wfull.reshape(L, D, NUM_HEADS, dh)
                .transpose(0, 2, 1, 3).reshape(L * NUM_HEADS, D, dh)
                .astype(MATMUL_DTYPE))

    def split_heads_b(bfull):            # [L, 1, D] -> [L*NH, 1, dh]
        return (bfull.reshape(L, 1, NUM_HEADS, dh)
                .transpose(0, 2, 1, 3).reshape(L * NUM_HEADS, 1, dh))

    wq = split_heads_w(wqkv[:, :, 0 * D:1 * D])
    wk = split_heads_w(wqkv[:, :, 1 * D:2 * D])
    wv = split_heads_w(wqkv[:, :, 2 * D:3 * D])
    bq = split_heads_b(bqkv[:, :, 0 * D:1 * D])
    bk = split_heads_b(bqkv[:, :, 1 * D:2 * D])
    bv = split_heads_b(bqkv[:, :, 2 * D:3 * D])
    # Output projection split by head rows so heads sum in-kernel (no concat).
    wo = (_stack(blocks, "wo").reshape(L, NUM_HEADS, dh, D)
          .reshape(L * NUM_HEADS, dh, D).astype(MATMUL_DTYPE))

    args = [
        patches, pw, pb, clspos,
        _stack(blocks, "ln1_g"), _stack(blocks, "ln1_b"),
        wq, bq, wk, bk, wv, bv, wo,
        _stack(blocks, "bo"), _stack(blocks, "gamma1"),
        _stack(blocks, "ln2_g"), _stack(blocks, "ln2_b"),
        _stack(blocks, "w1").astype(MATMUL_DTYPE), _stack(blocks, "b1"),
        _stack(blocks, "w2").astype(MATMUL_DTYPE), _stack(blocks, "b2"),
        _stack(blocks, "gamma2"),
        params["norm_g"], params["norm_b"],
    ]

    def const_spec(a):                   # whole array resident; block index never changes
        n = a.ndim
        return pl.BlockSpec(a.shape, lambda b, _n=n: (0,) * _n)

    in_specs = ([pl.BlockSpec((1, T_pad, K), lambda b: (b, 0, 0))]
                + [const_spec(a) for a in args[1:]])

    tokens = pl.pallas_call(
        functools.partial(dinov2_fused_kernel,
                          depth=L, num_heads=NUM_HEADS, t_real=T),
        out_shape=jax.ShapeDtypeStruct((B, T_pad, D), jnp.float32),
        grid=(B,),
        in_specs=in_specs,
        out_specs=pl.BlockSpec((1, T_pad, D), lambda b: (b, 0, 0)),
        compiler_params=pltpu.CompilerParams(
            dimension_semantics=("parallel",)),      # batch shards across v7x's 2 TCs
    )(*args)

    # Drop cls + pad tokens and return the torch module's [B, D, h, w] layout.
    y = tokens[:, 1:1 + hw, :].reshape(B, h, w, D).transpose(0, 3, 1, 2)
    return y


if __name__ == "__main__":
    key = jax.random.PRNGKey(0)
    kx, kp = jax.random.split(key)

    B, H, W = 2, 16, 16
    x = jax.random.uniform(kx, (B, H, W, 3), jnp.float32, 0.0, 255.0)

    num_patches = (H // PATCH_SIZE) * (W // PATCH_SIZE)
    params = init_params(kp, num_patches)

    y = dinov2_backbone_forward(x, params, norm=True)
    y = jax.block_until_ready(y)

    assert y.shape == (B, EMBED_DIM, H // PATCH_SIZE, W // PATCH_SIZE), y.shape
    assert bool(jnp.all(jnp.isfinite(y)))
    print("KERNEL_OK")
</pallas_src>

<mosaic_0001>
module attributes {stable_mosaic.version = 11 : i64} {
  func.func @dinov2_fused_kernel(%arg0: i32, %arg1: memref<1x24x48xf32, #tpu.memory_space<vmem>>, %arg2: memref<48x32xbf16, #tpu.memory_space<vmem>>, %arg3: memref<1x32xf32, #tpu.memory_space<vmem>>, %arg4: memref<24x32xf32, #tpu.memory_space<vmem>>, %arg5: memref<2x1x32xf32, #tpu.memory_space<vmem>>, %arg6: memref<2x1x32xf32, #tpu.memory_space<vmem>>, %arg7: memref<4x32x16xbf16, #tpu.memory_space<vmem>>, %arg8: memref<4x1x16xf32, #tpu.memory_space<vmem>>, %arg9: memref<4x32x16xbf16, #tpu.memory_space<vmem>>, %arg10: memref<4x1x16xf32, #tpu.memory_space<vmem>>, %arg11: memref<4x32x16xbf16, #tpu.memory_space<vmem>>, %arg12: memref<4x1x16xf32, #tpu.memory_space<vmem>>, %arg13: memref<4x16x32xbf16, #tpu.memory_space<vmem>>, %arg14: memref<2x1x32xf32, #tpu.memory_space<vmem>>, %arg15: memref<2x1x32xf32, #tpu.memory_space<vmem>>, %arg16: memref<2x1x32xf32, #tpu.memory_space<vmem>>, %arg17: memref<2x1x32xf32, #tpu.memory_space<vmem>>, %arg18: memref<2x32x128xbf16, #tpu.memory_space<vmem>>, %arg19: memref<2x1x128xf32, #tpu.memory_space<vmem>>, %arg20: memref<2x128x32xbf16, #tpu.memory_space<vmem>>, %arg21: memref<2x1x32xf32, #tpu.memory_space<vmem>>, %arg22: memref<2x1x32xf32, #tpu.memory_space<vmem>>, %arg23: memref<1x32xf32, #tpu.memory_space<vmem>>, %arg24: memref<1x32xf32, #tpu.memory_space<vmem>>, %arg25: memref<1x24x32xf32, #tpu.memory_space<vmem>>) attributes {dimension_semantics = [#tpu.dimension_semantics<parallel>], iteration_bounds = array<i64: 2>, scalar_prefetch = 0 : i64, scratch_operands = 0 : i64, tpu.core_type = #tpu.core_type<tc>, window_params = [{transform_indices = @transform_0, window_bounds = array<i64: 1, 24, 48>}, {pipeline_mode = #tpu.pipeline_mode<synchronous>, transform_indices = @transform_1, window_bounds = array<i64: 48, 32>}, {pipeline_mode = #tpu.pipeline_mode<synchronous>, transform_indices = @transform_2, window_bounds = array<i64: 1, 32>}, {pipeline_mode = #tpu.pipeline_mode<synchronous>, transform_indices = @transform_3, window_bounds = array<i64: 24, 32>}, {pipeline_mode = #tpu.pipeline_mode<synchronous>, transform_indices = @transform_4, window_bounds = array<i64: 2, 1, 32>}, {pipeline_mode = #tpu.pipeline_mode<synchronous>, transform_indices = @transform_5, window_bounds = array<i64: 2, 1, 32>}, {pipeline_mode = #tpu.pipeline_mode<synchronous>, transform_indices = @transform_6, window_bounds = array<i64: 4, 32, 16>}, {pipeline_mode = #tpu.pipeline_mode<synchronous>, transform_indices = @transform_7, window_bounds = array<i64: 4, 1, 16>}, {pipeline_mode = #tpu.pipeline_mode<synchronous>, transform_indices = @transform_8, window_bounds = array<i64: 4, 32, 16>}, {pipeline_mode = #tpu.pipeline_mode<synchronous>, transform_indices = @transform_9, window_bounds = array<i64: 4, 1, 16>}, {pipeline_mode = #tpu.pipeline_mode<synchronous>, transform_indices = @transform_10, window_bounds = array<i64: 4, 32, 16>}, {pipeline_mode = #tpu.pipeline_mode<synchronous>, transform_indices = @transform_11, window_bounds = array<i64: 4, 1, 16>}, {pipeline_mode = #tpu.pipeline_mode<synchronous>, transform_indices = @transform_12, window_bounds = array<i64: 4, 16, 32>}, {pipeline_mode = #tpu.pipeline_mode<synchronous>, transform_indices = @transform_13, window_bounds = array<i64: 2, 1, 32>}, {pipeline_mode = #tpu.pipeline_mode<synchronous>, transform_indices = @transform_14, window_bounds = array<i64: 2, 1, 32>}, {pipeline_mode = #tpu.pipeline_mode<synchronous>, transform_indices = @transform_15, window_bounds = array<i64: 2, 1, 32>}, {pipeline_mode = #tpu.pipeline_mode<synchronous>, transform_indices = @transform_16, window_bounds = array<i64: 2, 1, 32>}, {pipeline_mode = #tpu.pipeline_mode<synchronous>, transform_indices = @transform_17, window_bounds = array<i64: 2, 32, 128>}, {pipeline_mode = #tpu.pipeline_mode<synchronous>, transform_indices = @transform_18, window_bounds = array<i64: 2, 1, 128>}, {pipeline_mode = #tpu.pipeline_mode<synchronous>, transform_indices = @transform_19, window_bounds = array<i64: 2, 128, 32>}, {pipeline_mode = #tpu.pipeline_mode<synchronous>, transform_indices = @transform_20, window_bounds = array<i64: 2, 1, 32>}, {pipeline_mode = #tpu.pipeline_mode<synchronous>, transform_indices = @transform_21, window_bounds = array<i64: 2, 1, 32>}, {pipeline_mode = #tpu.pipeline_mode<synchronous>, transform_indices = @transform_22, window_bounds = array<i64: 1, 32>}, {pipeline_mode = #tpu.pipeline_mode<synchronous>, transform_indices = @transform_23, window_bounds = array<i64: 1, 32>}, {transform_indices = @transform_24, window_bounds = array<i64: 1, 24, 32>}]} {
    %c0 = arith.constant 0 : index
    %c0_0 = arith.constant 0 : index
    %c0_1 = arith.constant 0 : index
    %0 = vector.load %arg1[%c0, %c0_0, %c0_1] : memref<1x24x48xf32, #tpu.memory_space<vmem>>, vector<1x24x48xf32>
    %1 = vector.shape_cast %0 : vector<1x24x48xf32> to vector<24x48xf32>
    %2 = arith.truncf %1 : vector<24x48xf32> to vector<24x48xbf16>
    %c0_2 = arith.constant 0 : index
    %c0_3 = arith.constant 0 : index
    %3 = vector.load %arg2[%c0_2, %c0_3] : memref<48x32xbf16, #tpu.memory_space<vmem>>, vector<48x32xbf16>
    %cst = arith.constant dense<0.000000e+00> : vector<24x32xf32>
    %4 = tpu.matmul %2, %3, %cst {dimension_numbers = #tpu.dot_dimension_numbers<[1], [0], [0], [1], [0, 0, 1, 1], [], []>} : vector<24x48xbf16>, vector<48x32xbf16>, vector<24x32xf32> -> vector<24x32xf32>
    %c0_4 = arith.constant 0 : index
    %c0_5 = arith.constant 0 : index
    %5 = vector.load %arg3[%c0_4, %c0_5] : memref<1x32xf32, #tpu.memory_space<vmem>>, vector<1x32xf32>
    %6 = vector.broadcast %5 : vector<1x32xf32> to vector<24x32xf32>
    %7 = arith.addf %4, %6 : vector<24x32xf32>
    %c0_6 = arith.constant 0 : index
    %c0_7 = arith.constant 0 : index
    %8 = vector.load %arg4[%c0_6, %c0_7] : memref<24x32xf32, #tpu.memory_space<vmem>>, vector<24x32xf32>
    %9 = arith.addf %7, %8 : vector<24x32xf32>
    %10 = tpu.iota {dimensions = array<i32: 1>} : vector<1x24xi32>
    %c17_i32 = arith.constant 17 : i32
    %11 = vector.broadcast %c17_i32 : i32 to vector<1x24xi32>
    %12 = arith.cmpi slt, %10, %11 : vector<1x24xi32>
    %cst_8 = arith.constant 0.000000e+00 : f32
    %cst_9 = arith.constant -1.000000e+30 : f32
    %13 = vector.broadcast %cst_8 : f32 to vector<1x24xf32>
    %14 = vector.broadcast %cst_9 : f32 to vector<1x24xf32>
    %15 = arith.select %12, %13, %14 : vector<1x24xi1>, vector<1x24xf32>
    %c0_10 = arith.constant 0 : index
    %c0_11 = arith.constant 0 : index
    %c0_12 = arith.constant 0 : index
    %16 = vector.load %arg5[%c0_10, %c0_11, %c0_12] : memref<2x1x32xf32, #tpu.memory_space<vmem>>, vector<1x1x32xf32>
    %17 = vector.shape_cast %16 : vector<1x1x32xf32> to vector<1x32xf32>
    %c0_13 = arith.constant 0 : index
    %c0_14 = arith.constant 0 : index
    %c0_15 = arith.constant 0 : index
    %18 = vector.load %arg6[%c0_13, %c0_14, %c0_15] : memref<2x1x32xf32, #tpu.memory_space<vmem>>, vector<1x1x32xf32>
    %19 = vector.shape_cast %18 : vector<1x1x32xf32> to vector<1x32xf32>
    %cst_16 = arith.constant dense<0.000000e+00> : vector<24xf32>
    %20 = vector.multi_reduction <add>, %9, %cst_16 [1] : vector<24x32xf32> to vector<24xf32>
    %21 = vector.shape_cast %20 : vector<24xf32> to vector<24x1xf32>
    %cst_17 = arith.constant 3.200000e+01 : f32
    %22 = vector.broadcast %cst_17 : f32 to vector<24x1xf32>
    %23 = arith.divf %21, %22 : vector<24x1xf32>
    %24 = vector.broadcast %23 : vector<24x1xf32> to vector<24x32xf32>
    %25 = arith.subf %9, %24 : vector<24x32xf32>
    %26 = arith.mulf %25, %25 : vector<24x32xf32>
    %cst_18 = arith.constant dense<0.000000e+00> : vector<24xf32>
    %27 = vector.multi_reduction <add>, %26, %cst_18 [1] : vector<24x32xf32> to vector<24xf32>
    %28 = vector.shape_cast %27 : vector<24xf32> to vector<24x1xf32>
    %cst_19 = arith.constant 3.200000e+01 : f32
    %29 = vector.broadcast %cst_19 : f32 to vector<24x1xf32>
    %30 = arith.divf %28, %29 : vector<24x1xf32>
    %31 = vector.broadcast %23 : vector<24x1xf32> to vector<24x32xf32>
    %32 = arith.subf %9, %31 : vector<24x32xf32>
    %cst_20 = arith.constant 9.99999997E-7 : f32
    %33 = vector.broadcast %cst_20 : f32 to vector<24x1xf32>
    %34 = arith.addf %30, %33 : vector<24x1xf32>
    %35 = math.rsqrt %34 : vector<24x1xf32>
    %36 = vector.broadcast %35 : vector<24x1xf32> to vector<24x32xf32>
    %37 = arith.mulf %32, %36 : vector<24x32xf32>
    %38 = vector.broadcast %17 : vector<1x32xf32> to vector<24x32xf32>
    %39 = arith.mulf %37, %38 : vector<24x32xf32>
    %40 = vector.broadcast %19 : vector<1x32xf32> to vector<24x32xf32>
    %41 = arith.addf %39, %40 : vector<24x32xf32>
    %42 = arith.truncf %41 : vector<24x32xf32> to vector<24x32xbf16>
    %c0_21 = arith.constant 0 : index
    %c0_22 = arith.constant 0 : index
    %c0_23 = arith.constant 0 : index
    %43 = vector.load %arg7[%c0_21, %c0_22, %c0_23] : memref<4x32x16xbf16, #tpu.memory_space<vmem>>, vector<1x32x16xbf16>
    %44 = vector.shape_cast %43 : vector<1x32x16xbf16> to vector<32x16xbf16>
    %cst_24 = arith.constant dense<0.000000e+00> : vector<24x16xf32>
    %45 = tpu.matmul %42, %44, %cst_24 {dimension_numbers = #tpu.dot_dimension_numbers<[1], [0], [0], [1], [0, 0, 1, 1], [], []>} : vector<24x32xbf16>, vector<32x16xbf16>, vector<24x16xf32> -> vector<24x16xf32>
    %c0_25 = arith.constant 0 : index
    %c0_26 = arith.constant 0 : index
    %c0_27 = arith.constant 0 : index
    %46 = vector.load %arg8[%c0_25, %c0_26, %c0_27] : memref<4x1x16xf32, #tpu.memory_space<vmem>>, vector<1x1x16xf32>
    %47 = vector.shape_cast %46 : vector<1x1x16xf32> to vector<1x16xf32>
    %48 = vector.broadcast %47 : vector<1x16xf32> to vector<24x16xf32>
    %49 = arith.addf %45, %48 : vector<24x16xf32>
    %c0_28 = arith.constant 0 : index
    %c0_29 = arith.constant 0 : index
    %c0_30 = arith.constant 0 : index
    %50 = vector.load %arg9[%c0_28, %c0_29, %c0_30] : memref<4x32x16xbf16, #tpu.memory_space<vmem>>, vector<1x32x16xbf16>
    %51 = vector.shape_cast %50 : vector<1x32x16xbf16> to vector<32x16xbf16>
    %cst_31 = arith.constant dense<0.000000e+00> : vector<24x16xf32>
    %52 = tpu.matmul %42, %51, %cst_31 {dimension_numbers = #tpu.dot_dimension_numbers<[1], [0], [0], [1], [0, 0, 1, 1], [], []>} : vector<24x32xbf16>, vector<32x16xbf16>, vector<24x16xf32> -> vector<24x16xf32>
    %c0_32 = arith.constant 0 : index
    %c0_33 = arith.constant 0 : index
    %c0_34 = arith.constant 0 : index
    %53 = vector.load %arg10[%c0_32, %c0_33, %c0_34] : memref<4x1x16xf32, #tpu.memory_space<vmem>>, vector<1x1x16xf32>
    %54 = vector.shape_cast %53 : vector<1x1x16xf32> to vector<1x16xf32>
    %55 = vector.broadcast %54 : vector<1x16xf32> to vector<24x16xf32>
    %56 = arith.addf %52, %55 : vector<24x16xf32>
    %c0_35 = arith.constant 0 : index
    %c0_36 = arith.constant 0 : index
    %c0_37 = arith.constant 0 : index
    %57 = vector.load %arg11[%c0_35, %c0_36, %c0_37] : memref<4x32x16xbf16, #tpu.memory_space<vmem>>, vector<1x32x16xbf16>
    %58 = vector.shape_cast %57 : vector<1x32x16xbf16> to vector<32x16xbf16>
    %cst_38 = arith.constant dense<0.000000e+00> : vector<24x16xf32>
    %59 = tpu.matmul %42, %58, %cst_38 {dimension_numbers = #tpu.dot_dimension_numbers<[1], [0], [0], [1], [0, 0, 1, 1], [], []>} : vector<24x32xbf16>, vector<32x16xbf16>, vector<24x16xf32> -> vector<24x16xf32>
    %c0_39 = arith.constant 0 : index
    %c0_40 = arith.constant 0 : index
    %c0_41 = arith.constant 0 : index
    %60 = vector.load %arg12[%c0_39, %c0_40, %c0_41] : memref<4x1x16xf32, #tpu.memory_space<vmem>>, vector<1x1x16xf32>
    %61 = vector.shape_cast %60 : vector<1x1x16xf32> to vector<1x16xf32>
    %62 = vector.broadcast %61 : vector<1x16xf32> to vector<24x16xf32>
    %63 = arith.addf %59, %62 : vector<24x16xf32>
    %64 = arith.truncf %49 : vector<24x16xf32> to vector<24x16xbf16>
    %65 = tpu.transpose %56, [1, 0] : vector<24x16xf32> -> vector<16x24xf32>
    %66 = arith.truncf %65 : vector<16x24xf32> to vector<16x24xbf16>
    %cst_42 = arith.constant dense<0.000000e+00> : vector<24x24xf32>
    %67 = tpu.matmul %64, %66, %cst_42 {dimension_numbers = #tpu.dot_dimension_numbers<[1], [0], [0], [1], [0, 0, 1, 1], [], []>} : vector<24x16xbf16>, vector<16x24xbf16>, vector<24x24xf32> -> vector<24x24xf32>
    %cst_43 = arith.constant 2.500000e-01 : f32
    %68 = vector.broadcast %cst_43 : f32 to vector<24x24xf32>
    %69 = arith.mulf %67, %68 : vector<24x24xf32>
    %70 = vector.broadcast %15 : vector<1x24xf32> to vector<24x24xf32>
    %71 = arith.addf %69, %70 : vector<24x24xf32>
    %cst_44 = arith.constant dense<0xFF800000> : vector<24xf32>
    %72 = vector.multi_reduction <maximumf>, %71, %cst_44 [1] : vector<24x24xf32> to vector<24xf32>
    %73 = vector.shape_cast %72 : vector<24xf32> to vector<24x1xf32>
    %74 = vector.broadcast %73 : vector<24x1xf32> to vector<24x24xf32>
    %75 = arith.subf %71, %74 : vector<24x24xf32>
    %76 = math.exp %75 : vector<24x24xf32>
    %cst_45 = arith.constant dense<0.000000e+00> : vector<24xf32>
    %77 = vector.multi_reduction <add>, %76, %cst_45 [1] : vector<24x24xf32> to vector<24xf32>
    %78 = vector.shape_cast %77 : vector<24xf32> to vector<24x1xf32>
    %79 = tpu.reciprocal %78 {approx = true} : vector<24x1xf32> -> vector<24x1xf32>
    %80 = vector.broadcast %79 : vector<24x1xf32> to vector<24x24xf32>
    %81 = arith.mulf %76, %80 : vector<24x24xf32>
    %82 = arith.truncf %81 : vector<24x24xf32> to vector<24x24xbf16>
    %83 = arith.truncf %63 : vector<24x16xf32> to vector<24x16xbf16>
    %cst_46 = arith.constant dense<0.000000e+00> : vector<24x16xf32>
    %84 = tpu.matmul %82, %83, %cst_46 {dimension_numbers = #tpu.dot_dimension_numbers<[1], [0], [0], [1], [0, 0, 1, 1], [], []>} : vector<24x24xbf16>, vector<24x16xbf16>, vector<24x16xf32> -> vector<24x16xf32>
    %85 = arith.truncf %84 : vector<24x16xf32> to vector<24x16xbf16>
    %c0_47 = arith.constant 0 : index
    %c0_48 = arith.constant 0 : index
    %c0_49 = arith.constant 0 : index
    %86 = vector.load %arg13[%c0_47, %c0_48, %c0_49] : memref<4x16x32xbf16, #tpu.memory_space<vmem>>, vector<1x16x32xbf16>
    %87 = vector.shape_cast %86 : vector<1x16x32xbf16> to vector<16x32xbf16>
    %cst_50 = arith.constant dense<0.000000e+00> : vector<24x32xf32>
    %88 = tpu.matmul %85, %87, %cst_50 {dimension_numbers = #tpu.dot_dimension_numbers<[1], [0], [0], [1], [0, 0, 1, 1], [], []>} : vector<24x16xbf16>, vector<16x32xbf16>, vector<24x32xf32> -> vector<24x32xf32>
    %c1 = arith.constant 1 : index
    %c0_51 = arith.constant 0 : index
    %c0_52 = arith.constant 0 : index
    %89 = vector.load %arg7[%c1, %c0_51, %c0_52] : memref<4x32x16xbf16, #tpu.memory_space<vmem>>, vector<1x32x16xbf16>
    %90 = vector.shape_cast %89 : vector<1x32x16xbf16> to vector<32x16xbf16>
    %cst_53 = arith.constant dense<0.000000e+00> : vector<24x16xf32>
    %91 = tpu.matmul %42, %90, %cst_53 {dimension_numbers = #tpu.dot_dimension_numbers<[1], [0], [0], [1], [0, 0, 1, 1], [], []>} : vector<24x32xbf16>, vector<32x16xbf16>, vector<24x16xf32> -> vector<24x16xf32>
    %c1_54 = arith.constant 1 : index
    %c0_55 = arith.constant 0 : index
    %c0_56 = arith.constant 0 : index
    %92 = vector.load %arg8[%c1_54, %c0_55, %c0_56] : memref<4x1x16xf32, #tpu.memory_space<vmem>>, vector<1x1x16xf32>
    %93 = vector.shape_cast %92 : vector<1x1x16xf32> to vector<1x16xf32>
    %94 = vector.broadcast %93 : vector<1x16xf32> to vector<24x16xf32>
    %95 = arith.addf %91, %94 : vector<24x16xf32>
    %c1_57 = arith.constant 1 : index
    %c0_58 = arith.constant 0 : index
    %c0_59 = arith.constant 0 : index
    %96 = vector.load %arg9[%c1_57, %c0_58, %c0_59] : memref<4x32x16xbf16, #tpu.memory_space<vmem>>, vector<1x32x16xbf16>
    %97 = vector.shape_cast %96 : vector<1x32x16xbf16> to vector<32x16xbf16>
    %cst_60 = arith.constant dense<0.000000e+00> : vector<24x16xf32>
    %98 = tpu.matmul %42, %97, %cst_60 {dimension_numbers = #tpu.dot_dimension_numbers<[1], [0], [0], [1], [0, 0, 1, 1], [], []>} : vector<24x32xbf16>, vector<32x16xbf16>, vector<24x16xf32> -> vector<24x16xf32>
    %c1_61 = arith.constant 1 : index
    %c0_62 = arith.constant 0 : index
    %c0_63 = arith.constant 0 : index
    %99 = vector.load %arg10[%c1_61, %c0_62, %c0_63] : memref<4x1x16xf32, #tpu.memory_space<vmem>>, vector<1x1x16xf32>
    %100 = vector.shape_cast %99 : vector<1x1x16xf32> to vector<1x16xf32>
    %101 = vector.broadcast %100 : vector<1x16xf32> to vector<24x16xf32>
    %102 = arith.addf %98, %101 : vector<24x16xf32>
    %c1_64 = arith.constant 1 : index
    %c0_65 = arith.constant 0 : index
    %c0_66 = arith.constant 0 : index
    %103 = vector.load %arg11[%c1_64, %c0_65, %c0_66] : memref<4x32x16xbf16, #tpu.memory_space<vmem>>, vector<1x32x16xbf16>
    %104 = vector.shape_cast %103 : vector<1x32x16xbf16> to vector<32x16xbf16>
    %cst_67 = arith.constant dense<0.000000e+00> : vector<24x16xf32>
    %105 = tpu.matmul %42, %104, %cst_67 {dimension_numbers = #tpu.dot_dimension_numbers<[1], [0], [0], [1], [0, 0, 1, 1], [], []>} : vector<24x32xbf16>, vector<32x16xbf16>, vector<24x16xf32> -> vector<24x16xf32>
    %c1_68 = arith.constant 1 : index
    %c0_69 = arith.constant 0 : index
    %c0_70 = arith.constant 0 : index
    %106 = vector.load %arg12[%c1_68, %c0_69, %c0_70] : memref<4x1x16xf32, #tpu.memory_space<vmem>>, vector<1x1x16xf32>
    %107 = vector.shape_cast %106 : vector<1x1x16xf32> to vector<1x16xf32>
    %108 = vector.broadcast %107 : vector<1x16xf32> to vector<24x16xf32>
    %109 = arith.addf %105, %108 : vector<24x16xf32>
    %110 = arith.truncf %95 : vector<24x16xf32> to vector<24x16xbf16>
    %111 = tpu.transpose %102, [1, 0] : vector<24x16xf32> -> vector<16x24xf32>
    %112 = arith.truncf %111 : vector<16x24xf32> to vector<16x24xbf16>
    %cst_71 = arith.constant dense<0.000000e+00> : vector<24x24xf32>
    %113 = tpu.matmul %110, %112, %cst_71 {dimension_numbers = #tpu.dot_dimension_numbers<[1], [0], [0], [1], [0, 0, 1, 1], [], []>} : vector<24x16xbf16>, vector<16x24xbf16>, vector<24x24xf32> -> vector<24x24xf32>
    %cst_72 = arith.constant 2.500000e-01 : f32
    %114 = vector.broadcast %cst_72 : f32 to vector<24x24xf32>
    %115 = arith.mulf %113, %114 : vector<24x24xf32>
    %116 = vector.broadcast %15 : vector<1x24xf32> to vector<24x24xf32>
    %117 = arith.addf %115, %116 : vector<24x24xf32>
    %cst_73 = arith.constant dense<0xFF800000> : vector<24xf32>
    %118 = vector.multi_reduction <maximumf>, %117, %cst_73 [1] : vector<24x24xf32> to vector<24xf32>
    %119 = vector.shape_cast %118 : vector<24xf32> to vector<24x1xf32>
    %120 = vector.broadcast %119 : vector<24x1xf32> to vector<24x24xf32>
    %121 = arith.subf %117, %120 : vector<24x24xf32>
    %122 = math.exp %121 : vector<24x24xf32>
    %cst_74 = arith.constant dense<0.000000e+00> : vector<24xf32>
    %123 = vector.multi_reduction <add>, %122, %cst_74 [1] : vector<24x24xf32> to vector<24xf32>
    %124 = vector.shape_cast %123 : vector<24xf32> to vector<24x1xf32>
    %125 = tpu.reciprocal %124 {approx = true} : vector<24x1xf32> -> vector<24x1xf32>
    %126 = vector.broadcast %125 : vector<24x1xf32> to vector<24x24xf32>
    %127 = arith.mulf %122, %126 : vector<24x24xf32>
    %128 = arith.truncf %127 : vector<24x24xf32> to vector<24x24xbf16>
    %129 = arith.truncf %109 : vector<24x16xf32> to vector<24x16xbf16>
    %cst_75 = arith.constant dense<0.000000e+00> : vector<24x16xf32>
    %130 = tpu.matmul %128, %129, %cst_75 {dimension_numbers = #tpu.dot_dimension_numbers<[1], [0], [0], [1], [0, 0, 1, 1], [], []>} : vector<24x24xbf16>, vector<24x16xbf16>, vector<24x16xf32> -> vector<24x16xf32>
    %131 = arith.truncf %130 : vector<24x16xf32> to vector<24x16xbf16>
    %c1_76 = arith.constant 1 : index
    %c0_77 = arith.constant 0 : index
    %c0_78 = arith.constant 0 : index
    %132 = vector.load %arg13[%c1_76, %c0_77, %c0_78] : memref<4x16x32xbf16, #tpu.memory_space<vmem>>, vector<1x16x32xbf16>
    %133 = vector.shape_cast %132 : vector<1x16x32xbf16> to vector<16x32xbf16>
    %cst_79 = arith.constant dense<0.000000e+00> : vector<24x32xf32>
    %134 = tpu.matmul %131, %133, %cst_79 {dimension_numbers = #tpu.dot_dimension_numbers<[1], [0], [0], [1], [0, 0, 1, 1], [], []>} : vector<24x16xbf16>, vector<16x32xbf16>, vector<24x32xf32> -> vector<24x32xf32>
    %135 = arith.addf %88, %134 : vector<24x32xf32>
    %c0_80 = arith.constant 0 : index
    %c0_81 = arith.constant 0 : index
    %c0_82 = arith.constant 0 : index
    %136 = vector.load %arg15[%c0_80, %c0_81, %c0_82] : memref<2x1x32xf32, #tpu.memory_space<vmem>>, vector<1x1x32xf32>
    %137 = vector.shape_cast %136 : vector<1x1x32xf32> to vector<1x32xf32>
    %c0_83 = arith.constant 0 : index
    %c0_84 = arith.constant 0 : index
    %c0_85 = arith.constant 0 : index
    %138 = vector.load %arg14[%c0_83, %c0_84, %c0_85] : memref<2x1x32xf32, #tpu.memory_space<vmem>>, vector<1x1x32xf32>
    %139 = vector.shape_cast %138 : vector<1x1x32xf32> to vector<1x32xf32>
    %140 = vector.broadcast %139 : vector<1x32xf32> to vector<24x32xf32>
    %141 = arith.addf %135, %140 : vector<24x32xf32>
    %142 = vector.broadcast %137 : vector<1x32xf32> to vector<24x32xf32>
    %143 = arith.mulf %142, %141 : vector<24x32xf32>
    %144 = arith.addf %9, %143 : vector<24x32xf32>
    %c0_86 = arith.constant 0 : index
    %c0_87 = arith.constant 0 : index
    %c0_88 = arith.constant 0 : index
    %145 = vector.load %arg16[%c0_86, %c0_87, %c0_88] : memref<2x1x32xf32, #tpu.memory_space<vmem>>, vector<1x1x32xf32>
    %146 = vector.shape_cast %145 : vector<1x1x32xf32> to vector<1x32xf32>
    %c0_89 = arith.constant 0 : index
    %c0_90 = arith.constant 0 : index
    %c0_91 = arith.constant 0 : index
    %147 = vector.load %arg17[%c0_89, %c0_90, %c0_91] : memref<2x1x32xf32, #tpu.memory_space<vmem>>, vector<1x1x32xf32>
    %148 = vector.shape_cast %147 : vector<1x1x32xf32> to vector<1x32xf32>
    %cst_92 = arith.constant dense<0.000000e+00> : vector<24xf32>
    %149 = vector.multi_reduction <add>, %144, %cst_92 [1] : vector<24x32xf32> to vector<24xf32>
    %150 = vector.shape_cast %149 : vector<24xf32> to vector<24x1xf32>
    %cst_93 = arith.constant 3.200000e+01 : f32
    %151 = vector.broadcast %cst_93 : f32 to vector<24x1xf32>
    %152 = arith.divf %150, %151 : vector<24x1xf32>
    %153 = vector.broadcast %152 : vector<24x1xf32> to vector<24x32xf32>
    %154 = arith.subf %144, %153 : vector<24x32xf32>
    %155 = arith.mulf %154, %154 : vector<24x32xf32>
    %cst_94 = arith.constant dense<0.000000e+00> : vector<24xf32>
    %156 = vector.multi_reduction <add>, %155, %cst_94 [1] : vector<24x32xf32> to vector<24xf32>
    %157 = vector.shape_cast %156 : vector<24xf32> to vector<24x1xf32>
    %cst_95 = arith.constant 3.200000e+01 : f32
    %158 = vector.broadcast %cst_95 : f32 to vector<24x1xf32>
    %159 = arith.divf %157, %158 : vector<24x1xf32>
    %160 = vector.broadcast %152 : vector<24x1xf32> to vector<24x32xf32>
    %161 = arith.subf %144, %160 : vector<24x32xf32>
    %cst_96 = arith.constant 9.99999997E-7 : f32
    %162 = vector.broadcast %cst_96 : f32 to vector<24x1xf32>
    %163 = arith.addf %159, %162 : vector<24x1xf32>
    %164 = math.rsqrt %163 : vector<24x1xf32>
    %165 = vector.broadcast %164 : vector<24x1xf32> to vector<24x32xf32>
    %166 = arith.mulf %161, %165 : vector<24x32xf32>
    %167 = vector.broadcast %146 : vector<1x32xf32> to vector<24x32xf32>
    %168 = arith.mulf %166, %167 : vector<24x32xf32>
    %169 = vector.broadcast %148 : vector<1x32xf32> to vector<24x32xf32>
    %170 = arith.addf %168, %169 : vector<24x32xf32>
    %171 = arith.truncf %170 : vector<24x32xf32> to vector<24x32xbf16>
    %c0_97 = arith.constant 0 : index
    %c0_98 = arith.constant 0 : index
    %c0_99 = arith.constant 0 : index
    %172 = vector.load %arg18[%c0_97, %c0_98, %c0_99] : memref<2x32x128xbf16, #tpu.memory_space<vmem>>, vector<1x32x128xbf16>
    %173 = vector.shape_cast %172 : vector<1x32x128xbf16> to vector<32x128xbf16>
    %cst_100 = arith.constant dense<0.000000e+00> : vector<24x128xf32>
    %174 = tpu.matmul %171, %173, %cst_100 {dimension_numbers = #tpu.dot_dimension_numbers<[1], [0], [0], [1], [0, 0, 1, 1], [], []>} : vector<24x32xbf16>, vector<32x128xbf16>, vector<24x128xf32> -> vector<24x128xf32>
    %c0_101 = arith.constant 0 : index
    %c0_102 = arith.constant 0 : index
    %c0_103 = arith.constant 0 : index
    %175 = vector.load %arg19[%c0_101, %c0_102, %c0_103] : memref<2x1x128xf32, #tpu.memory_space<vmem>>, vector<1x1x128xf32>
    %176 = vector.shape_cast %175 : vector<1x1x128xf32> to vector<1x128xf32>
    %177 = vector.broadcast %176 : vector<1x128xf32> to vector<24x128xf32>
    %178 = arith.addf %174, %177 : vector<24x128xf32>
    %cst_104 = arith.constant 5.000000e-01 : f32
    %179 = vector.broadcast %cst_104 : f32 to vector<24x128xf32>
    %180 = arith.mulf %179, %178 : vector<24x128xf32>
    %cst_105 = arith.constant 4.471500e-02 : f32
    %181 = vector.broadcast %cst_105 : f32 to vector<24x128xf32>
    %182 = arith.mulf %181, %178 : vector<24x128xf32>
    %183 = arith.mulf %182, %178 : vector<24x128xf32>
    %184 = arith.mulf %183, %178 : vector<24x128xf32>
    %185 = arith.addf %178, %184 : vector<24x128xf32>
    %cst_106 = arith.constant 0.797884583 : f32
    %186 = vector.broadcast %cst_106 : f32 to vector<24x128xf32>
    %187 = arith.mulf %186, %185 : vector<24x128xf32>
    %188 = math.tanh %187 : vector<24x128xf32>
    %cst_107 = arith.constant 1.000000e+00 : f32
    %189 = vector.broadcast %cst_107 : f32 to vector<24x128xf32>
    %190 = arith.addf %189, %188 : vector<24x128xf32>
    %191 = arith.mulf %180, %190 : vector<24x128xf32>
    %192 = arith.truncf %191 : vector<24x128xf32> to vector<24x128xbf16>
    %c0_108 = arith.constant 0 : index
    %c0_109 = arith.constant 0 : index
    %c0_110 = arith.constant 0 : index
    %193 = vector.load %arg20[%c0_108, %c0_109, %c0_110] : memref<2x128x32xbf16, #tpu.memory_space<vmem>>, vector<1x128x32xbf16>
    %194 = vector.shape_cast %193 : vector<1x128x32xbf16> to vector<128x32xbf16>
    %cst_111 = arith.constant dense<0.000000e+00> : vector<24x32xf32>
    %195 = tpu.matmul %192, %194, %cst_111 {dimension_numbers = #tpu.dot_dimension_numbers<[1], [0], [0], [1], [0, 0, 1, 1], [], []>} : vector<24x128xbf16>, vector<128x32xbf16>, vector<24x32xf32> -> vector<24x32xf32>
    %c0_112 = arith.constant 0 : index
    %c0_113 = arith.constant 0 : index
    %c0_114 = arith.constant 0 : index
    %196 = vector.load %arg21[%c0_112, %c0_113, %c0_114] : memref<2x1x32xf32, #tpu.memory_space<vmem>>, vector<1x1x32xf32>
    %197 = vector.shape_cast %196 : vector<1x1x32xf32> to vector<1x32xf32>
    %198 = vector.broadcast %197 : vector<1x32xf32> to vector<24x32xf32>
    %199 = arith.addf %195, %198 : vector<24x32xf32>
    %c0_115 = arith.constant 0 : index
    %c0_116 = arith.constant 0 : index
    %c0_117 = arith.constant 0 : index
    %200 = vector.load %arg22[%c0_115, %c0_116, %c0_117] : memref<2x1x32xf32, #tpu.memory_space<vmem>>, vector<1x1x32xf32>
    %201 = vector.shape_cast %200 : vector<1x1x32xf32> to vector<1x32xf32>
    %202 = vector.broadcast %201 : vector<1x32xf32> to vector<24x32xf32>
    %203 = arith.mulf %202, %199 : vector<24x32xf32>
    %204 = arith.addf %144, %203 : vector<24x32xf32>
    %c1_118 = arith.constant 1 : index
    %c0_119 = arith.constant 0 : index
    %c0_120 = arith.constant 0 : index
    %205 = vector.load %arg5[%c1_118, %c0_119, %c0_120] : memref<2x1x32xf32, #tpu.memory_space<vmem>>, vector<1x1x32xf32>
    %206 = vector.shape_cast %205 : vector<1x1x32xf32> to vector<1x32xf32>
    %c1_121 = arith.constant 1 : index
    %c0_122 = arith.constant 0 : index
    %c0_123 = arith.constant 0 : index
    %207 = vector.load %arg6[%c1_121, %c0_122, %c0_123] : memref<2x1x32xf32, #tpu.memory_space<vmem>>, vector<1x1x32xf32>
    %208 = vector.shape_cast %207 : vector<1x1x32xf32> to vector<1x32xf32>
    %cst_124 = arith.constant dense<0.000000e+00> : vector<24xf32>
    %209 = vector.multi_reduction <add>, %204, %cst_124 [1] : vector<24x32xf32> to vector<24xf32>
    %210 = vector.shape_cast %209 : vector<24xf32> to vector<24x1xf32>
    %cst_125 = arith.constant 3.200000e+01 : f32
    %211 = vector.broadcast %cst_125 : f32 to vector<24x1xf32>
    %212 = arith.divf %210, %211 : vector<24x1xf32>
    %213 = vector.broadcast %212 : vector<24x1xf32> to vector<24x32xf32>
    %214 = arith.subf %204, %213 : vector<24x32xf32>
    %215 = arith.mulf %214, %214 : vector<24x32xf32>
    %cst_126 = arith.constant dense<0.000000e+00> : vector<24xf32>
    %216 = vector.multi_reduction <add>, %215, %cst_126 [1] : vector<24x32xf32> to vector<24xf32>
    %217 = vector.shape_cast %216 : vector<24xf32> to vector<24x1xf32>
    %cst_127 = arith.constant 3.200000e+01 : f32
    %218 = vector.broadcast %cst_127 : f32 to vector<24x1xf32>
    %219 = arith.divf %217, %218 : vector<24x1xf32>
    %220 = vector.broadcast %212 : vector<24x1xf32> to vector<24x32xf32>
    %221 = arith.subf %204, %220 : vector<24x32xf32>
    %cst_128 = arith.constant 9.99999997E-7 : f32
    %222 = vector.broadcast %cst_128 : f32 to vector<24x1xf32>
    %223 = arith.addf %219, %222 : vector<24x1xf32>
    %224 = math.rsqrt %223 : vector<24x1xf32>
    %225 = vector.broadcast %224 : vector<24x1xf32> to vector<24x32xf32>
    %226 = arith.mulf %221, %225 : vector<24x32xf32>
    %227 = vector.broadcast %206 : vector<1x32xf32> to vector<24x32xf32>
    %228 = arith.mulf %226, %227 : vector<24x32xf32>
    %229 = vector.broadcast %208 : vector<1x32xf32> to vector<24x32xf32>
    %230 = arith.addf %228, %229 : vector<24x32xf32>
    %231 = arith.truncf %230 : vector<24x32xf32> to vector<24x32xbf16>
    %c2 = arith.constant 2 : index
    %c0_129 = arith.constant 0 : index
    %c0_130 = arith.constant 0 : index
    %232 = vector.load %arg7[%c2, %c0_129, %c0_130] : memref<4x32x16xbf16, #tpu.memory_space<vmem>>, vector<1x32x16xbf16>
    %233 = vector.shape_cast %232 : vector<1x32x16xbf16> to vector<32x16xbf16>
    %cst_131 = arith.constant dense<0.000000e+00> : vector<24x16xf32>
    %234 = tpu.matmul %231, %233, %cst_131 {dimension_numbers = #tpu.dot_dimension_numbers<[1], [0], [0], [1], [0, 0, 1, 1], [], []>} : vector<24x32xbf16>, vector<32x16xbf16>, vector<24x16xf32> -> vector<24x16xf32>
    %c2_132 = arith.constant 2 : index
    %c0_133 = arith.constant 0 : index
    %c0_134 = arith.constant 0 : index
    %235 = vector.load %arg8[%c2_132, %c0_133, %c0_134] : memref<4x1x16xf32, #tpu.memory_space<vmem>>, vector<1x1x16xf32>
    %236 = vector.shape_cast %235 : vector<1x1x16xf32> to vector<1x16xf32>
    %237 = vector.broadcast %236 : vector<1x16xf32> to vector<24x16xf32>
    %238 = arith.addf %234, %237 : vector<24x16xf32>
    %c2_135 = arith.constant 2 : index
    %c0_136 = arith.constant 0 : index
    %c0_137 = arith.constant 0 : index
    %239 = vector.load %arg9[%c2_135, %c0_136, %c0_137] : memref<4x32x16xbf16, #tpu.memory_space<vmem>>, vector<1x32x16xbf16>
    %240 = vector.shape_cast %239 : vector<1x32x16xbf16> to vector<32x16xbf16>
    %cst_138 = arith.constant dense<0.000000e+00> : vector<24x16xf32>
    %241 = tpu.matmul %231, %240, %cst_138 {dimension_numbers = #tpu.dot_dimension_numbers<[1], [0], [0], [1], [0, 0, 1, 1], [], []>} : vector<24x32xbf16>, vector<32x16xbf16>, vector<24x16xf32> -> vector<24x16xf32>
    %c2_139 = arith.constant 2 : index
    %c0_140 = arith.constant 0 : index
    %c0_141 = arith.constant 0 : index
    %242 = vector.load %arg10[%c2_139, %c0_140, %c0_141] : memref<4x1x16xf32, #tpu.memory_space<vmem>>, vector<1x1x16xf32>
    %243 = vector.shape_cast %242 : vector<1x1x16xf32> to vector<1x16xf32>
    %244 = vector.broadcast %243 : vector<1x16xf32> to vector<24x16xf32>
    %245 = arith.addf %241, %244 : vector<24x16xf32>
    %c2_142 = arith.constant 2 : index
    %c0_143 = arith.constant 0 : index
    %c0_144 = arith.constant 0 : index
    %246 = vector.load %arg11[%c2_142, %c0_143, %c0_144] : memref<4x32x16xbf16, #tpu.memory_space<vmem>>, vector<1x32x16xbf16>
    %247 = vector.shape_cast %246 : vector<1x32x16xbf16> to vector<32x16xbf16>
    %cst_145 = arith.constant dense<0.000000e+00> : vector<24x16xf32>
    %248 = tpu.matmul %231, %247, %cst_145 {dimension_numbers = #tpu.dot_dimension_numbers<[1], [0], [0], [1], [0, 0, 1, 1], [], []>} : vector<24x32xbf16>, vector<32x16xbf16>, vector<24x16xf32> -> vector<24x16xf32>
    %c2_146 = arith.constant 2 : index
    %c0_147 = arith.constant 0 : index
    %c0_148 = arith.constant 0 : index
    %249 = vector.load %arg12[%c2_146, %c0_147, %c0_148] : memref<4x1x16xf32, #tpu.memory_space<vmem>>, vector<1x1x16xf32>
    %250 = vector.shape_cast %249 : vector<1x1x16xf32> to vector<1x16xf32>
    %251 = vector.broadcast %250 : vector<1x16xf32> to vector<24x16xf32>
    %252 = arith.addf %248, %251 : vector<24x16xf32>
    %253 = arith.truncf %238 : vector<24x16xf32> to vector<24x16xbf16>
    %254 = tpu.transpose %245, [1, 0] : vector<24x16xf32> -> vector<16x24xf32>
    %255 = arith.truncf %254 : vector<16x24xf32> to vector<16x24xbf16>
    %cst_149 = arith.constant dense<0.000000e+00> : vector<24x24xf32>
    %256 = tpu.matmul %253, %255, %cst_149 {dimension_numbers = #tpu.dot_dimension_numbers<[1], [0], [0], [1], [0, 0, 1, 1], [], []>} : vector<24x16xbf16>, vector<16x24xbf16>, vector<24x24xf32> -> vector<24x24xf32>
    %cst_150 = arith.constant 2.500000e-01 : f32
    %257 = vector.broadcast %cst_150 : f32 to vector<24x24xf32>
    %258 = arith.mulf %256, %257 : vector<24x24xf32>
    %259 = vector.broadcast %15 : vector<1x24xf32> to vector<24x24xf32>
    %260 = arith.addf %258, %259 : vector<24x24xf32>
    %cst_151 = arith.constant dense<0xFF800000> : vector<24xf32>
    %261 = vector.multi_reduction <maximumf>, %260, %cst_151 [1] : vector<24x24xf32> to vector<24xf32>
    %262 = vector.shape_cast %261 : vector<24xf32> to vector<24x1xf32>
    %263 = vector.broadcast %262 : vector<24x1xf32> to vector<24x24xf32>
    %264 = arith.subf %260, %263 : vector<24x24xf32>
    %265 = math.exp %264 : vector<24x24xf32>
    %cst_152 = arith.constant dense<0.000000e+00> : vector<24xf32>
    %266 = vector.multi_reduction <add>, %265, %cst_152 [1] : vector<24x24xf32> to vector<24xf32>
    %267 = vector.shape_cast %266 : vector<24xf32> to vector<24x1xf32>
    %268 = tpu.reciprocal %267 {approx = true} : vector<24x1xf32> -> vector<24x1xf32>
    %269 = vector.broadcast %268 : vector<24x1xf32> to vector<24x24xf32>
    %270 = arith.mulf %265, %269 : vector<24x24xf32>
    %271 = arith.truncf %270 : vector<24x24xf32> to vector<24x24xbf16>
    %272 = arith.truncf %252 : vector<24x16xf32> to vector<24x16xbf16>
    %cst_153 = arith.constant dense<0.000000e+00> : vector<24x16xf32>
    %273 = tpu.matmul %271, %272, %cst_153 {dimension_numbers = #tpu.dot_dimension_numbers<[1], [0], [0], [1], [0, 0, 1, 1], [], []>} : vector<24x24xbf16>, vector<24x16xbf16>, vector<24x16xf32> -> vector<24x16xf32>
    %274 = arith.truncf %273 : vector<24x16xf32> to vector<24x16xbf16>
    %c2_154 = arith.constant 2 : index
    %c0_155 = arith.constant 0 : index
    %c0_156 = arith.constant 0 : index
    %275 = vector.load %arg13[%c2_154, %c0_155, %c0_156] : memref<4x16x32xbf16, #tpu.memory_space<vmem>>, vector<1x16x32xbf16>
    %276 = vector.shape_cast %275 : vector<1x16x32xbf16> to vector<16x32xbf16>
    %cst_157 = arith.constant dense<0.000000e+00> : vector<24x32xf32>
    %277 = tpu.matmul %274, %276, %cst_157 {dimension_numbers = #tpu.dot_dimension_numbers<[1], [0], [0], [1], [0, 0, 1, 1], [], []>} : vector<24x16xbf16>, vector<16x32xbf16>, vector<24x32xf32> -> vector<24x32xf32>
    %c3 = arith.constant 3 : index
    %c0_158 = arith.constant 0 : index
    %c0_159 = arith.constant 0 : index
    %278 = vector.load %arg7[%c3, %c0_158, %c0_159] : memref<4x32x16xbf16, #tpu.memory_space<vmem>>, vector<1x32x16xbf16>
    %279 = vector.shape_cast %278 : vector<1x32x16xbf16> to vector<32x16xbf16>
    %cst_160 = arith.constant dense<0.000000e+00> : vector<24x16xf32>
    %280 = tpu.matmul %231, %279, %cst_160 {dimension_numbers = #tpu.dot_dimension_numbers<[1], [0], [0], [1], [0, 0, 1, 1], [], []>} : vector<24x32xbf16>, vector<32x16xbf16>, vector<24x16xf32> -> vector<24x16xf32>
    %c3_161 = arith.constant 3 : index
    %c0_162 = arith.constant 0 : index
    %c0_163 = arith.constant 0 : index
    %281 = vector.load %arg8[%c3_161, %c0_162, %c0_163] : memref<4x1x16xf32, #tpu.memory_space<vmem>>, vector<1x1x16xf32>
    %282 = vector.shape_cast %281 : vector<1x1x16xf32> to vector<1x16xf32>
    %283 = vector.broadcast %282 : vector<1x16xf32> to vector<24x16xf32>
    %284 = arith.addf %280, %283 : vector<24x16xf32>
    %c3_164 = arith.constant 3 : index
    %c0_165 = arith.constant 0 : index
    %c0_166 = arith.constant 0 : index
    %285 = vector.load %arg9[%c3_164, %c0_165, %c0_166] : memref<4x32x16xbf16, #tpu.memory_space<vmem>>, vector<1x32x16xbf16>
    %286 = vector.shape_cast %285 : vector<1x32x16xbf16> to vector<32x16xbf16>
    %cst_167 = arith.constant dense<0.000000e+00> : vector<24x16xf32>
    %287 = tpu.matmul %231, %286, %cst_167 {dimension_numbers = #tpu.dot_dimension_numbers<[1], [0], [0], [1], [0, 0, 1, 1], [], []>} : vector<24x32xbf16>, vector<32x16xbf16>, vector<24x16xf32> -> vector<24x16xf32>
    %c3_168 = arith.constant 3 : index
    %c0_169 = arith.constant 0 : index
    %c0_170 = arith.constant 0 : index
    %288 = vector.load %arg10[%c3_168, %c0_169, %c0_170] : memref<4x1x16xf32, #tpu.memory_space<vmem>>, vector<1x1x16xf32>
    %289 = vector.shape_cast %288 : vector<1x1x16xf32> to vector<1x16xf32>
    %290 = vector.broadcast %289 : vector<1x16xf32> to vector<24x16xf32>
    %291 = arith.addf %287, %290 : vector<24x16xf32>
    %c3_171 = arith.constant 3 : index
    %c0_172 = arith.constant 0 : index
    %c0_173 = arith.constant 0 : index
    %292 = vector.load %arg11[%c3_171, %c0_172, %c0_173] : memref<4x32x16xbf16, #tpu.memory_space<vmem>>, vector<1x32x16xbf16>
    %293 = vector.shape_cast %292 : vector<1x32x16xbf16> to vector<32x16xbf16>
    %cst_174 = arith.constant dense<0.000000e+00> : vector<24x16xf32>
    %294 = tpu.matmul %231, %293, %cst_174 {dimension_numbers = #tpu.dot_dimension_numbers<[1], [0], [0], [1], [0, 0, 1, 1], [], []>} : vector<24x32xbf16>, vector<32x16xbf16>, vector<24x16xf32> -> vector<24x16xf32>
    %c3_175 = arith.constant 3 : index
    %c0_176 = arith.constant 0 : index
    %c0_177 = arith.constant 0 : index
    %295 = vector.load %arg12[%c3_175, %c0_176, %c0_177] : memref<4x1x16xf32, #tpu.memory_space<vmem>>, vector<1x1x16xf32>
    %296 = vector.shape_cast %295 : vector<1x1x16xf32> to vector<1x16xf32>
    %297 = vector.broadcast %296 : vector<1x16xf32> to vector<24x16xf32>
    %298 = arith.addf %294, %297 : vector<24x16xf32>
    %299 = arith.truncf %284 : vector<24x16xf32> to vector<24x16xbf16>
    %300 = tpu.transpose %291, [1, 0] : vector<24x16xf32> -> vector<16x24xf32>
    %301 = arith.truncf %300 : vector<16x24xf32> to vector<16x24xbf16>
    %cst_178 = arith.constant dense<0.000000e+00> : vector<24x24xf32>
    %302 = tpu.matmul %299, %301, %cst_178 {dimension_numbers = #tpu.dot_dimension_numbers<[1], [0], [0], [1], [0, 0, 1, 1], [], []>} : vector<24x16xbf16>, vector<16x24xbf16>, vector<24x24xf32> -> vector<24x24xf32>
    %cst_179 = arith.constant 2.500000e-01 : f32
    %303 = vector.broadcast %cst_179 : f32 to vector<24x24xf32>
    %304 = arith.mulf %302, %303 : vector<24x24xf32>
    %305 = vector.broadcast %15 : vector<1x24xf32> to vector<24x24xf32>
    %306 = arith.addf %304, %305 : vector<24x24xf32>
    %cst_180 = arith.constant dense<0xFF800000> : vector<24xf32>
    %307 = vector.multi_reduction <maximumf>, %306, %cst_180 [1] : vector<24x24xf32> to vector<24xf32>
    %308 = vector.shape_cast %307 : vector<24xf32> to vector<24x1xf32>
    %309 = vector.broadcast %308 : vector<24x1xf32> to vector<24x24xf32>
    %310 = arith.subf %306, %309 : vector<24x24xf32>
    %311 = math.exp %310 : vector<24x24xf32>
    %cst_181 = arith.constant dense<0.000000e+00> : vector<24xf32>
    %312 = vector.multi_reduction <add>, %311, %cst_181 [1] : vector<24x24xf32> to vector<24xf32>
    %313 = vector.shape_cast %312 : vector<24xf32> to vector<24x1xf32>
    %314 = tpu.reciprocal %313 {approx = true} : vector<24x1xf32> -> vector<24x1xf32>
    %315 = vector.broadcast %314 : vector<24x1xf32> to vector<24x24xf32>
    %316 = arith.mulf %311, %315 : vector<24x24xf32>
    %317 = arith.truncf %316 : vector<24x24xf32> to vector<24x24xbf16>
    %318 = arith.truncf %298 : vector<24x16xf32> to vector<24x16xbf16>
    %cst_182 = arith.constant dense<0.000000e+00> : vector<24x16xf32>
    %319 = tpu.matmul %317, %318, %cst_182 {dimension_numbers = #tpu.dot_dimension_numbers<[1], [0], [0], [1], [0, 0, 1, 1], [], []>} : vector<24x24xbf16>, vector<24x16xbf16>, vector<24x16xf32> -> vector<24x16xf32>
    %320 = arith.truncf %319 : vector<24x16xf32> to vector<24x16xbf16>
    %c3_183 = arith.constant 3 : index
    %c0_184 = arith.constant 0 : index
    %c0_185 = arith.constant 0 : index
    %321 = vector.load %arg13[%c3_183, %c0_184, %c0_185] : memref<4x16x32xbf16, #tpu.memory_space<vmem>>, vector<1x16x32xbf16>
    %322 = vector.shape_cast %321 : vector<1x16x32xbf16> to vector<16x32xbf16>
    %cst_186 = arith.constant dense<0.000000e+00> : vector<24x32xf32>
    %323 = tpu.matmul %320, %322, %cst_186 {dimension_numbers = #tpu.dot_dimension_numbers<[1], [0], [0], [1], [0, 0, 1, 1], [], []>} : vector<24x16xbf16>, vector<16x32xbf16>, vector<24x32xf32> -> vector<24x32xf32>
    %324 = arith.addf %277, %323 : vector<24x32xf32>
    %c1_187 = arith.constant 1 : index
    %c0_188 = arith.constant 0 : index
    %c0_189 = arith.constant 0 : index
    %325 = vector.load %arg15[%c1_187, %c0_188, %c0_189] : memref<2x1x32xf32, #tpu.memory_space<vmem>>, vector<1x1x32xf32>
    %326 = vector.shape_cast %325 : vector<1x1x32xf32> to vector<1x32xf32>
    %c1_190 = arith.constant 1 : index
    %c0_191 = arith.constant 0 : index
    %c0_192 = arith.constant 0 : index
    %327 = vector.load %arg14[%c1_190, %c0_191, %c0_192] : memref<2x1x32xf32, #tpu.memory_space<vmem>>, vector<1x1x32xf32>
    %328 = vector.shape_cast %327 : vector<1x1x32xf32> to vector<1x32xf32>
    %329 = vector.broadcast %328 : vector<1x32xf32> to vector<24x32xf32>
    %330 = arith.addf %324, %329 : vector<24x32xf32>
    %331 = vector.broadcast %326 : vector<1x32xf32> to vector<24x32xf32>
    %332 = arith.mulf %331, %330 : vector<24x32xf32>
    %333 = arith.addf %204, %332 : vector<24x32xf32>
    %c1_193 = arith.constant 1 : index
    %c0_194 = arith.constant 0 : index
    %c0_195 = arith.constant 0 : index
    %334 = vector.load %arg16[%c1_193, %c0_194, %c0_195] : memref<2x1x32xf32, #tpu.memory_space<vmem>>, vector<1x1x32xf32>
    %335 = vector.shape_cast %334 : vector<1x1x32xf32> to vector<1x32xf32>
    %c1_196 = arith.constant 1 : index
    %c0_197 = arith.constant 0 : index
    %c0_198 = arith.constant 0 : index
    %336 = vector.load %arg17[%c1_196, %c0_197, %c0_198] : memref<2x1x32xf32, #tpu.memory_space<vmem>>, vector<1x1x32xf32>
    %337 = vector.shape_cast %336 : vector<1x1x32xf32> to vector<1x32xf32>
    %cst_199 = arith.constant dense<0.000000e+00> : vector<24xf32>
    %338 = vector.multi_reduction <add>, %333, %cst_199 [1] : vector<24x32xf32> to vector<24xf32>
    %339 = vector.shape_cast %338 : vector<24xf32> to vector<24x1xf32>
    %cst_200 = arith.constant 3.200000e+01 : f32
    %340 = vector.broadcast %cst_200 : f32 to vector<24x1xf32>
    %341 = arith.divf %339, %340 : vector<24x1xf32>
    %342 = vector.broadcast %341 : vector<24x1xf32> to vector<24x32xf32>
    %343 = arith.subf %333, %342 : vector<24x32xf32>
    %344 = arith.mulf %343, %343 : vector<24x32xf32>
    %cst_201 = arith.constant dense<0.000000e+00> : vector<24xf32>
    %345 = vector.multi_reduction <add>, %344, %cst_201 [1] : vector<24x32xf32> to vector<24xf32>
    %346 = vector.shape_cast %345 : vector<24xf32> to vector<24x1xf32>
    %cst_202 = arith.constant 3.200000e+01 : f32
    %347 = vector.broadcast %cst_202 : f32 to vector<24x1xf32>
    %348 = arith.divf %346, %347 : vector<24x1xf32>
    %349 = vector.broadcast %341 : vector<24x1xf32> to vector<24x32xf32>
    %350 = arith.subf %333, %349 : vector<24x32xf32>
    %cst_203 = arith.constant 9.99999997E-7 : f32
    %351 = vector.broadcast %cst_203 : f32 to vector<24x1xf32>
    %352 = arith.addf %348, %351 : vector<24x1xf32>
    %353 = math.rsqrt %352 : vector<24x1xf32>
    %354 = vector.broadcast %353 : vector<24x1xf32> to vector<24x32xf32>
    %355 = arith.mulf %350, %354 : vector<24x32xf32>
    %356 = vector.broadcast %335 : vector<1x32xf32> to vector<24x32xf32>
    %357 = arith.mulf %355, %356 : vector<24x32xf32>
    %358 = vector.broadcast %337 : vector<1x32xf32> to vector<24x32xf32>
    %359 = arith.addf %357, %358 : vector<24x32xf32>
    %360 = arith.truncf %359 : vector<24x32xf32> to vector<24x32xbf16>
    %c1_204 = arith.constant 1 : index
    %c0_205 = arith.constant 0 : index
    %c0_206 = arith.constant 0 : index
    %361 = vector.load %arg18[%c1_204, %c0_205, %c0_206] : memref<2x32x128xbf16, #tpu.memory_space<vmem>>, vector<1x32x128xbf16>
    %362 = vector.shape_cast %361 : vector<1x32x128xbf16> to vector<32x128xbf16>
    %cst_207 = arith.constant dense<0.000000e+00> : vector<24x128xf32>
    %363 = tpu.matmul %360, %362, %cst_207 {dimension_numbers = #tpu.dot_dimension_numbers<[1], [0], [0], [1], [0, 0, 1, 1], [], []>} : vector<24x32xbf16>, vector<32x128xbf16>, vector<24x128xf32> -> vector<24x128xf32>
    %c1_208 = arith.constant 1 : index
    %c0_209 = arith.constant 0 : index
    %c0_210 = arith.constant 0 : index
    %364 = vector.load %arg19[%c1_208, %c0_209, %c0_210] : memref<2x1x128xf32, #tpu.memory_space<vmem>>, vector<1x1x128xf32>
    %365 = vector.shape_cast %364 : vector<1x1x128xf32> to vector<1x128xf32>
    %366 = vector.broadcast %365 : vector<1x128xf32> to vector<24x128xf32>
    %367 = arith.addf %363, %366 : vector<24x128xf32>
    %cst_211 = arith.constant 5.000000e-01 : f32
    %368 = vector.broadcast %cst_211 : f32 to vector<24x128xf32>
    %369 = arith.mulf %368, %367 : vector<24x128xf32>
    %cst_212 = arith.constant 4.471500e-02 : f32
    %370 = vector.broadcast %cst_212 : f32 to vector<24x128xf32>
    %371 = arith.mulf %370, %367 : vector<24x128xf32>
    %372 = arith.mulf %371, %367 : vector<24x128xf32>
    %373 = arith.mulf %372, %367 : vector<24x128xf32>
    %374 = arith.addf %367, %373 : vector<24x128xf32>
    %cst_213 = arith.constant 0.797884583 : f32
    %375 = vector.broadcast %cst_213 : f32 to vector<24x128xf32>
    %376 = arith.mulf %375, %374 : vector<24x128xf32>
    %377 = math.tanh %376 : vector<24x128xf32>
    %cst_214 = arith.constant 1.000000e+00 : f32
    %378 = vector.broadcast %cst_214 : f32 to vector<24x128xf32>
    %379 = arith.addf %378, %377 : vector<24x128xf32>
    %380 = arith.mulf %369, %379 : vector<24x128xf32>
    %381 = arith.truncf %380 : vector<24x128xf32> to vector<24x128xbf16>
    %c1_215 = arith.constant 1 : index
    %c0_216 = arith.constant 0 : index
    %c0_217 = arith.constant 0 : index
    %382 = vector.load %arg20[%c1_215, %c0_216, %c0_217] : memref<2x128x32xbf16, #tpu.memory_space<vmem>>, vector<1x128x32xbf16>
    %383 = vector.shape_cast %382 : vector<1x128x32xbf16> to vector<128x32xbf16>
    %cst_218 = arith.constant dense<0.000000e+00> : vector<24x32xf32>
    %384 = tpu.matmul %381, %383, %cst_218 {dimension_numbers = #tpu.dot_dimension_numbers<[1], [0], [0], [1], [0, 0, 1, 1], [], []>} : vector<24x128xbf16>, vector<128x32xbf16>, vector<24x32xf32> -> vector<24x32xf32>
    %c1_219 = arith.constant 1 : index
    %c0_220 = arith.constant 0 : index
    %c0_221 = arith.constant 0 : index
    %385 = vector.load %arg21[%c1_219, %c0_220, %c0_221] : memref<2x1x32xf32, #tpu.memory_space<vmem>>, vector<1x1x32xf32>
    %386 = vector.shape_cast %385 : vector<1x1x32xf32> to vector<1x32xf32>
    %387 = vector.broadcast %386 : vector<1x32xf32> to vector<24x32xf32>
    %388 = arith.addf %384, %387 : vector<24x32xf32>
    %c1_222 = arith.constant 1 : index
    %c0_223 = arith.constant 0 : index
    %c0_224 = arith.constant 0 : index
    %389 = vector.load %arg22[%c1_222, %c0_223, %c0_224] : memref<2x1x32xf32, #tpu.memory_space<vmem>>, vector<1x1x32xf32>
    %390 = vector.shape_cast %389 : vector<1x1x32xf32> to vector<1x32xf32>
    %391 = vector.broadcast %390 : vector<1x32xf32> to vector<24x32xf32>
    %392 = arith.mulf %391, %388 : vector<24x32xf32>
    %393 = arith.addf %333, %392 : vector<24x32xf32>
    %c0_225 = arith.constant 0 : index
    %c0_226 = arith.constant 0 : index
    %394 = vector.load %arg23[%c0_225, %c0_226] : memref<1x32xf32, #tpu.memory_space<vmem>>, vector<1x32xf32>
    %c0_227 = arith.constant 0 : index
    %c0_228 = arith.constant 0 : index
    %395 = vector.load %arg24[%c0_227, %c0_228] : memref<1x32xf32, #tpu.memory_space<vmem>>, vector<1x32xf32>
    %cst_229 = arith.constant dense<0.000000e+00> : vector<24xf32>
    %396 = vector.multi_reduction <add>, %393, %cst_229 [1] : vector<24x32xf32> to vector<24xf32>
    %397 = vector.shape_cast %396 : vector<24xf32> to vector<24x1xf32>
    %cst_230 = arith.constant 3.200000e+01 : f32
    %398 = vector.broadcast %cst_230 : f32 to vector<24x1xf32>
    %399 = arith.divf %397, %398 : vector<24x1xf32>
    %400 = vector.broadcast %399 : vector<24x1xf32> to vector<24x32xf32>
    %401 = arith.subf %393, %400 : vector<24x32xf32>
    %402 = arith.mulf %401, %401 : vector<24x32xf32>
    %cst_231 = arith.constant dense<0.000000e+00> : vector<24xf32>
    %403 = vector.multi_reduction <add>, %402, %cst_231 [1] : vector<24x32xf32> to vector<24xf32>
    %404 = vector.shape_cast %403 : vector<24xf32> to vector<24x1xf32>
    %cst_232 = arith.constant 3.200000e+01 : f32
    %405 = vector.broadcast %cst_232 : f32 to vector<24x1xf32>
    %406 = arith.divf %404, %405 : vector<24x1xf32>
    %407 = vector.broadcast %399 : vector<24x1xf32> to vector<24x32xf32>
    %408 = arith.subf %393, %407 : vector<24x32xf32>
    %cst_233 = arith.constant 9.99999997E-7 : f32
    %409 = vector.broadcast %cst_233 : f32 to vector<24x1xf32>
    %410 = arith.addf %406, %409 : vector<24x1xf32>
    %411 = math.rsqrt %410 : vector<24x1xf32>
    %412 = vector.broadcast %411 : vector<24x1xf32> to vector<24x32xf32>
    %413 = arith.mulf %408, %412 : vector<24x32xf32>
    %414 = vector.broadcast %394 : vector<1x32xf32> to vector<24x32xf32>
    %415 = arith.mulf %413, %414 : vector<24x32xf32>
    %416 = vector.broadcast %395 : vector<1x32xf32> to vector<24x32xf32>
    %417 = arith.addf %415, %416 : vector<24x32xf32>
    %c0_234 = arith.constant 0 : index
    %c0_235 = arith.constant 0 : index
    %c0_236 = arith.constant 0 : index
    %418 = vector.load %arg25[%c0_234, %c0_235, %c0_236] : memref<1x24x32xf32, #tpu.memory_space<vmem>>, vector<1x24x32xf32>
    %419 = vector.shape_cast %418 : vector<1x24x32xf32> to vector<24x32xf32>
    %420 = vector.shape_cast %417 : vector<24x32xf32> to vector<1x24x32xf32>
    tpu.vector_store %arg25[%c0_234, %c0_235, %c0_236], %420 {strides = array<i32>} : memref<1x24x32xf32, #tpu.memory_space<vmem>>, vector<1x24x32xf32>,
    return
  }
  func.func @transform_0(%arg0: i32) -> (i32, i32, i32) {
    %c0_i32 = arith.constant 0 : i32
    %c0_i32_0 = arith.constant 0 : i32
    %c0_i32_1 = arith.constant 0 : i32
    return %arg0, %c0_i32, %c0_i32_0 : i32, i32, i32
  }
  func.func @transform_1(%arg0: i32) -> (i32, i32) {
    %c0_i32 = arith.constant 0 : i32
    %c0_i32_0 = arith.constant 0 : i32
    %c0_i32_1 = arith.constant 0 : i32
    return %c0_i32, %c0_i32_0 : i32, i32
  }
  func.func @transform_2(%arg0: i32) -> (i32, i32) {
    %c0_i32 = arith.constant 0 : i32
    %c0_i32_0 = arith.constant 0 : i32
    %c0_i32_1 = arith.constant 0 : i32
    return %c0_i32, %c0_i32_0 : i32, i32
  }
  func.func @transform_3(%arg0: i32) -> (i32, i32) {
    %c0_i32 = arith.constant 0 : i32
    %c0_i32_0 = arith.constant 0 : i32
    %c0_i32_1 = arith.constant 0 : i32
    return %c0_i32, %c0_i32_0 : i32, i32
  }
  func.func @transform_4(%arg0: i32) -> (i32, i32, i32) {
    %c0_i32 = arith.constant 0 : i32
    %c0_i32_0 = arith.constant 0 : i32
    %c0_i32_1 = arith.constant 0 : i32
    %c0_i32_2 = arith.constant 0 : i32
    return %c0_i32, %c0_i32_0, %c0_i32_1 : i32, i32, i32
  }
  func.func @transform_5(%arg0: i32) -> (i32, i32, i32) {
    %c0_i32 = arith.constant 0 : i32
    %c0_i32_0 = arith.constant 0 : i32
    %c0_i32_1 = arith.constant 0 : i32
    %c0_i32_2 = arith.constant 0 : i32
    return %c0_i32, %c0_i32_0, %c0_i32_1 : i32, i32, i32
  }
  func.func @transform_6(%arg0: i32) -> (i32, i32, i32) {
    %c0_i32 = arith.constant 0 : i32
    %c0_i32_0 = arith.constant 0 : i32
    %c0_i32_1 = arith.constant 0 : i32
    %c0_i32_2 = arith.constant 0 : i32
    return %c0_i32, %c0_i32_0, %c0_i32_1 : i32, i32, i32
  }
  func.func @transform_7(%arg0: i32) -> (i32, i32, i32) {
    %c0_i32 = arith.constant 0 : i32
    %c0_i32_0 = arith.constant 0 : i32
    %c0_i32_1 = arith.constant 0 : i32
    %c0_i32_2 = arith.constant 0 : i32
    return %c0_i32, %c0_i32_0, %c0_i32_1 : i32, i32, i32
  }
  func.func @transform_8(%arg0: i32) -> (i32, i32, i32) {
    %c0_i32 = arith.constant 0 : i32
    %c0_i32_0 = arith.constant 0 : i32
    %c0_i32_1 = arith.constant 0 : i32
    %c0_i32_2 = arith.constant 0 : i32
    return %c0_i32, %c0_i32_0, %c0_i32_1 : i32, i32, i32
  }
  func.func @transform_9(%arg0: i32) -> (i32, i32, i32) {
    %c0_i32 = arith.constant 0 : i32
    %c0_i32_0 = arith.constant 0 : i32
    %c0_i32_1 = arith.constant 0 : i32
    %c0_i32_2 = arith.constant 0 : i32
    return %c0_i32, %c0_i32_0, %c0_i32_1 : i32, i32, i32
  }
  func.func @transform_10(%arg0: i32) -> (i32, i32, i32) {
    %c0_i32 = arith.constant 0 : i32
    %c0_i32_0 = arith.constant 0 : i32
    %c0_i32_1 = arith.constant 0 : i32
    %c0_i32_2 = arith.constant 0 : i32
    return %c0_i32, %c0_i32_0, %c0_i32_1 : i32, i32, i32
  }
  func.func @transform_11(%arg0: i32) -> (i32, i32, i32) {
    %c0_i32 = arith.constant 0 : i32
    %c0_i32_0 = arith.constant 0 : i32
    %c0_i32_1 = arith.constant 0 : i32
    %c0_i32_2 = arith.constant 0 : i32
    return %c0_i32, %c0_i32_0, %c0_i32_1 : i32, i32, i32
  }
  func.func @transform_12(%arg0: i32) -> (i32, i32, i32) {
    %c0_i32 = arith.constant 0 : i32
    %c0_i32_0 = arith.constant 0 : i32
    %c0_i32_1 = arith.constant 0 : i32
    %c0_i32_2 = arith.constant 0 : i32
    return %c0_i32, %c0_i32_0, %c0_i32_1 : i32, i32, i32
  }
  func.func @transform_13(%arg0: i32) -> (i32, i32, i32) {
    %c0_i32 = arith.constant 0 : i32
    %c0_i32_0 = arith.constant 0 : i32
    %c0_i32_1 = arith.constant 0 : i32
    %c0_i32_2 = arith.constant 0 : i32
    return %c0_i32, %c0_i32_0, %c0_i32_1 : i32, i32, i32
  }
  func.func @transform_14(%arg0: i32) -> (i32, i32, i32) {
    %c0_i32 = arith.constant 0 : i32
    %c0_i32_0 = arith.constant 0 : i32
    %c0_i32_1 = arith.constant 0 : i32
    %c0_i32_2 = arith.constant 0 : i32
    return %c0_i32, %c0_i32_0, %c0_i32_1 : i32, i32, i32
  }
  func.func @transform_15(%arg0: i32) -> (i32, i32, i32) {
    %c0_i32 = arith.constant 0 : i32
    %c0_i32_0 = arith.constant 0 : i32
    %c0_i32_1 = arith.constant 0 : i32
    %c0_i32_2 = arith.constant 0 : i32
    return %c0_i32, %c0_i32_0, %c0_i32_1 : i32, i32, i32
  }
  func.func @transform_16(%arg0: i32) -> (i32, i32, i32) {
    %c0_i32 = arith.constant 0 : i32
    %c0_i32_0 = arith.constant 0 : i32
    %c0_i32_1 = arith.constant 0 : i32
    %c0_i32_2 = arith.constant 0 : i32
    return %c0_i32, %c0_i32_0, %c0_i32_1 : i32, i32, i32
  }
  func.func @transform_17(%arg0: i32) -> (i32, i32, i32) {
    %c0_i32 = arith.constant 0 : i32
    %c0_i32_0 = arith.constant 0 : i32
    %c0_i32_1 = arith.constant 0 : i32
    %c0_i32_2 = arith.constant 0 : i32
    return %c0_i32, %c0_i32_0, %c0_i32_1 : i32, i32, i32
  }
  func.func @transform_18(%arg0: i32) -> (i32, i32, i32) {
    %c0_i32 = arith.constant 0 : i32
    %c0_i32_0 = arith.constant 0 : i32
    %c0_i32_1 = arith.constant 0 : i32
    %c0_i32_2 = arith.constant 0 : i32
    return %c0_i32, %c0_i32_0, %c0_i32_1 : i32, i32, i32
  }
  func.func @transform_19(%arg0: i32) -> (i32, i32, i32) {
    %c0_i32 = arith.constant 0 : i32
    %c0_i32_0 = arith.constant 0 : i32
    %c0_i32_1 = arith.constant 0 : i32
    %c0_i32_2 = arith.constant 0 : i32
    return %c0_i32, %c0_i32_0, %c0_i32_1 : i32, i32, i32
  }
  func.func @transform_20(%arg0: i32) -> (i32, i32, i32) {
    %c0_i32 = arith.constant 0 : i32
    %c0_i32_0 = arith.constant 0 : i32
    %c0_i32_1 = arith.constant 0 : i32
    %c0_i32_2 = arith.constant 0 : i32
    return %c0_i32, %c0_i32_0, %c0_i32_1 : i32, i32, i32
  }
  func.func @transform_21(%arg0: i32) -> (i32, i32, i32) {
    %c0_i32 = arith.constant 0 : i32
    %c0_i32_0 = arith.constant 0 : i32
    %c0_i32_1 = arith.constant 0 : i32
    %c0_i32_2 = arith.constant 0 : i32
    return %c0_i32, %c0_i32_0, %c0_i32_1 : i32, i32, i32
  }
  func.func @transform_22(%arg0: i32) -> (i32, i32) {
    %c0_i32 = arith.constant 0 : i32
    %c0_i32_0 = arith.constant 0 : i32
    %c0_i32_1 = arith.constant 0 : i32
    return %c0_i32, %c0_i32_0 : i32, i32
  }
  func.func @transform_23(%arg0: i32) -> (i32, i32) {
    %c0_i32 = arith.constant 0 : i32
    %c0_i32_0 = arith.constant 0 : i32
    %c0_i32_1 = arith.constant 0 : i32
    return %c0_i32, %c0_i32_0 : i32, i32
  }
  func.func @transform_24(%arg0: i32) -> (i32, i32, i32) {
    %c0_i32 = arith.constant 0 : i32
    %c0_i32_0 = arith.constant 0 : i32
    %c0_i32_1 = arith.constant 0 : i32
    return %arg0, %c0_i32, %c0_i32_0 : i32, i32, i32
  }
}

</mosaic_0001>

<llo_original>
// kernel: mul.5
$region0: #{mul.5}
  %s0 = inlined_call_operand.vmem [shape: f32[3,16], index: 0, kind: input, shape index: {}]
  %s1 = inlined_call_operand.vmem [shape: f32[48], index: 1, kind: output, shape index: {}]
  $region1: #{mul.5} parent=0
    #allocation0 [shape = 'u8[4096]{0}', space=vmem, size = 0x1000, scoped, tag = 'scoped mem for output reshape']
    #allocation1 [shape = 'u8[4096]{0}', space=vmem, size = 0x1000, scoped, tag = 'scoped mem for input reshape']
    %s3 = sshllo.u32 0, 4
    %v4 = vld [vmem:[%s0] sm:%s3]
    %5 = vst [vmem:[#allocation1] sm:%s3] %v4
    %v6 = vld [vmem:[#allocation1] sm:$0x1]
    %vm7 = vcmask 130048
    %8 = vst.msk [vmem:[#allocation0] sm:$0x1] %vm7, %v6
    %s9 = scalar_lea.vmem [#allocation1], 2
    %v10 = vld [vmem:[%s9] sm:$0x1]
    %11 = vrot.lane.b32.xlu0 %v10, 32
    %v12 = vpop.permute.xlu0 %11
    %vm13 = vcmask 392448
    %14 = vst.msk [vmem:[#allocation0] sm:$0x1] %vm13, %v12
    %s15 = scalar_lea.vmem [#allocation1], 1
    %v16 = vld [vmem:[%s15] sm:$0x1]
    %17 = vrot.lane.b32.xlu0 %v16, 16
    %v18 = vpop.permute.xlu0 %17
    %vm19 = vcmask 261248
    %20 = vst.msk [vmem:[#allocation0] sm:$0x1] %vm19, %v18
    %s22 = sshllo.u32 0, 1
    %v24 = vld [vmem:[#allocation0] sm:%s22]
    %s25 = sshllo.u32 0, 1
    %26 = vst [vmem:[%s1] sm:%s25] %v24

// kernel: dinov2_backbone_forward.1
$region0: #{dinov2_backbone_forward.1}
  #allocation0 [shape = 'u32[]', space=smem, size = 0x4, offset = 0x4, fixed_abs, tag = 'smem constant byte address 0x4 - core index']
  #allocation1 [shape = 'u32[144,128]{1,0:T(1,128)}', space=vmem, size = 0x12000, scoped, tag = 'internal scratch']
  %s0 = inlined_call_operand.vmem [shape: f32[2,24,48], index: 0, kind: input, shape index: {}]
  %s1 = inlined_call_operand.vmem [shape: bf16[48,32], index: 1, kind: input, shape index: {}]
  %s2 = inlined_call_operand.vmem [shape: f32[1,32], index: 2, kind: input, shape index: {}]
  %s3 = inlined_call_operand.vmem [shape: f32[24,32], index: 3, kind: input, shape index: {}]
  %s4 = inlined_call_operand.vmem [shape: f32[2,1,32], index: 4, kind: input, shape index: {}]
  %s5 = inlined_call_operand.vmem [shape: f32[2,1,32], index: 5, kind: input, shape index: {}]
  %s6 = inlined_call_operand.vmem [shape: bf16[4,32,16], index: 6, kind: input, shape index: {}]
  %s7 = inlined_call_operand.vmem [shape: f32[4,1,16], index: 7, kind: input, shape index: {}]
  %s8 = inlined_call_operand.vmem [shape: bf16[4,32,16], index: 8, kind: input, shape index: {}]
  %s9 = inlined_call_operand.vmem [shape: f32[4,1,16], index: 9, kind: input, shape index: {}]
  %s10 = inlined_call_operand.vmem [shape: bf16[4,32,16], index: 10, kind: input, shape index: {}]
  %s11 = inlined_call_operand.vmem [shape: f32[4,1,16], index: 11, kind: input, shape index: {}]
  %s12 = inlined_call_operand.vmem [shape: bf16[4,16,32], index: 12, kind: input, shape index: {}]
  %s13 = inlined_call_operand.vmem [shape: f32[2,1,32], index: 13, kind: input, shape index: {}]
  %s14 = inlined_call_operand.vmem [shape: f32[2,1,32], index: 14, kind: input, shape index: {}]
  %s15 = inlined_call_operand.vmem [shape: f32[2,1,32], index: 15, kind: input, shape index: {}]
  %s16 = inlined_call_operand.vmem [shape: f32[2,1,32], index: 16, kind: input, shape index: {}]
  %s17 = inlined_call_operand.vmem [shape: bf16[2,32,128], index: 17, kind: input, shape index: {}]
  %s18 = inlined_call_operand.vmem [shape: f32[2,1,128], index: 18, kind: input, shape index: {}]
  %s19 = inlined_call_operand.vmem [shape: bf16[2,128,32], index: 19, kind: input, shape index: {}]
  %s20 = inlined_call_operand.vmem [shape: f32[2,1,32], index: 20, kind: input, shape index: {}]
  %s21 = inlined_call_operand.vmem [shape: f32[2,1,32], index: 21, kind: input, shape index: {}]
  %s22 = inlined_call_operand.vmem [shape: f32[1,32], index: 22, kind: input, shape index: {}]
  %s23 = inlined_call_operand.vmem [shape: f32[1,32], index: 23, kind: input, shape index: {}]
  %s24 = inlined_call_operand.vmem [shape: f32[2,24,32], index: 24, kind: output, shape index: {}]
  %s25 = sld [smem:[#allocation0]]
  $region129: #{dinov2_backbone_forward.1} parent=0
    _
  %s27 = ssub.s32 1, %s25
  %s28 = scalar_select 0, %s27, %s25
  loop: start=0, step=1, limit=4
  $region2: #{dinov2_backbone_forward.1} parent=0 // loop_pre_header
    _
  $region3: #{dinov2_backbone_forward.1} parent=0 // loop_header
    %s30 = sphi 0, %s34
    %p31 = scmp.ge.s32.totalorder %s30, 4
    %s40 = sphi 0, %s42
    %s43 = sphi 0, %s40
    %s44 = sphi 0, %s43
    %s60 = sphi 0, %s44
    %s64 = sphi 0, %s64
    %s66 = sphi 0, %s64
    %s67 = sphi 0, %s66
    %s81 = sphi 0, %s67
    %s85 = sphi 0, %s85
    %s87 = sphi 0, %s85
    %s88 = sphi 0, %s87
    %s102 = sphi 0, %s88
    %s106 = sphi 0, %s106
    %s108 = sphi 0, %s106
    %s109 = sphi 0, %s108
    %s123 = sphi 0, %s109
    %s127 = sphi 0, %s127
    %s129 = sphi 0, %s127
    %s130 = sphi 0, %s129
    %s144 = sphi 0, %s130
    %s148 = sphi 0, %s148
    %s150 = sphi 0, %s148
    %s151 = sphi 0, %s150
    %s165 = sphi 0, %s151
    %s169 = sphi 0, %s169
    %s171 = sphi 0, %s169
    %s172 = sphi 0, %s171
    %s186 = sphi 0, %s172
    %s190 = sphi 0, %s190
    %s192 = sphi 0, %s190
    %s193 = sphi 0, %s192
    %s207 = sphi 0, %s193
    %s211 = sphi 0, %s211
    %s213 = sphi 0, %s211
    %s214 = sphi 0, %s213
    %s228 = sphi 0, %s214
    %s232 = sphi 0, %s232
    %s234 = sphi 0, %s232
    %s235 = sphi 0, %s234
    %s249 = sphi 0, %s235
    %s253 = sphi 0, %s253
    %s255 = sphi 0, %s253
    %s256 = sphi 0, %s255
    %s270 = sphi 0, %s256
    %s274 = sphi 0, %s274
    %s276 = sphi 0, %s274
    %s277 = sphi 0, %s276
    %s291 = sphi 0, %s277
    %s295 = sphi 0, %s295
    %s297 = sphi 0, %s295
    %s298 = sphi 0, %s297
    %s312 = sphi 0, %s298
    %s316 = sphi 0, %s316
    %s318 = sphi 0, %s316
    %s319 = sphi 0, %s318
    %s333 = sphi 0, %s319
    %s337 = sphi 0, %s337
    %s339 = sphi 0, %s337
    %s340 = sphi 0, %s339
    %s354 = sphi 0, %s340
    %s358 = sphi 0, %s358
    %s360 = sphi 0, %s358
    %s361 = sphi 0, %s360
    %s375 = sphi 0, %s361
    %s379 = sphi 0, %s379
    %s381 = sphi 0, %s379
    %s382 = sphi 0, %s381
    %s396 = sphi 0, %s382
    %s400 = sphi 0, %s400
    %s402 = sphi 0, %s400
    %s403 = sphi 0, %s402
    %s417 = sphi 0, %s403
    %s421 = sphi 0, %s421
    %s423 = sphi 0, %s421
    %s424 = sphi 0, %s423
    %s438 = sphi 0, %s424
    %s442 = sphi 0, %s442
    %s444 = sphi 0, %s442
    %s445 = sphi 0, %s444
    %s459 = sphi 0, %s445
    %s463 = sphi 0, %s463
    %s465 = sphi 0, %s463
    %s466 = sphi 0, %s465
    %s480 = sphi 0, %s466
    %s484 = sphi 0, %s484
    %s486 = sphi 0, %s484
    %s487 = sphi 0, %s486
    %s501 = sphi 0, %s487
    %s505 = sphi 0, %s505
    %s507 = sphi 0, %s505
    %s508 = sphi 0, %s507
    %s522 = sphi 0, %s508
    %s526 = sphi 0, %s526
    %s528 = sphi 0, %s526
    %s529 = sphi 0, %s528
    %s543 = sphi 0, %s529
    %s549 = sphi 0, %s551
    %s552 = sphi 0, %s549
    %s553 = sphi 0, %s552
    %s569 = sphi 0, %s553
  $region4: #{dinov2_backbone_forward.1} parent=0 // loop_header_branch
    %33 = sbr.rel (%p31) target = $region8
  $region5: #{dinov2_backbone_forward.1} parent=0 // loop_body
    %s35 = ssub.s32 %s30, 1
    %s36 = ssub.s32 %s30, 2
    %s37 = sadd.s32 %s30, 1
    %s38 = ssub.s32 %s30, %s37
    %p39 = scmp.eq.s32.totalorder %s38, 0
    %s41 = sadd.s32 %s40, 1
    %s42 = scalar_select %p39, %s40, %s41
    %p45 = pneg %p39
    %p46 = scmp.eq.s32.totalorder %s30, 1
    %p47 = por %p45, %p46
    %p48 = scmp.ne.s32.totalorder %s40, %s43
    %p49 = scmp.eq.s32.totalorder %s30, 0
    %p50 = por %p48, %p49
    %p51 = scmp.ne.s32.totalorder %s40, %s43
    %p52 = scmp.eq.s32.totalorder %s35, 1
    %p53 = por %p51, %p52
    %p54 = scmp.ne.s32.totalorder %s43, %s44
    %p55 = scmp.eq.s32.totalorder %s35, 0
    %p56 = por %p54, %p55
    %p57 = scmp.ne.s32.totalorder %s43, %s44
    %p58 = scmp.eq.s32.totalorder %s36, 1
    %p59 = por %p57, %p58
    %p61 = scmp.ne.s32.totalorder %s44, %s60
    %p62 = scmp.eq.s32.totalorder %s36, 0
    %p63 = por %p61, %p62
    %s65 = sadd.s32 %s64, 1
    %p68 = scmp.eq.s32.totalorder %s30, 1
    %p69 = scmp.ne.s32.totalorder %s64, %s66
    %p70 = scmp.eq.s32.totalorder %s30, 0
    %p71 = por %p69, %p70
    %p72 = scmp.ne.s32.totalorder %s64, %s66
    %p73 = scmp.eq.s32.totalorder %s35, 1
    %p74 = por %p72, %p73
    %p75 = scmp.ne.s32.totalorder %s66, %s67
    %p76 = scmp.eq.s32.totalorder %s35, 0
    %p77 = por %p75, %p76
    %p78 = scmp.ne.s32.totalorder %s66, %s67
    %p79 = scmp.eq.s32.totalorder %s36, 1
    %p80 = por %p78, %p79
    %p82 = scmp.ne.s32.totalorder %s67, %s81
    %p83 = scmp.eq.s32.totalorder %s36, 0
    %p84 = por %p82, %p83
    %s86 = sadd.s32 %s85, 1
    %p89 = scmp.eq.s32.totalorder %s30, 1
    %p90 = scmp.ne.s32.totalorder %s85, %s87
    %p91 = scmp.eq.s32.totalorder %s30, 0
    %p92 = por %p90, %p91
    %p93 = scmp.ne.s32.totalorder %s85, %s87
    %p94 = scmp.eq.s32.totalorder %s35, 1
    %p95 = por %p93, %p94
    %p96 = scmp.ne.s32.totalorder %s87, %s88
    %p97 = scmp.eq.s32.totalorder %s35, 0
    %p98 = por %p96, %p97
    %p99 = scmp.ne.s32.totalorder %s87, %s88
    %p100 = scmp.eq.s32.totalorder %s36, 1
    %p101 = por %p99, %p100
    %p103 = scmp.ne.s32.totalorder %s88, %s102
    %p104 = scmp.eq.s32.totalorder %s36, 0
    %p105 = por %p103, %p104
    %s107 = sadd.s32 %s106, 1
    %p110 = scmp.eq.s32.totalorder %s30, 1
    %p111 = scmp.ne.s32.totalorder %s106, %s108
    %p112 = scmp.eq.s32.totalorder %s30, 0
    %p113 = por %p111, %p112
    %p114 = scmp.ne.s32.totalorder %s106, %s108
    %p115 = scmp.eq.s32.totalorder %s35, 1
    %p116 = por %p114, %p115
    %p117 = scmp.ne.s32.totalorder %s108, %s109
    %p118 = scmp.eq.s32.totalorder %s35, 0
    %p119 = por %p117, %p118
    %p120 = scmp.ne.s32.totalorder %s108, %s109
    %p121 = scmp.eq.s32.totalorder %s36, 1
    %p122 = por %p120, %p121
    %p124 = scmp.ne.s32.totalorder %s109, %s123
    %p125 = scmp.eq.s32.totalorder %s36, 0
    %p126 = por %p124, %p125
    %s128 = sadd.s32 %s127, 1
    %p131 = scmp.eq.s32.totalorder %s30, 1
    %p132 = scmp.ne.s32.totalorder %s127, %s129
    %p133 = scmp.eq.s32.totalorder %s30, 0
    %p134 = por %p132, %p133
    %p135 = scmp.ne.s32.totalorder %s127, %s129
    %p136 = scmp.eq.s32.totalorder %s35, 1
    %p137 = por %p135, %p136
    %p138 = scmp.ne.s32.totalorder %s129, %s130
    %p139 = scmp.eq.s32.totalorder %s35, 0
    %p140 = por %p138, %p139
    %p141 = scmp.ne.s32.totalorder %s129, %s130
    %p142 = scmp.eq.s32.totalorder %s36, 1
    %p143 = por %p141, %p142
    %p145 = scmp.ne.s32.totalorder %s130, %s144
    %p146 = scmp.eq.s32.totalorder %s36, 0
    %p147 = por %p145, %p146
    %s149 = sadd.s32 %s148, 1
    %p152 = scmp.eq.s32.totalorder %s30, 1
    %p153 = scmp.ne.s32.totalorder %s148, %s150
    %p154 = scmp.eq.s32.totalorder %s30, 0
    %p155 = por %p153, %p154
    %p156 = scmp.ne.s32.totalorder %s148, %s150
    %p157 = scmp.eq.s32.totalorder %s35, 1
    %p158 = por %p156, %p157
    %p159 = scmp.ne.s32.totalorder %s150, %s151
    %p160 = scmp.eq.s32.totalorder %s35, 0
    %p161 = por %p159, %p160
    %p162 = scmp.ne.s32.totalorder %s150, %s151
    %p163 = scmp.eq.s32.totalorder %s36, 1
    %p164 = por %p162, %p163
    %p166 = scmp.ne.s32.totalorder %s151, %s165
    %p167 = scmp.eq.s32.totalorder %s36, 0
    %p168 = por %p166, %p167
    %s170 = sadd.s32 %s169, 1
    %p173 = scmp.eq.s32.totalorder %s30, 1
    %p174 = scmp.ne.s32.totalorder %s169, %s171
    %p175 = scmp.eq.s32.totalorder %s30, 0
    %p176 = por %p174, %p175
    %p177 = scmp.ne.s32.totalorder %s169, %s171
    %p178 = scmp.eq.s32.totalorder %s35, 1
    %p179 = por %p177, %p178
    %p180 = scmp.ne.s32.totalorder %s171, %s172
    %p181 = scmp.eq.s32.totalorder %s35, 0
    %p182 = por %p180, %p181
    %p183 = scmp.ne.s32.totalorder %s171, %s172
    %p184 = scmp.eq.s32.totalorder %s36, 1
    %p185 = por %p183, %p184
    %p187 = scmp.ne.s32.totalorder %s172, %s186
    %p188 = scmp.eq.s32.totalorder %s36, 0
    %p189 = por %p187, %p188
    %s191 = sadd.s32 %s190, 1
    %p194 = scmp.eq.s32.totalorder %s30, 1
    %p195 = scmp.ne.s32.totalorder %s190, %s192
    %p196 = scmp.eq.s32.totalorder %s30, 0
    %p197 = por %p195, %p196
    %p198 = scmp.ne.s32.totalorder %s190, %s192
    %p199 = scmp.eq.s32.totalorder %s35, 1
    %p200 = por %p198, %p199
    %p201 = scmp.ne.s32.totalorder %s192, %s193
    %p202 = scmp.eq.s32.totalorder %s35, 0
    %p203 = por %p201, %p202
    %p204 = scmp.ne.s32.totalorder %s192, %s193
    %p205 = scmp.eq.s32.totalorder %s36, 1
    %p206 = por %p204, %p205
    %p208 = scmp.ne.s32.totalorder %s193, %s207
    %p209 = scmp.eq.s32.totalorder %s36, 0
    %p210 = por %p208, %p209
    %s212 = sadd.s32 %s211, 1
    %p215 = scmp.eq.s32.totalorder %s30, 1
    %p216 = scmp.ne.s32.totalorder %s211, %s213
    %p217 = scmp.eq.s32.totalorder %s30, 0
    %p218 = por %p216, %p217
    %p219 = scmp.ne.s32.totalorder %s211, %s213
    %p220 = scmp.eq.s32.totalorder %s35, 1
    %p221 = por %p219, %p220
    %p222 = scmp.ne.s32.totalorder %s213, %s214
    %p223 = scmp.eq.s32.totalorder %s35, 0
    %p224 = por %p222, %p223
    %p225 = scmp.ne.s32.totalorder %s213, %s214
    %p226 = scmp.eq.s32.totalorder %s36, 1
    %p227 = por %p225, %p226
    %p229 = scmp.ne.s32.totalorder %s214, %s228
    %p230 = scmp.eq.s32.totalorder %s36, 0
    %p231 = por %p229, %p230
    %s233 = sadd.s32 %s232, 1
    %p236 = scmp.eq.s32.totalorder %s30, 1
    %p237 = scmp.ne.s32.totalorder %s232, %s234
    %p238 = scmp.eq.s32.totalorder %s30, 0
    %p239 = por %p237, %p238
    %p240 = scmp.ne.s32.totalorder %s232, %s234
    %p241 = scmp.eq.s32.totalorder %s35, 1
    %p242 = por %p240, %p241
    %p243 = scmp.ne.s32.totalorder %s234, %s235
    %p244 = scmp.eq.s32.totalorder %s35, 0
    %p245 = por %p243, %p244
    %p246 = scmp.ne.s32.totalorder %s234, %s235
    %p247 = scmp.eq.s32.totalorder %s36, 1
    %p248 = por %p246, %p247
    %p250 = scmp.ne.s32.totalorder %s235, %s249
    %p251 = scmp.eq.s32.totalorder %s36, 0
    %p252 = por %p250, %p251
    %s254 = sadd.s32 %s253, 1
    %p257 = scmp.eq.s32.totalorder %s30, 1
    %p258 = scmp.ne.s32.totalorder %s253, %s255
    %p259 = scmp.eq.s32.totalorder %s30, 0
    %p260 = por %p258, %p259
    %p261 = scmp.ne.s32.totalorder %s253, %s255
    %p262 = scmp.eq.s32.totalorder %s35, 1
    %p263 = por %p261, %p262
    %p264 = scmp.ne.s32.totalorder %s255, %s256
    %p265 = scmp.eq.s32.totalorder %s35, 0
    %p266 = por %p264, %p265
    %p267 = scmp.ne.s32.totalorder %s255, %s256
    %p268 = scmp.eq.s32.totalorder %s36, 1
    %p269 = por %p267, %p268
    %p271 = scmp.ne.s32.totalorder %s256, %s270
    %p272 = scmp.eq.s32.totalorder %s36, 0
    %p273 = por %p271, %p272
    %s275 = sadd.s32 %s274, 1
    %p278 = scmp.eq.s32.totalorder %s30, 1
    %p279 = scmp.ne.s32.totalorder %s274, %s276
    %p280 = scmp.eq.s32.totalorder %s30, 0
    %p281 = por %p279, %p280
    %p282 = scmp.ne.s32.totalorder %s274, %s276
    %p283 = scmp.eq.s32.totalorder %s35, 1
    %p284 = por %p282, %p283
    %p285 = scmp.ne.s32.totalorder %s276, %s277
    %p286 = scmp.eq.s32.totalorder %s35, 0
    %p287 = por %p285, %p286
    %p288 = scmp.ne.s32.totalorder %s276, %s277
    %p289 = scmp.eq.s32.totalorder %s36, 1
    %p290 = por %p288, %p289
    %p292 = scmp.ne.s32.totalorder %s277, %s291
    %p293 = scmp.eq.s32.totalorder %s36, 0
    %p294 = por %p292, %p293
    %s296 = sadd.s32 %s295, 1
    %p299 = scmp.eq.s32.totalorder %s30, 1
    %p300 = scmp.ne.s32.totalorder %s295, %s297
    %p301 = scmp.eq.s32.totalorder %s30, 0
    %p302 = por %p300, %p301
    %p303 = scmp.ne.s32.totalorder %s295, %s297
    %p304 = scmp.eq.s32.totalorder %s35, 1
    %p305 = por %p303, %p304
    %p306 = scmp.ne.s32.totalorder %s297, %s298
    %p307 = scmp.eq.s32.totalorder %s35, 0
    %p308 = por %p306, %p307
    %p309 = scmp.ne.s32.totalorder %s297, %s298
    %p310 = scmp.eq.s32.totalorder %s36, 1
    %p311 = por %p309, %p310
    %p313 = scmp.ne.s32.totalorder %s298, %s312
    %p314 = scmp.eq.s32.totalorder %s36, 0
    %p315 = por %p313, %p314
    %s317 = sadd.s32 %s316, 1
    %p320 = scmp.eq.s32.totalorder %s30, 1
    %p321 = scmp.ne.s32.totalorder %s316, %s318
    %p322 = scmp.eq.s32.totalorder %s30, 0
    %p323 = por %p321, %p322
    %p324 = scmp.ne.s32.totalorder %s316, %s318
    %p325 = scmp.eq.s32.totalorder %s35, 1
    %p326 = por %p324, %p325
    %p327 = scmp.ne.s32.totalorder %s318, %s319
    %p328 = scmp.eq.s32.totalorder %s35, 0
    %p329 = por %p327, %p328
    %p330 = scmp.ne.s32.totalorder %s318, %s319
    %p331 = scmp.eq.s32.totalorder %s36, 1
    %p332 = por %p330, %p331
    %p334 = scmp.ne.s32.totalorder %s319, %s333
    %p335 = scmp.eq.s32.totalorder %s36, 0
    %p336 = por %p334, %p335
    %s338 = sadd.s32 %s337, 1
    %p341 = scmp.eq.s32.totalorder %s30, 1
    %p342 = scmp.ne.s32.totalorder %s337, %s339
    %p343 = scmp.eq.s32.totalorder %s30, 0
    %p344 = por %p342, %p343
    %p345 = scmp.ne.s32.totalorder %s337, %s339
    %p346 = scmp.eq.s32.totalorder %s35, 1
    %p347 = por %p345, %p346
    %p348 = scmp.ne.s32.totalorder %s339, %s340
    %p349 = scmp.eq.s32.totalorder %s35, 0
    %p350 = por %p348, %p349
    %p351 = scmp.ne.s32.totalorder %s339, %s340
    %p352 = scmp.eq.s32.totalorder %s36, 1
    %p353 = por %p351, %p352
    %p355 = scmp.ne.s32.totalorder %s340, %s354
    %p356 = scmp.eq.s32.totalorder %s36, 0
    %p357 = por %p355, %p356
    %s359 = sadd.s32 %s358, 1
    %p362 = scmp.eq.s32.totalorder %s30, 1
    %p363 = scmp.ne.s32.totalorder %s358, %s360
    %p364 = scmp.eq.s32.totalorder %s30, 0
    %p365 = por %p363, %p364
    %p366 = scmp.ne.s32.totalorder %s358, %s360
    %p367 = scmp.eq.s32.totalorder %s35, 1
    %p368 = por %p366, %p367
    %p369 = scmp.ne.s32.totalorder %s360, %s361
    %p370 = scmp.eq.s32.totalorder %s35, 0
    %p371 = por %p369, %p370
    %p372 = scmp.ne.s32.totalorder %s360, %s361
    %p373 = scmp.eq.s32.totalorder %s36, 1
    %p374 = por %p372, %p373
    %p376 = scmp.ne.s32.totalorder %s361, %s375
    %p377 = scmp.eq.s32.totalorder %s36, 0
    %p378 = por %p376, %p377
    %s380 = sadd.s32 %s379, 1
    %p383 = scmp.eq.s32.totalorder %s30, 1
    %p384 = scmp.ne.s32.totalorder %s379, %s381
    %p385 = scmp.eq.s32.totalorder %s30, 0
    %p386 = por %p384, %p385
    %p387 = scmp.ne.s32.totalorder %s379, %s381
    %p388 = scmp.eq.s32.totalorder %s35, 1
    %p389 = por %p387, %p388
    %p390 = scmp.ne.s32.totalorder %s381, %s382
    %p391 = scmp.eq.s32.totalorder %s35, 0
    %p392 = por %p390, %p391
    %p393 = scmp.ne.s32.totalorder %s381, %s382
    %p394 = scmp.eq.s32.totalorder %s36, 1
    %p395 = por %p393, %p394
    %p397 = scmp.ne.s32.totalorder %s382, %s396
    %p398 = scmp.eq.s32.totalorder %s36, 0
    %p399 = por %p397, %p398
    %s401 = sadd.s32 %s400, 1
    %p404 = scmp.eq.s32.totalorder %s30, 1
    %p405 = scmp.ne.s32.totalorder %s400, %s402
    %p406 = scmp.eq.s32.totalorder %s30, 0
    %p407 = por %p405, %p406
    %p408 = scmp.ne.s32.totalorder %s400, %s402
    %p409 = scmp.eq.s32.totalorder %s35, 1
    %p410 = por %p408, %p409
    %p411 = scmp.ne.s32.totalorder %s402, %s403
    %p412 = scmp.eq.s32.totalorder %s35, 0
    %p413 = por %p411, %p412
    %p414 = scmp.ne.s32.totalorder %s402, %s403
    %p415 = scmp.eq.s32.totalorder %s36, 1
    %p416 = por %p414, %p415
    %p418 = scmp.ne.s32.totalorder %s403, %s417
    %p419 = scmp.eq.s32.totalorder %s36, 0
    %p420 = por %p418, %p419
    %s422 = sadd.s32 %s421, 1
    %p425 = scmp.eq.s32.totalorder %s30, 1
    %p426 = scmp.ne.s32.totalorder %s421, %s423
    %p427 = scmp.eq.s32.totalorder %s30, 0
    %p428 = por %p426, %p427
    %p429 = scmp.ne.s32.totalorder %s421, %s423
    %p430 = scmp.eq.s32.totalorder %s35, 1
    %p431 = por %p429, %p430
    %p432 = scmp.ne.s32.totalorder %s423, %s424
    %p433 = scmp.eq.s32.totalorder %s35, 0
    %p434 = por %p432, %p433
    %p435 = scmp.ne.s32.totalorder %s423, %s424
    %p436 = scmp.eq.s32.totalorder %s36, 1
    %p437 = por %p435, %p436
    %p439 = scmp.ne.s32.totalorder %s424, %s438
    %p440 = scmp.eq.s32.totalorder %s36, 0
    %p441 = por %p439, %p440
    %s443 = sadd.s32 %s442, 1
    %p446 = scmp.eq.s32.totalorder %s30, 1
    %p447 = scmp.ne.s32.totalorder %s442, %s444
    %p448 = scmp.eq.s32.totalorder %s30, 0
    %p449 = por %p447, %p448
    %p450 = scmp.ne.s32.totalorder %s442, %s444
    %p451 = scmp.eq.s32.totalorder %s35, 1
    %p452 = por %p450, %p451
    %p453 = scmp.ne.s32.totalorder %s444, %s445
    %p454 = scmp.eq.s32.totalorder %s35, 0
    %p455 = por %p453, %p454
    %p456 = scmp.ne.s32.totalorder %s444, %s445
    %p457 = scmp.eq.s32.totalorder %s36, 1
    %p458 = por %p456, %p457
    %p460 = scmp.ne.s32.totalorder %s445, %s459
    %p461 = scmp.eq.s32.totalorder %s36, 0
    %p462 = por %p460, %p461
    %s464 = sadd.s32 %s463, 1
    %p467 = scmp.eq.s32.totalorder %s30, 1
    %p468 = scmp.ne.s32.totalorder %s463, %s465
    %p469 = scmp.eq.s32.totalorder %s30, 0
    %p470 = por %p468, %p469
    %p471 = scmp.ne.s32.totalorder %s463, %s465
    %p472 = scmp.eq.s32.totalorder %s35, 1
    %p473 = por %p471, %p472
    %p474 = scmp.ne.s32.totalorder %s465, %s466
    %p475 = scmp.eq.s32.totalorder %s35, 0
    %p476 = por %p474, %p475
    %p477 = scmp.ne.s32.totalorder %s465, %s466
    %p478 = scmp.eq.s32.totalorder %s36, 1
    %p479 = por %p477, %p478
    %p481 = scmp.ne.s32.totalorder %s466, %s480
    %p482 = scmp.eq.s32.totalorder %s36, 0
    %p483 = por %p481, %p482
    %s485 = sadd.s32 %s484, 1
    %p488 = scmp.eq.s32.totalorder %s30, 1
    %p489 = scmp.ne.s32.totalorder %s484, %s486
    %p490 = scmp.eq.s32.totalorder %s30, 0
    %p491 = por %p489, %p490
    %p492 = scmp.ne.s32.totalorder %s484, %s486
    %p493 = scmp.eq.s32.totalorder %s35, 1
    %p494 = por %p492, %p493
    %p495 = scmp.ne.s32.totalorder %s486, %s487
    %p496 = scmp.eq.s32.totalorder %s35, 0
    %p497 = por %p495, %p496
    %p498 = scmp.ne.s32.totalorder %s486, %s487
    %p499 = scmp.eq.s32.totalorder %s36, 1
    %p500 = por %p498, %p499
    %p502 = scmp.ne.s32.totalorder %s487, %s501
    %p503 = scmp.eq.s32.totalorder %s36, 0
    %p504 = por %p502, %p503
    %s506 = sadd.s32 %s505, 1
    %p509 = scmp.eq.s32.totalorder %s30, 1
    %p510 = scmp.ne.s32.totalorder %s505, %s507
    %p511 = scmp.eq.s32.totalorder %s30, 0
    %p512 = por %p510, %p511
    %p513 = scmp.ne.s32.totalorder %s505, %s507
    %p514 = scmp.eq.s32.totalorder %s35, 1
    %p515 = por %p513, %p514
    %p516 = scmp.ne.s32.totalorder %s507, %s508
    %p517 = scmp.eq.s32.totalorder %s35, 0
    %p518 = por %p516, %p517
    %p519 = scmp.ne.s32.totalorder %s507, %s508
    %p520 = scmp.eq.s32.totalorder %s36, 1
    %p521 = por %p519, %p520
    %p523 = scmp.ne.s32.totalorder %s508, %s522
    %p524 = scmp.eq.s32.totalorder %s36, 0
    %p525 = por %p523, %p524
    %s527 = sadd.s32 %s526, 1
    %p530 = scmp.eq.s32.totalorder %s30, 1
    %p531 = scmp.ne.s32.totalorder %s526, %s528
    %p532 = scmp.eq.s32.totalorder %s30, 0
    %p533 = por %p531, %p532
    %p534 = scmp.ne.s32.totalorder %s526, %s528
    %p535 = scmp.eq.s32.totalorder %s35, 1
    %p536 = por %p534, %p535
    %p537 = scmp.ne.s32.totalorder %s528, %s529
    %p538 = scmp.eq.s32.totalorder %s35, 0
    %p539 = por %p537, %p538
    %p540 = scmp.ne.s32.totalorder %s528, %s529
    %p541 = scmp.eq.s32.totalorder %s36, 1
    %p542 = por %p540, %p541
    %p544 = scmp.ne.s32.totalorder %s529, %s543
    %p545 = scmp.eq.s32.totalorder %s36, 0
    %p546 = por %p544, %p545
    %s547 = ssub.s32 %s30, %s37
    %p548 = scmp.eq.s32.totalorder %s547, 0
    %s550 = sadd.s32 %s549, 1
    %s551 = scalar_select %p548, %s549, %s550
    %p554 = pneg %p548
    %p555 = scmp.eq.s32.totalorder %s30, 1
    %p556 = por %p554, %p555
    %p557 = scmp.ne.s32.totalorder %s549, %s552
    %p558 = scmp.eq.s32.totalorder %s30, 0
    %p559 = por %p557, %p558
    %p560 = scmp.ne.s32.totalorder %s549, %s552
    %p561 = scmp.eq.s32.totalorder %s35, 1
    %p562 = por %p560, %p561
    %p563 = scmp.ne.s32.totalorder %s552, %s553
    %p564 = scmp.eq.s32.totalorder %s35, 0
    %p565 = por %p563, %p564
    %p566 = scmp.ne.s32.totalorder %s552, %s553
    %p567 = scmp.eq.s32.totalorder %s36, 1
    %p568 = por %p566, %p567
    %p570 = scmp.ne.s32.totalorder %s553, %s569
    %p571 = scmp.eq.s32.totalorder %s36, 0
    %p572 = por %p570, %p571
    %p573 = scmp.le.s32.totalorder 1, %s30
    %p574 = scmp.lt.s32.totalorder %s30, 3
    %p575 = pnand %p573, %p574
    %p576 = pneg %p575
    // Predicated region
    $region9: #{dinov2_backbone_forward.1} parent=5 // pred_check
      _
    $region10: #{dinov2_backbone_forward.1} parent=5 // pred_check_branch
      %578 = sbr.rel (%p575) target = $region12
    $region11: #{dinov2_backbone_forward.1} parent=5 // pred_region
      %s579 = ssub.s32 %s30, 1
      // Predicated region
      $region13: #{dinov2_backbone_forward.1} parent=11 // pred_check
        %p580 = pneg %p77
      $region14: #{dinov2_backbone_forward.1} parent=11 // pred_check_branch
        %582 = sbr.rel (%p580) target = $region16
      $region15: #{dinov2_backbone_forward.1} parent=11 // pred_region
        _
      $region16: #{dinov2_backbone_forward.1} parent=11 // pred_fallthru
        _
      // Predicated region
      $region17: #{dinov2_backbone_forward.1} parent=11 // pred_check
        %p583 = pneg %p98
      $region18: #{dinov2_backbone_forward.1} parent=11 // pred_check_branch
        %585 = sbr.rel (%p583) target = $region20
      $region19: #{dinov2_backbone_forward.1} parent=11 // pred_region
        _
      $region20: #{dinov2_backbone_forward.1} parent=11 // pred_fallthru
        _
      // Predicated region
      $region21: #{dinov2_backbone_forward.1} parent=11 // pred_check
        %p586 = pneg %p119
      $region22: #{dinov2_backbone_forward.1} parent=11 // pred_check_branch
        %588 = sbr.rel (%p586) target = $region24
      $region23: #{dinov2_backbone_forward.1} parent=11 // pred_region
        _
      $region24: #{dinov2_backbone_forward.1} parent=11 // pred_fallthru
        _
      // Predicated region
      $region25: #{dinov2_backbone_forward.1} parent=11 // pred_check
        %p589 = pneg %p140
      $region26: #{dinov2_backbone_forward.1} parent=11 // pred_check_branch
        %591 = sbr.rel (%p589) target = $region28
      $region27: #{dinov2_backbone_forward.1} parent=11 // pred_region
        _
      $region28: #{dinov2_backbone_forward.1} parent=11 // pred_fallthru
        _
      // Predicated region
      $region29: #{dinov2_backbone_forward.1} parent=11 // pred_check
        %p592 = pneg %p161
      $region30: #{dinov2_backbone_forward.1} parent=11 // pred_check_branch
        %594 = sbr.rel (%p592) target = $region32
      $region31: #{dinov2_backbone_forward.1} parent=11 // pred_region
        _
      $region32: #{dinov2_backbone_forward.1} parent=11 // pred_fallthru
        _
      // Predicated region
      $region33: #{dinov2_backbone_forward.1} parent=11 // pred_check
        %p595 = pneg %p182
      $region34: #{dinov2_backbone_forward.1} parent=11 // pred_check_branch
        %597 = sbr.rel (%p595) target = $region36
      $region35: #{dinov2_backbone_forward.1} parent=11 // pred_region
        _
      $region36: #{dinov2_backbone_forward.1} parent=11 // pred_fallthru
        _
      // Predicated region
      $region37: #{dinov2_backbone_forward.1} parent=11 // pred_check
        %p598 = pneg %p203
      $region38: #{dinov2_backbone_forward.1} parent=11 // pred_check_branch
        %600 = sbr.rel (%p598) target = $region40
      $region39: #{dinov2_backbone_forward.1} parent=11 // pred_region
        _
      $region40: #{dinov2_backbone_forward.1} parent=11 // pred_fallthru
        _
      // Predicated region
      $region41: #{dinov2_backbone_forward.1} parent=11 // pred_check
        %p601 = pneg %p224
      $region42: #{dinov2_backbone_forward.1} parent=11 // pred_check_branch
        %603 = sbr.rel (%p601) target = $region44
      $region43: #{dinov2_backbone_forward.1} parent=11 // pred_region
        _
      $region44: #{dinov2_backbone_forward.1} parent=11 // pred_fallthru
        _
      // Predicated region
      $region45: #{dinov2_backbone_forward.1} parent=11 // pred_check
        %p604 = pneg %p245
      $region46: #{dinov2_backbone_forward.1} parent=11 // pred_check_branch
        %606 = sbr.rel (%p604) target = $region48
      $region47: #{dinov2_backbone_forward.1} parent=11 // pred_region
        _
      $region48: #{dinov2_backbone_forward.1} parent=11 // pred_fallthru
        _
      // Predicated region
      $region49: #{dinov2_backbone_forward.1} parent=11 // pred_check
        %p607 = pneg %p266
      $region50: #{dinov2_backbone_forward.1} parent=11 // pred_check_branch
        %609 = sbr.rel (%p607) target = $region52
      $region51: #{dinov2_backbone_forward.1} parent=11 // pred_region
        _
      $region52: #{dinov2_backbone_forward.1} parent=11 // pred_fallthru
        _
      // Predicated region
      $region53: #{dinov2_backbone_forward.1} parent=11 // pred_check
        %p610 = pneg %p287
      $region54: #{dinov2_backbone_forward.1} parent=11 // pred_check_branch
        %612 = sbr.rel (%p610) target = $region56
      $region55: #{dinov2_backbone_forward.1} parent=11 // pred_region
        _
      $region56: #{dinov2_backbone_forward.1} parent=11 // pred_fallthru
        _
      // Predicated region
      $region57: #{dinov2_backbone_forward.1} parent=11 // pred_check
        %p613 = pneg %p308
      $region58: #{dinov2_backbone_forward.1} parent=11 // pred_check_branch
        %615 = sbr.rel (%p613) target = $region60
      $region59: #{dinov2_backbone_forward.1} parent=11 // pred_region
        _
      $region60: #{dinov2_backbone_forward.1} parent=11 // pred_fallthru
        _
      // Predicated region
      $region61: #{dinov2_backbone_forward.1} parent=11 // pred_check
        %p616 = pneg %p329
      $region62: #{dinov2_backbone_forward.1} parent=11 // pred_check_branch
        %618 = sbr.rel (%p616) target = $region64
      $region63: #{dinov2_backbone_forward.1} parent=11 // pred_region
        _
      $region64: #{dinov2_backbone_forward.1} parent=11 // pred_fallthru
        _
      // Predicated region
      $region65: #{dinov2_backbone_forward.1} parent=11 // pred_check
        %p619 = pneg %p350
      $region66: #{dinov2_backbone_forward.1} parent=11 // pred_check_branch
        %621 = sbr.rel (%p619) target = $region68
      $region67: #{dinov2_backbone_forward.1} parent=11 // pred_region
        _
      $region68: #{dinov2_backbone_forward.1} parent=11 // pred_fallthru
        _
      // Predicated region
      $region69: #{dinov2_backbone_forward.1} parent=11 // pred_check
        %p622 = pneg %p371
      $region70: #{dinov2_backbone_forward.1} parent=11 // pred_check_branch
        %624 = sbr.rel (%p622) target = $region72
      $region71: #{dinov2_backbone_forward.1} parent=11 // pred_region
        _
      $region72: #{dinov2_backbone_forward.1} parent=11 // pred_fallthru
        _
      // Predicated region
      $region73: #{dinov2_backbone_forward.1} parent=11 // pred_check
        %p625 = pneg %p392
      $region74: #{dinov2_backbone_forward.1} parent=11 // pred_check_branch
        %627 = sbr.rel (%p625) target = $region76
      $region75: #{dinov2_backbone_forward.1} parent=11 // pred_region
        _
      $region76: #{dinov2_backbone_forward.1} parent=11 // pred_fallthru
        _
      // Predicated region
      $region77: #{dinov2_backbone_forward.1} parent=11 // pred_check
        %p628 = pneg %p413
      $region78: #{dinov2_backbone_forward.1} parent=11 // pred_check_branch
        %630 = sbr.rel (%p628) target = $region80
      $region79: #{dinov2_backbone_forward.1} parent=11 // pred_region
        _
      $region80: #{dinov2_backbone_forward.1} parent=11 // pred_fallthru
        _
      // Predicated region
      $region81: #{dinov2_backbone_forward.1} parent=11 // pred_check
        %p631 = pneg %p434
      $region82: #{dinov2_backbone_forward.1} parent=11 // pred_check_branch
        %633 = sbr.rel (%p631) target = $region84
      $region83: #{dinov2_backbone_forward.1} parent=11 // pred_region
        _
      $region84: #{dinov2_backbone_forward.1} parent=11 // pred_fallthru
        _
      // Predicated region
      $region85: #{dinov2_backbone_forward.1} parent=11 // pred_check
        %p634 = pneg %p455
      $region86: #{dinov2_backbone_forward.1} parent=11 // pred_check_branch
        %636 = sbr.rel (%p634) target = $region88
      $region87: #{dinov2_backbone_forward.1} parent=11 // pred_region
        _
      $region88: #{dinov2_backbone_forward.1} parent=11 // pred_fallthru
        _
      // Predicated region
      $region89: #{dinov2_backbone_forward.1} parent=11 // pred_check
        %p637 = pneg %p476
      $region90: #{dinov2_backbone_forward.1} parent=11 // pred_check_branch
        %639 = sbr.rel (%p637) target = $region92
      $region91: #{dinov2_backbone_forward.1} parent=11 // pred_region
        _
      $region92: #{dinov2_backbone_forward.1} parent=11 // pred_fallthru
        _
      // Predicated region
      $region93: #{dinov2_backbone_forward.1} parent=11 // pred_check
        %p640 = pneg %p497
      $region94: #{dinov2_backbone_forward.1} parent=11 // pred_check_branch
        %642 = sbr.rel (%p640) target = $region96
      $region95: #{dinov2_backbone_forward.1} parent=11 // pred_region
        _
      $region96: #{dinov2_backbone_forward.1} parent=11 // pred_fallthru
        _
      // Predicated region
      $region97: #{dinov2_backbone_forward.1} parent=11 // pred_check
        %p643 = pneg %p518
      $region98: #{dinov2_backbone_forward.1} parent=11 // pred_check_branch
        %645 = sbr.rel (%p643) target = $region100
      $region99: #{dinov2_backbone_forward.1} parent=11 // pred_region
        _
      $region100: #{dinov2_backbone_forward.1} parent=11 // pred_fallthru
        _
      // Predicated region
      $region101: #{dinov2_backbone_forward.1} parent=11 // pred_check
        %p646 = pneg %p539
      $region102: #{dinov2_backbone_forward.1} parent=11 // pred_check_branch
        %648 = sbr.rel (%p646) target = $region104
      $region103: #{dinov2_backbone_forward.1} parent=11 // pred_region
        _
      $region104: #{dinov2_backbone_forward.1} parent=11 // pred_fallthru
        _
    $region12: #{dinov2_backbone_forward.1} parent=5 // pred_fallthru
      _
    %p649 = scmp.lt.s32.totalorder %s30, 2
    // Predicated region
    $region105: #{dinov2_backbone_forward.1} parent=5 // pred_check
      %p650 = pneg %p649
    $region106: #{dinov2_backbone_forward.1} parent=5 // pred_check_branch
      %652 = sbr.rel (%p650) target = $region108
    $region107: #{dinov2_backbone_forward.1} parent=5 // pred_region
      // Predicated region
      $region109: #{dinov2_backbone_forward.1} parent=107 // pred_check
        %p653 = pneg %p50
      $region110: #{dinov2_backbone_forward.1} parent=107 // pred_check_branch
        %655 = sbr.rel (%p653) target = $region112
      $region111: #{dinov2_backbone_forward.1} parent=107 // pred_region
        %p656 = scmp.lt.s32.totalorder %s30, 1
        %s657 = scalar_select %p656, %s30, 1
        %s658 = smul.addr %s657, 3
        %s659 = smul.addr %s658, 8
        %s660 = scalar_lea.vmem %s0, %s659
      $region112: #{dinov2_backbone_forward.1} parent=107 // pred_fallthru
        _
    $region108: #{dinov2_backbone_forward.1} parent=5 // pred_fallthru
      _
    %p661 = scmp.le.s32.totalorder 1, %s30
    %p662 = scmp.lt.s32.totalorder %s30, 3
    %p663 = pnand %p661, %p662
    %p664 = pneg %p663
    // Predicated region
    $region113: #{dinov2_backbone_forward.1} parent=5 // pred_check
      _
    $region114: #{dinov2_backbone_forward.1} parent=5 // pred_check_branch
      %666 = sbr.rel (%p663) target = $region116
    $region115: #{dinov2_backbone_forward.1} parent=5 // pred_region
      %s667 = ssub.s32 %s30, 1
      %p668 = scmp.lt.s32.totalorder %s35, 1
      %s669 = scalar_select %p668, %s35, 1
      %s670 = smul.addr %s669, 3
      %s671 = smul.addr %s670, 8
      %s672 = scalar_lea.vmem %s0, %s671
      %p673 = pneg %p56
      %p674 = pneg %p53
      %p675 = pneg %p77
      %p676 = pneg %p74
      %p677 = pneg %p98
      %p678 = pneg %p95
      %p679 = pneg %p119
      %p680 = pneg %p116
      %p681 = pneg %p140
      %p682 = pneg %p137
      %p683 = pneg %p161
      %p684 = pneg %p158
      %p685 = pneg %p182
      %p686 = pneg %p179
      %p687 = pneg %p203
      %p688 = pneg %p200
      %p689 = pneg %p224
      %p690 = pneg %p221
      %p691 = pneg %p245
      %p692 = pneg %p242
      %p693 = pneg %p266
      %p694 = pneg %p263
      %p695 = pneg %p287
      %p696 = pneg %p284
      %p697 = pneg %p308
      %p698 = pneg %p305
      %p699 = pneg %p329
      %p700 = pneg %p326
      %p701 = pneg %p350
      %p702 = pneg %p347
      %p703 = pneg %p371
      %p704 = pneg %p368
      %p705 = pneg %p392
      %p706 = pneg %p389
      %p707 = pneg %p413
      %p708 = pneg %p410
      %p709 = pneg %p434
      %p710 = pneg %p431
      %p711 = pneg %p455
      %p712 = pneg %p452
      %p713 = pneg %p476
      %p714 = pneg %p473
      %p715 = pneg %p497
      %p716 = pneg %p494
      %p717 = pneg %p518
      %p718 = pneg %p515
      %p719 = pneg %p539
      %p720 = pneg %p536
      %p721 = pneg %p565
      %p722 = pneg %p562
      %p723 = scmp.lt.s32.totalorder %s35, 1
      %s724 = scalar_select %p723, %s35, 1
      %s725 = smul.addr %s724, 3
      %s726 = smul.addr %s725, 8
      %s727 = scalar_lea.vmem %s24, %s726
      %p728 = scmp.lt.s32.totalorder %s35, 1
      %s729 = scalar_select %p728, %s35, 1
      %s730 = smul.addr %s729, 3
      %s731 = smul.addr %s730, 8
      %s732 = scalar_lea.vmem %s0, %s731
      %p733 = scmp.lt.s32.totalorder %s35, 1
      %s734 = scalar_select %p733, %s35, 1
      %s735 = smul.addr %s734, 3
      %s736 = smul.addr %s735, 8
      %s737 = scalar_lea.vmem %s24, %s736
      %v739 = vld [vmem:[%s732] sm:$0xff]
      %v740 = vld [vmem:[%s732 + $0x8] sm:$0xff]
      %v741 = vld [vmem:[%s732 + $0x10] sm:$0xff]
      %v742 = vpack.c.bf16 %v740, %v739
      %v743 = vpack.c.bf16 %v741, %v741
      %v744 = vld [vmem:[%s1] sm:$0xf]
      %v745 = vld [vmem:[%s1 + $0x4] sm:$0xf]
      %v746 = vld [vmem:[%s1 + $0x8] sm:$0xf]
      %v747 = vld [vmem:[%s1 + $0xc] sm:$0xf]
      %v748 = vld [vmem:[%s1 + $0x10] sm:$0xf]
      %v749 = vld [vmem:[%s1 + $0x14] sm:$0xf]
      %v750 = vld [vmem:[%s2] sm:$0x1]
      %v752 = vlaneseq
      %v753 = vshrl.u32 %v752, 7
      %v754 = vsub.s32 0, %v753
      %v755 = vrot.slane %v750, %v754
      %v763 = vunpack.c.l.b16 %v744
      %v764 = vunpack.c.l.b16 %v745
      %v765 = vunpack.c.l.b16 %v746
      %v766 = vunpack.c.l.b16 %v747
      %v767 = vunpack.c.l.b16 %v748
      %v768 = vunpack.c.l.b16 %v749
      %v769 = vpack.c.b16 %v764, %v763
      %v770 = vpack.c.b16 %v766, %v765
      %v771 = vpack.c.b16 %v768, %v767
      %vm775 = vcmask 392192
      %v777 = vsel %vm775, %v742, 0
      %v780 = vsel %vm775, %v743, 0
      %782 = vmatprep.subr.bf16.mxu0 0
      %783 = vmatpush1.bf16.msra.mxu0 %v769
      %784 = vmatprep.subr.bf16.mxu0 0
      %785 = vmatpush1.bf16.msra.mxu0 %v770
      %786 = vmatprep.subr.bf16.mxu0 0
      %787 = vmatpush1.bf16.msra.mxu0 %v771
      %788 = vmatprep.subr.bf16.mxu0 0
      %789 = vmatpush1.bf16.msra.mxu0 0
      %790 = vmatprep.subr.bf16.mxu0 0
      %791 = vmatpush1.bf16.msra.mxu0 0
      %792 = vmatprep.subr.bf16.mxu0 0
      %793 = vmatpush1.bf16.msra.mxu0 0
      %794 = vmatprep.subr.bf16.mxu0 0
      %795 = vmatpush1.bf16.msra.mxu0 0
      %796 = vmatprep.subr.bf16.mxu0 0
      %797 = vmatpush1.bf16.msra.mxu0 0
      %798 = vmatprep.subr.bf16.mxu0 0
      %799 = vmatpush1.bf16.msra.mxu0 0
      %800 = vmatprep.subr.bf16.mxu0 0
      %801 = vmatpush1.bf16.msra.mxu0 0
      %802 = vmatprep.subr.bf16.mxu0 0
      %803 = vmatpush1.bf16.msra.mxu0 0
      %804 = vmatprep.subr.bf16.mxu0 0
      %805 = vmatpush1.bf16.msra.mxu0 0
      %806 = vmatprep.subr.bf16.mxu0 0
      %807 = vmatpush1.bf16.msra.mxu0 0
      %808 = vmatprep.subr.bf16.mxu0 0
      %809 = vmatpush1.bf16.msra.mxu0 0
      %810 = vmatprep.subr.bf16.mxu0 0
      %811 = vmatpush1.bf16.msra.mxu0 0
      %812 = vmatprep.subr.bf16.mxu0 0
      %813 = vmatpush1.bf16.msra.mxu0 0
      %814 = vmatprep.mubr.bf16.mxu0 0
      %815 = vmatmul.mubr.bf16.gmra.mrb[0].mxu0 %v777
      %v816 = vpop.f32.mrb[0].mxu0
      %v817 = vadd.f32 %v755, %v816
      %v818 = vpop.f32.mrb[0].mxu0
      %v819 = vpop.f32.mrb[0].mxu0
      %v820 = vadd.f32 %v755, %v819
      %v821 = vpop.f32.mrb[0].mxu0
      %822 = vmatprep.mubr.bf16.mxu0 0
      %823 = vmatmul.mubr.bf16.gmra.mrb[0].mxu0 %v780
      %v824 = vpop.f32.mrb[0].mxu0
      %v825 = vadd.f32 %v755, %v824
      %v826 = vpop.f32.mrb[0].mxu0
      %v827 = vpop.f32.mrb[0].mxu0
      %v828 = vpop.f32.mrb[0].mxu0
      %829 = vdwg.mxu0
      %v830 = vld [vmem:[%s3] sm:$0xff]
      %v831 = vld [vmem:[%s3 + $0x8] sm:$0xff]
      %v832 = vld [vmem:[%s3 + $0x10] sm:$0xff]
      %v833 = vadd.f32 %v817, %v830
      %v834 = vadd.f32 %v820, %v831
      %v835 = vadd.f32 %v825, %v832
      %v836 = vlaneseq
      %v837 = vand.u32 %v836, 127
      %vm838 = vcmp.lt.s32.totalorder %v837, 17
      %v839 = vsel %vm838, 0.0, -1e+30
      %v840 = vld [vmem:[%s4] sm:$0x1]
      %v841 = vld [vmem:[%s5] sm:$0x1]
      %vm842 = vcmask 261120
      %v843 = vsel %vm842, %v833, 0.0
      %844 = vadd.xlane.f32.xlu0 %v843
      %v845 = vpop.xlane.xlu0 %844
      %v846 = vsel %vm842, %v834, 0.0
      %847 = vadd.xlane.f32.xlu0 %v846
      %v848 = vpop.xlane.xlu0 %847
      %v849 = vsel %vm842, %v835, 0.0
      %850 = vadd.xlane.f32.xlu0 %v849
      %v851 = vpop.xlane.xlu0 %850
      %v852 = vrcp.pop 32.0
      %v853 = vmul.f32 %v845, %v852
      %v854 = vmul.f32 %v848, %v852
      %v855 = vmul.f32 %v851, %v852
      %v856 = vsub.f32 %v833, %v853
      %v857 = vsub.f32 %v834, %v854
      %v858 = vsub.f32 %v835, %v855
      %v859 = vmul.f32 %v856, %v856
      %v860 = vmul.f32 %v857, %v857
      %v861 = vmul.f32 %v858, %v858
      %v862 = vsel %vm842, %v859, 0.0
      %863 = vadd.xlane.f32.xlu0 %v862
      %v864 = vpop.xlane.xlu0 %863
      %v865 = vsel %vm842, %v860, 0.0
      %866 = vadd.xlane.f32.xlu0 %v865
      %v867 = vpop.xlane.xlu0 %866
      %v868 = vsel %vm842, %v861, 0.0
      %869 = vadd.xlane.f32.xlu0 %v868
      %v870 = vpop.xlane.xlu0 %869
      %v871 = vmul.f32 %v864, %v852
      %v872 = vmul.f32 %v867, %v852
      %v873 = vmul.f32 %v870, %v852
      %v874 = vadd.f32 %v871, 1e-06
      %v875 = vadd.f32 %v872, 1e-06
      %v876 = vadd.f32 %v873, 1e-06
      %v877 = vrsqrt.pop %v874
      %v878 = vrsqrt.pop %v875
      %v879 = vrsqrt.pop %v876
      %v880 = vmul.f32 %v856, %v877
      %v881 = vmul.f32 %v857, %v878
      %v882 = vmul.f32 %v858, %v879
      %v884 = vlaneseq
      %v885 = vshrl.u32 %v884, 7
      %v886 = vsub.s32 0, %v885
      %v887 = vrot.slane %v840, %v886
      %v889 = vmul.f32 %v880, %v887
      %v890 = vmul.f32 %v881, %v887
      %v891 = vmul.f32 %v882, %v887
      %v893 = vlaneseq
      %v894 = vshrl.u32 %v893, 7
      %v895 = vsub.s32 0, %v894
      %v896 = vrot.slane %v841, %v895
      %v898 = vadd.f32 %v889, %v896
      %v899 = vadd.f32 %v890, %v896
      %v900 = vadd.f32 %v891, %v896
      %v901 = vpack.c.bf16 %v899, %v898
      %v902 = vpack.c.bf16 %v900, %v900
      %v903 = vld [vmem:[%s6] sm:$0xf]
      %v904 = vld [vmem:[%s6 + $0x4] sm:$0xf]
      %v905 = vld [vmem:[%s6 + $0x8] sm:$0xf]
      %v906 = vld [vmem:[%s6 + $0xc] sm:$0xf]
      %v907 = vld [vmem:[%s7] sm:$0x1]
      %v909 = vlaneseq
      %v910 = vshrl.u32 %v909, 7
      %v911 = vsub.s32 0, %v910
      %v912 = vrot.slane %v907, %v911
      %v918 = vunpack.c.l.b16 %v903
      %v919 = vunpack.c.l.b16 %v904
      %v920 = vunpack.c.l.b16 %v905
      %v921 = vunpack.c.l.b16 %v906
      %v922 = vpack.c.b16 %v919, %v918
      %v923 = vpack.c.b16 %v921, %v920
      %v927 = vsel %vm842, %v901, 0
      %v930 = vsel %vm842, %v902, 0
      %932 = vmatprep.subr.bf16.mxu0 0
      %933 = vmatpush1.bf16.msra.mxu0 %v922
      %934 = vmatprep.subr.bf16.mxu0 0
      %935 = vmatpush1.bf16.msra.mxu0 %v923
      %936 = vmatprep.subr.bf16.mxu0 0
      %937 = vmatpush1.bf16.msra.mxu0 0
      %938 = vmatprep.subr.bf16.mxu0 0
      %939 = vmatpush1.bf16.msra.mxu0 0
      %940 = vmatprep.subr.bf16.mxu0 0
      %941 = vmatpush1.bf16.msra.mxu0 0
      %942 = vmatprep.subr.bf16.mxu0 0
      %943 = vmatpush1.bf16.msra.mxu0 0
      %944 = vmatprep.subr.bf16.mxu0 0
      %945 = vmatpush1.bf16.msra.mxu0 0
      %946 = vmatprep.subr.bf16.mxu0 0
      %947 = vmatpush1.bf16.msra.mxu0 0
      %948 = vmatprep.subr.bf16.mxu0 0
      %949 = vmatpush1.bf16.msra.mxu0 0
      %950 = vmatprep.subr.bf16.mxu0 0
      %951 = vmatpush1.bf16.msra.mxu0 0
      %952 = vmatprep.subr.bf16.mxu0 0
      %953 = vmatpush1.bf16.msra.mxu0 0
      %954 = vmatprep.subr.bf16.mxu0 0
      %955 = vmatpush1.bf16.msra.mxu0 0
      %956 = vmatprep.subr.bf16.mxu0 0
      %957 = vmatpush1.bf16.msra.mxu0 0
      %958 = vmatprep.subr.bf16.mxu0 0
      %959 = vmatpush1.bf16.msra.mxu0 0
      %960 = vmatprep.subr.bf16.mxu0 0
      %961 = vmatpush1.bf16.msra.mxu0 0
      %962 = vmatprep.subr.bf16.mxu0 0
      %963 = vmatpush1.bf16.msra.mxu0 0
      %964 = vmatprep.mubr.bf16.mxu0 0
      %965 = vmatmul.mubr.bf16.gmra.mrb[0].mxu0 %v927
      %v966 = vpop.f32.mrb[0].mxu0
      %v967 = vadd.f32 %v912, %v966
      %v968 = vpop.f32.mrb[0].mxu0
      %v969 = vpop.f32.mrb[0].mxu0
      %v970 = vadd.f32 %v912, %v969
      %v971 = vpop.f32.mrb[0].mxu0
      %972 = vmatprep.mubr.bf16.mxu0 0
      %973 = vmatmul.mubr.bf16.gmra.mrb[0].mxu0 %v930
      %v974 = vpop.f32.mrb[0].mxu0
      %v975 = vadd.f32 %v912, %v974
      %v976 = vpop.f32.mrb[0].mxu0
      %v977 = vpop.f32.mrb[0].mxu0
      %v978 = vpop.f32.mrb[0].mxu0
      %979 = vdwg.mxu0
      %v980 = vld [vmem:[%s8] sm:$0xf]
      %v981 = vld [vmem:[%s8 + $0x4] sm:$0xf]
      %v982 = vld [vmem:[%s8 + $0x8] sm:$0xf]
      %v983 = vld [vmem:[%s8 + $0xc] sm:$0xf]
      %v984 = vld [vmem:[%s9] sm:$0x1]
      %v986 = vlaneseq
      %v987 = vshrl.u32 %v986, 7
      %v988 = vsub.s32 0, %v987
      %v989 = vrot.slane %v984, %v988
      %v995 = vunpack.c.l.b16 %v980
      %v996 = vunpack.c.l.b16 %v981
      %v997 = vunpack.c.l.b16 %v982
      %v998 = vunpack.c.l.b16 %v983
      %v999 = vpack.c.b16 %v996, %v995
      %v1000 = vpack.c.b16 %v998, %v997
      %1003 = vmatprep.subr.bf16.mxu0 0
      %1004 = vmatpush1.bf16.msra.mxu0 %v999
      %1005 = vmatprep.subr.bf16.mxu0 0
      %1006 = vmatpush1.bf16.msra.mxu0 %v1000
      %1007 = vmatprep.subr.bf16.mxu0 0
      %1008 = vmatpush1.bf16.msra.mxu0 0
      %1009 = vmatprep.subr.bf16.mxu0 0
      %1010 = vmatpush1.bf16.msra.mxu0 0
      %1011 = vmatprep.subr.bf16.mxu0 0
      %1012 = vmatpush1.bf16.msra.mxu0 0
      %1013 = vmatprep.subr.bf16.mxu0 0
      %1014 = vmatpush1.bf16.msra.mxu0 0
      %1015 = vmatprep.subr.bf16.mxu0 0
      %1016 = vmatpush1.bf16.msra.mxu0 0
      %1017 = vmatprep.subr.bf16.mxu0 0
      %1018 = vmatpush1.bf16.msra.mxu0 0
      %1019 = vmatprep.subr.bf16.mxu0 0
      %1020 = vmatpush1.bf16.msra.mxu0 0
      %1021 = vmatprep.subr.bf16.mxu0 0
      %1022 = vmatpush1.bf16.msra.mxu0 0
      %1023 = vmatprep.subr.bf16.mxu0 0
      %1024 = vmatpush1.bf16.msra.mxu0 0
      %1025 = vmatprep.subr.bf16.mxu0 0
      %1026 = vmatpush1.bf16.msra.mxu0 0
      %1027 = vmatprep.subr.bf16.mxu0 0
      %1028 = vmatpush1.bf16.msra.mxu0 0
      %1029 = vmatprep.subr.bf16.mxu0 0
      %1030 = vmatpush1.bf16.msra.mxu0 0
      %1031 = vmatprep.subr.bf16.mxu0 0
      %1032 = vmatpush1.bf16.msra.mxu0 0
      %1033 = vmatprep.subr.bf16.mxu0 0
      %1034 = vmatpush1.bf16.msra.mxu0 0
      %1035 = vmatprep.mubr.bf16.mxu0 0
      %1036 = vmatmul.mubr.bf16.gmra.mrb[0].mxu0 %v927
      %v1037 = vpop.f32.mrb[0].mxu0
      %v1038 = vadd.f32 %v989, %v1037
      %v1039 = vpop.f32.mrb[0].mxu0
      %v1040 = vpop.f32.mrb[0].mxu0
      %v1041 = vadd.f32 %v989, %v1040
      %v1042 = vpop.f32.mrb[0].mxu0
      %1043 = vmatprep.mubr.bf16.mxu0 0
      %1044 = vmatmul.mubr.bf16.gmra.mrb[0].mxu0 %v930
      %v1045 = vpop.f32.mrb[0].mxu0
      %v1046 = vadd.f32 %v989, %v1045
      %v1047 = vpop.f32.mrb[0].mxu0
      %v1048 = vpop.f32.mrb[0].mxu0
      %v1049 = vpop.f32.mrb[0].mxu0
      %1050 = vdwg.mxu0
      %v1051 = vld [vmem:[%s10] sm:$0xf]
      %v1052 = vld [vmem:[%s10 + $0x4] sm:$0xf]
      %v1053 = vld [vmem:[%s10 + $0x8] sm:$0xf]
      %v1054 = vld [vmem:[%s10 + $0xc] sm:$0xf]
      %v1055 = vld [vmem:[%s11] sm:$0x1]
      %v1057 = vlaneseq
      %v1058 = vshrl.u32 %v1057, 7
      %v1059 = vsub.s32 0, %v1058
      %v1060 = vrot.slane %v1055, %v1059
      %v1066 = vunpack.c.l.b16 %v1051
      %v1067 = vunpack.c.l.b16 %v1052
      %v1068 = vunpack.c.l.b16 %v1053
      %v1069 = vunpack.c.l.b16 %v1054
      %v1070 = vpack.c.b16 %v1067, %v1066
      %v1071 = vpack.c.b16 %v1069, %v1068
      %1074 = vmatprep.subr.bf16.mxu0 0
      %1075 = vmatpush1.bf16.msra.mxu0 %v1070
      %1076 = vmatprep.subr.bf16.mxu0 0
      %1077 = vmatpush1.bf16.msra.mxu0 %v1071
      %1078 = vmatprep.subr.bf16.mxu0 0
      %1079 = vmatpush1.bf16.msra.mxu0 0
      %1080 = vmatprep.subr.bf16.mxu0 0
      %1081 = vmatpush1.bf16.msra.mxu0 0
      %1082 = vmatprep.subr.bf16.mxu0 0
      %1083 = vmatpush1.bf16.msra.mxu0 0
      %1084 = vmatprep.subr.bf16.mxu0 0
      %1085 = vmatpush1.bf16.msra.mxu0 0
      %1086 = vmatprep.subr.bf16.mxu0 0
      %1087 = vmatpush1.bf16.msra.mxu0 0
      %1088 = vmatprep.subr.bf16.mxu0 0
      %1089 = vmatpush1.bf16.msra.mxu0 0
      %1090 = vmatprep.subr.bf16.mxu0 0
      %1091 = vmatpush1.bf16.msra.mxu0 0
      %1092 = vmatprep.subr.bf16.mxu0 0
      %1093 = vmatpush1.bf16.msra.mxu0 0
      %1094 = vmatprep.subr.bf16.mxu0 0
      %1095 = vmatpush1.bf16.msra.mxu0 0
      %1096 = vmatprep.subr.bf16.mxu0 0
      %1097 = vmatpush1.bf16.msra.mxu0 0
      %1098 = vmatprep.subr.bf16.mxu0 0
      %1099 = vmatpush1.bf16.msra.mxu0 0
      %1100 = vmatprep.subr.bf16.mxu0 0
      %1101 = vmatpush1.bf16.msra.mxu0 0
      %1102 = vmatprep.subr.bf16.mxu0 0
      %1103 = vmatpush1.bf16.msra.mxu0 0
      %1104 = vmatprep.subr.bf16.mxu0 0
      %1105 = vmatpush1.bf16.msra.mxu0 0
      %1106 = vmatprep.mubr.bf16.mxu0 0
      %1107 = vmatmul.mubr.bf16.gmra.mrb[0].mxu0 %v927
      %v1108 = vpop.f32.mrb[0].mxu0
      %v1109 = vadd.f32 %v1060, %v1108
      %v1110 = vpop.f32.mrb[0].mxu0
      %v1111 = vpop.f32.mrb[0].mxu0
      %v1112 = vadd.f32 %v1060, %v1111
      %v1113 = vpop.f32.mrb[0].mxu0
      %1114 = vmatprep.mubr.bf16.mxu0 0
      %1115 = vmatmul.mubr.bf16.gmra.mrb[0].mxu0 %v930
      %v1116 = vpop.f32.mrb[0].mxu0
      %v1117 = vadd.f32 %v1060, %v1116
      %v1118 = vpop.f32.mrb[0].mxu0
      %v1119 = vpop.f32.mrb[0].mxu0
      %v1120 = vpop.f32.mrb[0].mxu0
      %1121 = vdwg.mxu0
      %v1122 = vpack.c.bf16 %v970, %v967
      %v1123 = vpack.c.bf16 %v975, %v975
      %1124 = vxpose.xlu0.b32.start [1/16] %v1038, 128
      %1125 = vxpose.xlu0.b32.cont [2/16] %v1041, 128
      %1126 = vxpose.xlu0.b32.cont [3/16] %v1046, 128
      %1127 = vxpose.xlu0.b32.cont [4/16] 0.0, 128
      %1128 = vxpose.xlu0.b32.cont [5/16] 0.0, 128
      %1129 = vxpose.xlu0.b32.cont [6/16] 0.0, 128
      %1130 = vxpose.xlu0.b32.cont [7/16] 0.0, 128
      %1131 = vxpose.xlu0.b32.cont [8/16] 0.0, 128
      %1132 = vxpose.xlu0.b32.cont [9/16] 0.0, 128
      %1133 = vxpose.xlu0.b32.cont [10/16] 0.0, 128
      %1134 = vxpose.xlu0.b32.cont [11/16] 0.0, 128
      %1135 = vxpose.xlu0.b32.cont [12/16] 0.0, 128
      %1136 = vxpose.xlu0.b32.cont [13/16] 0.0, 128
      %1137 = vxpose.xlu0.b32.cont [14/16] 0.0, 128
      %1138 = vxpose.xlu0.b32.cont [15/16] 0.0, 128
      %1139 = vxpose.xlu0.b32.end [16/16] 0.0, 128
      %v1140 = vpop.trf.xlu0
      %v1141 = vpop.trf.xlu0
      %v1142 = vpop.trf.xlu0
      %v1143 = vpop.trf.xlu0
      %v1144 = vpop.trf.xlu0
      %v1145 = vpop.trf.xlu0
      %v1146 = vpop.trf.xlu0
      %v1147 = vpop.trf.xlu0
      %v1148 = vpop.trf.xlu0
      %v1149 = vpop.trf.xlu0
      %v1150 = vpop.trf.xlu0
      %v1151 = vpop.trf.xlu0
      %v1152 = vpop.trf.xlu0
      %v1153 = vpop.trf.xlu0
      %v1154 = vpop.trf.xlu0
      %v1155 = vpop.trf.xlu0
      %v1156 = vpack.c.bf16 %v1141, %v1140
      %vm1157 = vcmask 130048
      %v1159 = vsel %vm1157, %v1122, 0
      %v1162 = vsel %vm1157, %v1123, 0
      %1164 = vmatprep.subr.bf16.mxu0 0
      %1165 = vmatpush1.bf16.msra.mxu0 %v1156
      %1166 = vmatprep.subr.bf16.mxu0 0
      %1167 = vmatpush1.bf16.msra.mxu0 0
      %1168 = vmatprep.subr.bf16.mxu0 0
      %1169 = vmatpush1.bf16.msra.mxu0 0
      %1170 = vmatprep.subr.bf16.mxu0 0
      %1171 = vmatpush1.bf16.msra.mxu0 0
      %1172 = vmatprep.subr.bf16.mxu0 0
      %1173 = vmatpush1.bf16.msra.mxu0 0
      %1174 = vmatprep.subr.bf16.mxu0 0
      %1175 = vmatpush1.bf16.msra.mxu0 0
      %1176 = vmatprep.subr.bf16.mxu0 0
      %1177 = vmatpush1.bf16.msra.mxu0 0
      %1178 = vmatprep.subr.bf16.mxu0 0
      %1179 = vmatpush1.bf16.msra.mxu0 0
      %1180 = vmatprep.subr.bf16.mxu0 0
      %1181 = vmatpush1.bf16.msra.mxu0 0
      %1182 = vmatprep.subr.bf16.mxu0 0
      %1183 = vmatpush1.bf16.msra.mxu0 0
      %1184 = vmatprep.subr.bf16.mxu0 0
      %1185 = vmatpush1.bf16.msra.mxu0 0
      %1186 = vmatprep.subr.bf16.mxu0 0
      %1187 = vmatpush1.bf16.msra.mxu0 0
      %1188 = vmatprep.subr.bf16.mxu0 0
      %1189 = vmatpush1.bf16.msra.mxu0 0
      %1190 = vmatprep.subr.bf16.mxu0 0
      %1191 = vmatpush1.bf16.msra.mxu0 0
      %1192 = vmatprep.subr.bf16.mxu0 0
      %1193 = vmatpush1.bf16.msra.mxu0 0
      %1194 = vmatprep.subr.bf16.mxu0 0
      %1195 = vmatpush1.bf16.msra.mxu0 0
      %1196 = vmatprep.mubr.bf16.mxu0 0
      %1197 = vmatmul.mubr.bf16.gmra.mrb[0].mxu0 %v1159
      %v1198 = vpop.f32.mrb[0].mxu0
      %v1199 = vadd.f32 0.0, %v1198
      %v1200 = vpop.f32.mrb[0].mxu0
      %v1201 = vpop.f32.mrb[0].mxu0
      %v1202 = vadd.f32 0.0, %v1201
      %v1203 = vpop.f32.mrb[0].mxu0
      %1204 = vmatprep.mubr.bf16.mxu0 0
      %1205 = vmatmul.mubr.bf16.gmra.mrb[0].mxu0 %v1162
      %v1206 = vpop.f32.mrb[0].mxu0
      %v1207 = vadd.f32 0.0, %v1206
      %v1208 = vpop.f32.mrb[0].mxu0
      %v1209 = vpop.f32.mrb[0].mxu0
      %v1210 = vpop.f32.mrb[0].mxu0
      %1211 = vdwg.mxu0
      %v1212 = vmul.f32 %v1199, 0.25
      %v1213 = vmul.f32 %v1202, 0.25
      %v1214 = vmul.f32 %v1207, 0.25
      %v1215 = vadd.f32 %v1212, %v839
      %v1216 = vadd.f32 %v1213, %v839
      %v1217 = vadd.f32 %v1214, %v839
      %vm1218 = vcmask 195584
      %v1219 = vsel %vm1218, %v1215, -inf
      %1220 = vmax.xlane.f32.xlu0 %v1219
      %v1221 = vpop.xlane.xlu0 %1220
      %v1222 = vsel %vm1218, %v1216, -inf
      %1223 = vmax.xlane.f32.xlu0 %v1222
      %v1224 = vpop.xlane.xlu0 %1223
      %v1225 = vsel %vm1218, %v1217, -inf
      %1226 = vmax.xlane.f32.xlu0 %v1225
      %v1227 = vpop.xlane.xlu0 %1226
      %v1228 = vsub.f32 %v1215, %v1221
      %v1229 = vsub.f32 %v1216, %v1224
      %v1230 = vsub.f32 %v1217, %v1227
      %v1231 = vmul.f32 %v1228, 1.442695
      %v1232 = vpow.pop %v1231
      %v1233 = vmul.f32 %v1229, 1.442695
      %v1234 = vpow.pop %v1233
      %v1235 = vmul.f32 %v1230, 1.442695
      %v1236 = vpow.pop %v1235
      %v1237 = vsel %vm1218, %v1232, 0.0
      %1238 = vadd.xlane.f32.xlu0 %v1237
      %v1239 = vpop.xlane.xlu0 %1238
      %v1240 = vsel %vm1218, %v1234, 0.0
      %1241 = vadd.xlane.f32.xlu0 %v1240
      %v1242 = vpop.xlane.xlu0 %1241
      %v1243 = vsel %vm1218, %v1236, 0.0
      %1244 = vadd.xlane.f32.xlu0 %v1243
      %v1245 = vpop.xlane.xlu0 %1244
      %v1246 = vrcp.pop %v1239
      %v1247 = vrcp.pop %v1242
      %v1248 = vrcp.pop %v1245
      %v1249 = vmul.f32 %v1232, %v1246
      %v1250 = vmul.f32 %v1234, %v1247
      %v1251 = vmul.f32 %v1236, %v1248
      %v1252 = vpack.c.bf16 %v1250, %v1249
      %v1253 = vpack.c.bf16 %v1251, %v1251
      %v1254 = vpack.c.bf16 %v1112, %v1109
      %v1255 = vpack.c.bf16 %v1117, %v1117
      %v1257 = vsel %vm1218, %v1252, 0
      %v1260 = vsel %vm1218, %v1253, 0
      %vm1262 = vcmask 1043456
      %v1264 = vsel %vm1262, %v1255, 0
      %1266 = vmatprep.subr.bf16.mxu0 0
      %1267 = vmatpush1.bf16.msra.mxu0 %v1254
      %1268 = vmatprep.subr.bf16.mxu0 0
      %1269 = vmatpush1.bf16.msra.mxu0 %v1264
      %1270 = vmatprep.subr.bf16.mxu0 0
      %1271 = vmatpush1.bf16.msra.mxu0 0
      %1272 = vmatprep.subr.bf16.mxu0 0
      %1273 = vmatpush1.bf16.msra.mxu0 0
      %1274 = vmatprep.subr.bf16.mxu0 0
      %1275 = vmatpush1.bf16.msra.mxu0 0
      %1276 = vmatprep.subr.bf16.mxu0 0
      %1277 = vmatpush1.bf16.msra.mxu0 0
      %1278 = vmatprep.subr.bf16.mxu0 0
      %1279 = vmatpush1.bf16.msra.mxu0 0
      %1280 = vmatprep.subr.bf16.mxu0 0
      %1281 = vmatpush1.bf16.msra.mxu0 0
      %1282 = vmatprep.subr.bf16.mxu0 0
      %1283 = vmatpush1.bf16.msra.mxu0 0
      %1284 = vmatprep.subr.bf16.mxu0 0
      %1285 = vmatpush1.bf16.msra.mxu0 0
      %1286 = vmatprep.subr.bf16.mxu0 0
      %1287 = vmatpush1.bf16.msra.mxu0 0
      %1288 = vmatprep.subr.bf16.mxu0 0
      %1289 = vmatpush1.bf16.msra.mxu0 0
      %1290 = vmatprep.subr.bf16.mxu0 0
      %1291 = vmatpush1.bf16.msra.mxu0 0
      %1292 = vmatprep.subr.bf16.mxu0 0
      %1293 = vmatpush1.bf16.msra.mxu0 0
      %1294 = vmatprep.subr.bf16.mxu0 0
      %1295 = vmatpush1.bf16.msra.mxu0 0
      %1296 = vmatprep.subr.bf16.mxu0 0
      %1297 = vmatpush1.bf16.msra.mxu0 0
      %1298 = vmatprep.mubr.bf16.mxu0 0
      %1299 = vmatmul.mubr.bf16.gmra.mrb[0].mxu0 %v1257
      %v1300 = vpop.f32.mrb[0].mxu0
      %v1301 = vadd.f32 0.0, %v1300
      %v1302 = vpop.f32.mrb[0].mxu0
      %v1303 = vpop.f32.mrb[0].mxu0
      %v1304 = vadd.f32 0.0, %v1303
      %v1305 = vpop.f32.mrb[0].mxu0
      %1306 = vmatprep.mubr.bf16.mxu0 0
      %1307 = vmatmul.mubr.bf16.gmra.mrb[0].mxu0 %v1260
      %v1308 = vpop.f32.mrb[0].mxu0
      %v1309 = vadd.f32 0.0, %v1308
      %v1310 = vpop.f32.mrb[0].mxu0
      %v1311 = vpop.f32.mrb[0].mxu0
      %v1312 = vpop.f32.mrb[0].mxu0
      %1313 = vdwg.mxu0
      %v1314 = vpack.c.bf16 %v1304, %v1301
      %v1315 = vpack.c.bf16 %v1309, %v1309
      %v1316 = vld [vmem:[%s12] sm:$0xf]
      %v1317 = vld [vmem:[%s12 + $0x4] sm:$0xf]
      %s1318 = scalar_lea.vmem %s6, 16
      %v1319 = vld [vmem:[%s1318] sm:$0xf]
      %v1320 = vld [vmem:[%s1318 + $0x4] sm:$0xf]
      %v1321 = vld [vmem:[%s1318 + $0x8] sm:$0xf]
      %v1322 = vld [vmem:[%s1318 + $0xc] sm:$0xf]
      %s1323 = scalar_lea.vmem %s7, 1
      %v1324 = vld [vmem:[%s1323] sm:$0x1]
      %v1326 = vlaneseq
      %v1327 = vshrl.u32 %v1326, 7
      %v1328 = vsub.s32 0, %v1327
      %v1329 = vrot.slane %v1324, %v1328
      %v1335 = vunpack.c.l.b16 %v1319
      %v1336 = vunpack.c.l.b16 %v1320
      %v1337 = vunpack.c.l.b16 %v1321
      %v1338 = vunpack.c.l.b16 %v1322
      %v1339 = vpack.c.b16 %v1336, %v1335
      %v1340 = vpack.c.b16 %v1338, %v1337
      %1343 = vmatprep.subr.bf16.mxu0 0
      %1344 = vmatpush1.bf16.msra.mxu0 %v1339
      %1345 = vmatprep.subr.bf16.mxu0 0
      %1346 = vmatpush1.bf16.msra.mxu0 %v1340
      %1347 = vmatprep.subr.bf16.mxu0 0
      %1348 = vmatpush1.bf16.msra.mxu0 0
      %1349 = vmatprep.subr.bf16.mxu0 0
      %1350 = vmatpush1.bf16.msra.mxu0 0
      %1351 = vmatprep.subr.bf16.mxu0 0
      %1352 = vmatpush1.bf16.msra.mxu0 0
      %1353 = vmatprep.subr.bf16.mxu0 0
      %1354 = vmatpush1.bf16.msra.mxu0 0
      %1355 = vmatprep.subr.bf16.mxu0 0
      %1356 = vmatpush1.bf16.msra.mxu0 0
      %1357 = vmatprep.subr.bf16.mxu0 0
      %1358 = vmatpush1.bf16.msra.mxu0 0
      %1359 = vmatprep.subr.bf16.mxu0 0
      %1360 = vmatpush1.bf16.msra.mxu0 0
      %1361 = vmatprep.subr.bf16.mxu0 0
      %1362 = vmatpush1.bf16.msra.mxu0 0
      %1363 = vmatprep.subr.bf16.mxu0 0
      %1364 = vmatpush1.bf16.msra.mxu0 0
      %1365 = vmatprep.subr.bf16.mxu0 0
      %1366 = vmatpush1.bf16.msra.mxu0 0
      %1367 = vmatprep.subr.bf16.mxu0 0
      %1368 = vmatpush1.bf16.msra.mxu0 0
      %1369 = vmatprep.subr.bf16.mxu0 0
      %1370 = vmatpush1.bf16.msra.mxu0 0
      %1371 = vmatprep.subr.bf16.mxu0 0
      %1372 = vmatpush1.bf16.msra.mxu0 0
      %1373 = vmatprep.subr.bf16.mxu0 0
      %1374 = vmatpush1.bf16.msra.mxu0 0
      %1375 = vmatprep.mubr.bf16.mxu0 0
      %1376 = vmatmul.mubr.bf16.gmra.mrb[0].mxu0 %v927
      %v1377 = vpop.f32.mrb[0].mxu0
      %v1378 = vadd.f32 %v1329, %v1377
      %v1379 = vpop.f32.mrb[0].mxu0
      %v1380 = vpop.f32.mrb[0].mxu0
      %v1381 = vadd.f32 %v1329, %v1380
      %v1382 = vpop.f32.mrb[0].mxu0
      %1383 = vmatprep.mubr.bf16.mxu0 0
      %1384 = vmatmul.mubr.bf16.gmra.mrb[0].mxu0 %v930
      %v1385 = vpop.f32.mrb[0].mxu0
      %v1386 = vadd.f32 %v1329, %v1385
      %v1387 = vpop.f32.mrb[0].mxu0
      %v1388 = vpop.f32.mrb[0].mxu0
      %v1389 = vpop.f32.mrb[0].mxu0
      %1390 = vdwg.mxu0
      %s1391 = scalar_lea.vmem %s8, 16
      %v1392 = vld [vmem:[%s1391] sm:$0xf]
      %v1393 = vld [vmem:[%s1391 + $0x4] sm:$0xf]
      %v1394 = vld [vmem:[%s1391 + $0x8] sm:$0xf]
      %v1395 = vld [vmem:[%s1391 + $0xc] sm:$0xf]
      %s1396 = scalar_lea.vmem %s9, 1
      %v1397 = vld [vmem:[%s1396] sm:$0x1]
      %v1399 = vlaneseq
      %v1400 = vshrl.u32 %v1399, 7
      %v1401 = vsub.s32 0, %v1400
      %v1402 = vrot.slane %v1397, %v1401
      %v1408 = vunpack.c.l.b16 %v1392
      %v1409 = vunpack.c.l.b16 %v1393
      %v1410 = vunpack.c.l.b16 %v1394
      %v1411 = vunpack.c.l.b16 %v1395
      %v1412 = vpack.c.b16 %v1409, %v1408
      %v1413 = vpack.c.b16 %v1411, %v1410
      %1416 = vmatprep.subr.bf16.mxu0 0
      %1417 = vmatpush1.bf16.msra.mxu0 %v1412
      %1418 = vmatprep.subr.bf16.mxu0 0
      %1419 = vmatpush1.bf16.msra.mxu0 %v1413
      %1420 = vmatprep.subr.bf16.mxu0 0
      %1421 = vmatpush1.bf16.msra.mxu0 0
      %1422 = vmatprep.subr.bf16.mxu0 0
      %1423 = vmatpush1.bf16.msra.mxu0 0
      %1424 = vmatprep.subr.bf16.mxu0 0
      %1425 = vmatpush1.bf16.msra.mxu0 0
      %1426 = vmatprep.subr.bf16.mxu0 0
      %1427 = vmatpush1.bf16.msra.mxu0 0
      %1428 = vmatprep.subr.bf16.mxu0 0
      %1429 = vmatpush1.bf16.msra.mxu0 0
      %1430 = vmatprep.subr.bf16.mxu0 0
      %1431 = vmatpush1.bf16.msra.mxu0 0
      %1432 = vmatprep.subr.bf16.mxu0 0
      %1433 = vmatpush1.bf16.msra.mxu0 0
      %1434 = vmatprep.subr.bf16.mxu0 0
      %1435 = vmatpush1.bf16.msra.mxu0 0
      %1436 = vmatprep.subr.bf16.mxu0 0
      %1437 = vmatpush1.bf16.msra.mxu0 0
      %1438 = vmatprep.subr.bf16.mxu0 0
      %1439 = vmatpush1.bf16.msra.mxu0 0
      %1440 = vmatprep.subr.bf16.mxu0 0
      %1441 = vmatpush1.bf16.msra.mxu0 0
      %1442 = vmatprep.subr.bf16.mxu0 0
      %1443 = vmatpush1.bf16.msra.mxu0 0
      %1444 = vmatprep.subr.bf16.mxu0 0
      %1445 = vmatpush1.bf16.msra.mxu0 0
      %1446 = vmatprep.subr.bf16.mxu0 0
      %1447 = vmatpush1.bf16.msra.mxu0 0
      %1448 = vmatprep.mubr.bf16.mxu0 0
      %1449 = vmatmul.mubr.bf16.gmra.mrb[0].mxu0 %v927
      %v1450 = vpop.f32.mrb[0].mxu0
      %v1451 = vadd.f32 %v1402, %v1450
      %v1452 = vpop.f32.mrb[0].mxu0
      %v1453 = vpop.f32.mrb[0].mxu0
      %v1454 = vadd.f32 %v1402, %v1453
      %v1455 = vpop.f32.mrb[0].mxu0
      %1456 = vmatprep.mubr.bf16.mxu0 0
      %1457 = vmatmul.mubr.bf16.gmra.mrb[0].mxu0 %v930
      %v1458 = vpop.f32.mrb[0].mxu0
      %v1459 = vadd.f32 %v1402, %v1458
      %v1460 = vpop.f32.mrb[0].mxu0
      %v1461 = vpop.f32.mrb[0].mxu0
      %v1462 = vpop.f32.mrb[0].mxu0
      %1463 = vdwg.mxu0
      %s1464 = scalar_lea.vmem %s10, 16
      %v1465 = vld [vmem:[%s1464] sm:$0xf]
      %v1466 = vld [vmem:[%s1464 + $0x4] sm:$0xf]
      %v1467 = vld [vmem:[%s1464 + $0x8] sm:$0xf]
      %v1468 = vld [vmem:[%s1464 + $0xc] sm:$0xf]
      %s1469 = scalar_lea.vmem %s11, 1
      %v1470 = vld [vmem:[%s1469] sm:$0x1]
      %v1472 = vlaneseq
      %v1473 = vshrl.u32 %v1472, 7
      %v1474 = vsub.s32 0, %v1473
      %v1475 = vrot.slane %v1470, %v1474
      %v1481 = vunpack.c.l.b16 %v1465
      %v1482 = vunpack.c.l.b16 %v1466
      %v1483 = vunpack.c.l.b16 %v1467
      %v1484 = vunpack.c.l.b16 %v1468
      %v1485 = vpack.c.b16 %v1482, %v1481
      %v1486 = vpack.c.b16 %v1484, %v1483
      %1489 = vmatprep.subr.bf16.mxu0 0
      %1490 = vmatpush1.bf16.msra.mxu0 %v1485
      %1491 = vmatprep.subr.bf16.mxu0 0
      %1492 = vmatpush1.bf16.msra.mxu0 %v1486
      %1493 = vmatprep.subr.bf16.mxu0 0
      %1494 = vmatpush1.bf16.msra.mxu0 0
      %1495 = vmatprep.subr.bf16.mxu0 0
      %1496 = vmatpush1.bf16.msra.mxu0 0
      %1497 = vmatprep.subr.bf16.mxu0 0
      %1498 = vmatpush1.bf16.msra.mxu0 0
      %1499 = vmatprep.subr.bf16.mxu0 0
      %1500 = vmatpush1.bf16.msra.mxu0 0
      %1501 = vmatprep.subr.bf16.mxu0 0
      %1502 = vmatpush1.bf16.msra.mxu0 0
      %1503 = vmatprep.subr.bf16.mxu0 0
      %1504 = vmatpush1.bf16.msra.mxu0 0
      %1505 = vmatprep.subr.bf16.mxu0 0
      %1506 = vmatpush1.bf16.msra.mxu0 0
      %1507 = vmatprep.subr.bf16.mxu0 0
      %1508 = vmatpush1.bf16.msra.mxu0 0
      %1509 = vmatprep.subr.bf16.mxu0 0
      %1510 = vmatpush1.bf16.msra.mxu0 0
      %1511 = vmatprep.subr.bf16.mxu0 0
      %1512 = vmatpush1.bf16.msra.mxu0 0
      %1513 = vmatprep.subr.bf16.mxu0 0
      %1514 = vmatpush1.bf16.msra.mxu0 0
      %1515 = vmatprep.subr.bf16.mxu0 0
      %1516 = vmatpush1.bf16.msra.mxu0 0
      %1517 = vmatprep.subr.bf16.mxu0 0
      %1518 = vmatpush1.bf16.msra.mxu0 0
      %1519 = vmatprep.subr.bf16.mxu0 0
      %1520 = vmatpush1.bf16.msra.mxu0 0
      %1521 = vmatprep.mubr.bf16.mxu0 0
      %1522 = vmatmul.mubr.bf16.gmra.mrb[0].mxu0 %v927
      %v1523 = vpop.f32.mrb[0].mxu0
      %v1524 = vadd.f32 %v1475, %v1523
      %v1525 = vpop.f32.mrb[0].mxu0
      %v1526 = vpop.f32.mrb[0].mxu0
      %v1527 = vadd.f32 %v1475, %v1526
      %v1528 = vpop.f32.mrb[0].mxu0
      %1529 = vmatprep.mubr.bf16.mxu0 0
      %1530 = vmatmul.mubr.bf16.gmra.mrb[0].mxu0 %v930
      %v1531 = vpop.f32.mrb[0].mxu0
      %v1532 = vadd.f32 %v1475, %v1531
      %v1533 = vpop.f32.mrb[0].mxu0
      %v1534 = vpop.f32.mrb[0].mxu0
      %v1535 = vpop.f32.mrb[0].mxu0
      %1536 = vdwg.mxu0
      %v1537 = vpack.c.bf16 %v1381, %v1378
      %v1538 = vpack.c.bf16 %v1386, %v1386
      %1539 = vxpose.xlu0.b32.start [1/16] %v1451, 128
      %1540 = vxpose.xlu0.b32.cont [2/16] %v1454, 128
      %1541 = vxpose.xlu0.b32.cont [3/16] %v1459, 128
      %1542 = vxpose.xlu0.b32.cont [4/16] 0.0, 128
      %1543 = vxpose.xlu0.b32.cont [5/16] 0.0, 128
      %1544 = vxpose.xlu0.b32.cont [6/16] 0.0, 128
      %1545 = vxpose.xlu0.b32.cont [7/16] 0.0, 128
      %1546 = vxpose.xlu0.b32.cont [8/16] 0.0, 128
      %1547 = vxpose.xlu0.b32.cont [9/16] 0.0, 128
      %1548 = vxpose.xlu0.b32.cont [10/16] 0.0, 128
      %1549 = vxpose.xlu0.b32.cont [11/16] 0.0, 128
      %1550 = vxpose.xlu0.b32.cont [12/16] 0.0, 128
      %1551 = vxpose.xlu0.b32.cont [13/16] 0.0, 128
      %1552 = vxpose.xlu0.b32.cont [14/16] 0.0, 128
      %1553 = vxpose.xlu0.b32.cont [15/16] 0.0, 128
      %1554 = vxpose.xlu0.b32.end [16/16] 0.0, 128
      %v1555 = vpop.trf.xlu0
      %v1556 = vpop.trf.xlu0
      %v1557 = vpop.trf.xlu0
      %v1558 = vpop.trf.xlu0
      %v1559 = vpop.trf.xlu0
      %v1560 = vpop.trf.xlu0
      %v1561 = vpop.trf.xlu0
      %v1562 = vpop.trf.xlu0
      %v1563 = vpop.trf.xlu0
      %v1564 = vpop.trf.xlu0
      %v1565 = vpop.trf.xlu0
      %v1566 = vpop.trf.xlu0
      %v1567 = vpop.trf.xlu0
      %v1568 = vpop.trf.xlu0
      %v1569 = vpop.trf.xlu0
      %v1570 = vpop.trf.xlu0
      %v1571 = vpack.c.bf16 %v1556, %v1555
      %v1573 = vsel %vm1157, %v1537, 0
      %v1576 = vsel %vm1157, %v1538, 0
      %1578 = vmatprep.subr.bf16.mxu0 0
      %1579 = vmatpush1.bf16.msra.mxu0 %v1571
      %1580 = vmatprep.subr.bf16.mxu0 0
      %1581 = vmatpush1.bf16.msra.mxu0 0
      %1582 = vmatprep.subr.bf16.mxu0 0
      %1583 = vmatpush1.bf16.msra.mxu0 0
      %1584 = vmatprep.subr.bf16.mxu0 0
      %1585 = vmatpush1.bf16.msra.mxu0 0
      %1586 = vmatprep.subr.bf16.mxu0 0
      %1587 = vmatpush1.bf16.msra.mxu0 0
      %1588 = vmatprep.subr.bf16.mxu0 0
      %1589 = vmatpush1.bf16.msra.mxu0 0
      %1590 = vmatprep.subr.bf16.mxu0 0
      %1591 = vmatpush1.bf16.msra.mxu0 0
      %1592 = vmatprep.subr.bf16.mxu0 0
      %1593 = vmatpush1.bf16.msra.mxu0 0
      %1594 = vmatprep.subr.bf16.mxu0 0
      %1595 = vmatpush1.bf16.msra.mxu0 0
      %1596 = vmatprep.subr.bf16.mxu0 0
      %1597 = vmatpush1.bf16.msra.mxu0 0
      %1598 = vmatprep.subr.bf16.mxu0 0
      %1599 = vmatpush1.bf16.msra.mxu0 0
      %1600 = vmatprep.subr.bf16.mxu0 0
      %1601 = vmatpush1.bf16.msra.mxu0 0
      %1602 = vmatprep.subr.bf16.mxu0 0
      %1603 = vmatpush1.bf16.msra.mxu0 0
      %1604 = vmatprep.subr.bf16.mxu0 0
      %1605 = vmatpush1.bf16.msra.mxu0 0
      %1606 = vmatprep.subr.bf16.mxu0 0
      %1607 = vmatpush1.bf16.msra.mxu0 0
      %1608 = vmatprep.subr.bf16.mxu0 0
      %1609 = vmatpush1.bf16.msra.mxu0 0
      %1610 = vmatprep.mubr.bf16.mxu0 0
      %1611 = vmatmul.mubr.bf16.gmra.mrb[0].mxu0 %v1573
      %v1612 = vpop.f32.mrb[0].mxu0
      %v1613 = vadd.f32 0.0, %v1612
      %v1614 = vpop.f32.mrb[0].mxu0
      %v1615 = vpop.f32.mrb[0].mxu0
      %v1616 = vadd.f32 0.0, %v1615
      %v1617 = vpop.f32.mrb[0].mxu0
      %1618 = vmatprep.mubr.bf16.mxu0 0
      %1619 = vmatmul.mubr.bf16.gmra.mrb[0].mxu0 %v1576
      %v1620 = vpop.f32.mrb[0].mxu0
      %v1621 = vadd.f32 0.0, %v1620
      %v1622 = vpop.f32.mrb[0].mxu0
      %v1623 = vpop.f32.mrb[0].mxu0
      %v1624 = vpop.f32.mrb[0].mxu0
      %1625 = vdwg.mxu0
      %v1626 = vmul.f32 %v1613, 0.25
      %v1627 = vmul.f32 %v1616, 0.25
      %v1628 = vmul.f32 %v1621, 0.25
      %v1629 = vadd.f32 %v1626, %v839
      %v1630 = vadd.f32 %v1627, %v839
      %v1631 = vadd.f32 %v1628, %v839
      %v1632 = vsel %vm1218, %v1629, -inf
      %1633 = vmax.xlane.f32.xlu0 %v1632
      %v1634 = vpop.xlane.xlu0 %1633
      %v1635 = vsel %vm1218, %v1630, -inf
      %1636 = vmax.xlane.f32.xlu0 %v1635
      %v1637 = vpop.xlane.xlu0 %1636
      %v1638 = vsel %vm1218, %v1631, -inf
      %1639 = vmax.xlane.f32.xlu0 %v1638
      %v1640 = vpop.xlane.xlu0 %1639
      %v1641 = vsub.f32 %v1629, %v1634
      %v1642 = vsub.f32 %v1630, %v1637
      %v1643 = vsub.f32 %v1631, %v1640
      %v1644 = vmul.f32 %v1641, 1.442695
      %v1645 = vpow.pop %v1644
      %v1646 = vmul.f32 %v1642, 1.442695
      %v1647 = vpow.pop %v1646
      %v1648 = vmul.f32 %v1643, 1.442695
      %v1649 = vpow.pop %v1648
      %v1650 = vsel %vm1218, %v1645, 0.0
      %1651 = vadd.xlane.f32.xlu0 %v1650
      %v1652 = vpop.xlane.xlu0 %1651
      %v1653 = vsel %vm1218, %v1647, 0.0
      %1654 = vadd.xlane.f32.xlu0 %v1653
      %v1655 = vpop.xlane.xlu0 %1654
      %v1656 = vsel %vm1218, %v1649, 0.0
      %1657 = vadd.xlane.f32.xlu0 %v1656
      %v1658 = vpop.xlane.xlu0 %1657
      %v1659 = vrcp.pop %v1652
      %v1660 = vrcp.pop %v1655
      %v1661 = vrcp.pop %v1658
      %v1662 = vmul.f32 %v1645, %v1659
      %v1663 = vmul.f32 %v1647, %v1660
      %v1664 = vmul.f32 %v1649, %v1661
      %v1665 = vpack.c.bf16 %v1663, %v1662
      %v1666 = vpack.c.bf16 %v1664, %v1664
      %v1667 = vpack.c.bf16 %v1527, %v1524
      %v1668 = vpack.c.bf16 %v1532, %v1532
      %v1670 = vsel %vm1218, %v1665, 0
      %v1673 = vsel %vm1218, %v1666, 0
      %v1676 = vsel %vm1262, %v1668, 0
      %1678 = vmatprep.subr.bf16.mxu0 0
      %1679 = vmatpush1.bf16.msra.mxu0 %v1667
      %1680 = vmatprep.subr.bf16.mxu0 0
      %1681 = vmatpush1.bf16.msra.mxu0 %v1676
      %1682 = vmatprep.subr.bf16.mxu0 0
      %1683 = vmatpush1.bf16.msra.mxu0 0
      %1684 = vmatprep.subr.bf16.mxu0 0
      %1685 = vmatpush1.bf16.msra.mxu0 0
      %1686 = vmatprep.subr.bf16.mxu0 0
      %1687 = vmatpush1.bf16.msra.mxu0 0
      %1688 = vmatprep.subr.bf16.mxu0 0
      %1689 = vmatpush1.bf16.msra.mxu0 0
      %1690 = vmatprep.subr.bf16.mxu0 0
      %1691 = vmatpush1.bf16.msra.mxu0 0
      %1692 = vmatprep.subr.bf16.mxu0 0
      %1693 = vmatpush1.bf16.msra.mxu0 0
      %1694 = vmatprep.subr.bf16.mxu0 0
      %1695 = vmatpush1.bf16.msra.mxu0 0
      %1696 = vmatprep.subr.bf16.mxu0 0
      %1697 = vmatpush1.bf16.msra.mxu0 0
      %1698 = vmatprep.subr.bf16.mxu0 0
      %1699 = vmatpush1.bf16.msra.mxu0 0
      %1700 = vmatprep.subr.bf16.mxu0 0
      %1701 = vmatpush1.bf16.msra.mxu0 0
      %1702 = vmatprep.subr.bf16.mxu0 0
      %1703 = vmatpush1.bf16.msra.mxu0 0
      %1704 = vmatprep.subr.bf16.mxu0 0
      %1705 = vmatpush1.bf16.msra.mxu0 0
      %1706 = vmatprep.subr.bf16.mxu0 0
      %1707 = vmatpush1.bf16.msra.mxu0 0
      %1708 = vmatprep.subr.bf16.mxu0 0
      %1709 = vmatpush1.bf16.msra.mxu0 0
      %1710 = vmatprep.mubr.bf16.mxu0 0
      %1711 = vmatmul.mubr.bf16.gmra.mrb[0].mxu0 %v1670
      %v1712 = vpop.f32.mrb[0].mxu0
      %v1713 = vadd.f32 0.0, %v1712
      %v1714 = vpop.f32.mrb[0].mxu0
      %v1715 = vpop.f32.mrb[0].mxu0
      %v1716 = vadd.f32 0.0, %v1715
      %v1717 = vpop.f32.mrb[0].mxu0
      %1718 = vmatprep.mubr.bf16.mxu0 0
      %1719 = vmatmul.mubr.bf16.gmra.mrb[0].mxu0 %v1673
      %v1720 = vpop.f32.mrb[0].mxu0
      %v1721 = vadd.f32 0.0, %v1720
      %v1722 = vpop.f32.mrb[0].mxu0
      %v1723 = vpop.f32.mrb[0].mxu0
      %v1724 = vpop.f32.mrb[0].mxu0
      %1725 = vdwg.mxu0
      %v1726 = vpack.c.bf16 %v1716, %v1713
      %v1727 = vpack.c.bf16 %v1721, %v1721
      %s1728 = scalar_lea.vmem %s12, 8
      %v1729 = vld [vmem:[%s1728] sm:$0xf]
      %v1730 = vld [vmem:[%s1728 + $0x4] sm:$0xf]
      %v1733 = vunpack.c.l.b16 %v1729
      %v1734 = vunpack.c.l.b16 %v1730
      %v1735 = vpack.c.b16 %v1734, %v1733
      %v1738 = vsel %vm1157, %v1726, 0
      %v1741 = vsel %vm1157, %v1727, 0
      %1743 = vmatprep.subr.bf16.mxu0 0
      %1744 = vmatpush1.bf16.msra.mxu0 %v1735
      %1745 = vmatprep.subr.bf16.mxu0 0
      %1746 = vmatpush1.bf16.msra.mxu0 0
      %1747 = vmatprep.subr.bf16.mxu0 0
      %1748 = vmatpush1.bf16.msra.mxu0 0
      %1749 = vmatprep.subr.bf16.mxu0 0
      %1750 = vmatpush1.bf16.msra.mxu0 0
      %1751 = vmatprep.subr.bf16.mxu0 0
      %1752 = vmatpush1.bf16.msra.mxu0 0
      %1753 = vmatprep.subr.bf16.mxu0 0
      %1754 = vmatpush1.bf16.msra.mxu0 0
      %1755 = vmatprep.subr.bf16.mxu0 0
      %1756 = vmatpush1.bf16.msra.mxu0 0
      %1757 = vmatprep.subr.bf16.mxu0 0
      %1758 = vmatpush1.bf16.msra.mxu0 0
      %1759 = vmatprep.subr.bf16.mxu0 0
      %1760 = vmatpush1.bf16.msra.mxu0 0
      %1761 = vmatprep.subr.bf16.mxu0 0
      %1762 = vmatpush1.bf16.msra.mxu0 0
      %1763 = vmatprep.subr.bf16.mxu0 0
      %1764 = vmatpush1.bf16.msra.mxu0 0
      %1765 = vmatprep.subr.bf16.mxu0 0
      %1766 = vmatpush1.bf16.msra.mxu0 0
      %1767 = vmatprep.subr.bf16.mxu0 0
      %1768 = vmatpush1.bf16.msra.mxu0 0
      %1769 = vmatprep.subr.bf16.mxu0 0
      %1770 = vmatpush1.bf16.msra.mxu0 0
      %1771 = vmatprep.subr.bf16.mxu0 0
      %1772 = vmatpush1.bf16.msra.mxu0 0
      %1773 = vmatprep.subr.bf16.mxu0 0
      %1774 = vmatpush1.bf16.msra.mxu0 0
      %1775 = vmatprep.mubr.bf16.mxu0 0
      %1776 = vmatmul.mubr.bf16.gmra.mrb[0].mxu0 %v1738
      %v1777 = vpop.f32.mrb[0].mxu0
      %v1778 = vadd.f32 0.0, %v1777
      %v1779 = vpop.f32.mrb[0].mxu0
      %v1780 = vpop.f32.mrb[0].mxu0
      %v1781 = vadd.f32 0.0, %v1780
      %v1782 = vpop.f32.mrb[0].mxu0
      %1783 = vmatprep.mubr.bf16.mxu0 0
      %1784 = vmatmul.mubr.bf16.gmra.mrb[0].mxu0 %v1741
      %v1785 = vpop.f32.mrb[0].mxu0
      %v1786 = vadd.f32 0.0, %v1785
      %v1787 = vpop.f32.mrb[0].mxu0
      %v1788 = vpop.f32.mrb[0].mxu0
      %v1789 = vpop.f32.mrb[0].mxu0
      %1790 = vdwg.mxu0
      %v1793 = vunpack.c.l.b16 %v1316
      %v1794 = vunpack.c.l.b16 %v1317
      %v1795 = vpack.c.b16 %v1794, %v1793
      %v1798 = vsel %vm1157, %v1314, 0
      %v1801 = vsel %vm1157, %v1315, 0
      %1803 = vmatprep.subr.bf16.mxu0 0
      %1804 = vmatpush1.bf16.msra.mxu0 %v1795
      %1805 = vmatprep.subr.bf16.mxu0 0
      %1806 = vmatpush1.bf16.msra.mxu0 0
      %1807 = vmatprep.subr.bf16.mxu0 0
      %1808 = vmatpush1.bf16.msra.mxu0 0
      %1809 = vmatprep.subr.bf16.mxu0 0
      %1810 = vmatpush1.bf16.msra.mxu0 0
      %1811 = vmatprep.subr.bf16.mxu0 0
      %1812 = vmatpush1.bf16.msra.mxu0 0
      %1813 = vmatprep.subr.bf16.mxu0 0
      %1814 = vmatpush1.bf16.msra.mxu0 0
      %1815 = vmatprep.subr.bf16.mxu0 0
      %1816 = vmatpush1.bf16.msra.mxu0 0
      %1817 = vmatprep.subr.bf16.mxu0 0
      %1818 = vmatpush1.bf16.msra.mxu0 0
      %1819 = vmatprep.subr.bf16.mxu0 0
      %1820 = vmatpush1.bf16.msra.mxu0 0
      %1821 = vmatprep.subr.bf16.mxu0 0
      %1822 = vmatpush1.bf16.msra.mxu0 0
      %1823 = vmatprep.subr.bf16.mxu0 0
      %1824 = vmatpush1.bf16.msra.mxu0 0
      %1825 = vmatprep.subr.bf16.mxu0 0
      %1826 = vmatpush1.bf16.msra.mxu0 0
      %1827 = vmatprep.subr.bf16.mxu0 0
      %1828 = vmatpush1.bf16.msra.mxu0 0
      %1829 = vmatprep.subr.bf16.mxu0 0
      %1830 = vmatpush1.bf16.msra.mxu0 0
      %1831 = vmatprep.subr.bf16.mxu0 0
      %1832 = vmatpush1.bf16.msra.mxu0 0
      %1833 = vmatprep.subr.bf16.mxu0 0
      %1834 = vmatpush1.bf16.msra.mxu0 0
      %1835 = vmatprep.mubr.bf16.mxu0 0
      %1836 = vmatmul.mubr.bf16.gmra.mrb[0].mxu0 %v1798
      %v1837 = vpop.f32.mrb[0].mxu0
      %v1838 = vadd.f32 %v1778, %v1837
      %v1839 = vpop.f32.mrb[0].mxu0
      %v1840 = vpop.f32.mrb[0].mxu0
      %v1841 = vadd.f32 %v1781, %v1840
      %v1842 = vpop.f32.mrb[0].mxu0
      %1843 = vmatprep.mubr.bf16.mxu0 0
      %1844 = vmatmul.mubr.bf16.gmra.mrb[0].mxu0 %v1801
      %v1845 = vpop.f32.mrb[0].mxu0
      %v1846 = vadd.f32 %v1786, %v1845
      %v1847 = vpop.f32.mrb[0].mxu0
      %v1848 = vpop.f32.mrb[0].mxu0
      %v1849 = vpop.f32.mrb[0].mxu0
      %1850 = vdwg.mxu0
      %v1851 = vld [vmem:[%s14] sm:$0x1]
      %v1852 = vld [vmem:[%s13] sm:$0x1]
      %v1854 = vlaneseq
      %v1855 = vshrl.u32 %v1854, 7
      %v1856 = vsub.s32 0, %v1855
      %v1857 = vrot.slane %v1852, %v1856
      %v1859 = vadd.f32 %v1838, %v1857
      %v1860 = vadd.f32 %v1841, %v1857
      %v1861 = vadd.f32 %v1846, %v1857
      %v1863 = vlaneseq
      %v1864 = vshrl.u32 %v1863, 7
      %v1865 = vsub.s32 0, %v1864
      %v1866 = vrot.slane %v1851, %v1865
      %v1868 = vmul.f32 %v1866, %v1859
      %v1869 = vmul.f32 %v1866, %v1860
      %v1870 = vmul.f32 %v1866, %v1861
      %v1871 = vadd.f32 %v833, %v1868
      %v1872 = vadd.f32 %v834, %v1869
      %v1873 = vadd.f32 %v835, %v1870
      %v1874 = vld [vmem:[%s15] sm:$0x1]
      %v1875 = vld [vmem:[%s16] sm:$0x1]
      %v1876 = vsel %vm842, %v1871, 0.0
      %1877 = vadd.xlane.f32.xlu0 %v1876
      %v1878 = vpop.xlane.xlu0 %1877
      %v1879 = vsel %vm842, %v1872, 0.0
      %1880 = vadd.xlane.f32.xlu0 %v1879
      %v1881 = vpop.xlane.xlu0 %1880
      %v1882 = vsel %vm842, %v1873, 0.0
      %1883 = vadd.xlane.f32.xlu0 %v1882
      %v1884 = vpop.xlane.xlu0 %1883
      %v1885 = vmul.f32 %v1878, %v852
      %v1886 = vmul.f32 %v1881, %v852
      %v1887 = vmul.f32 %v1884, %v852
      %v1888 = vsub.f32 %v1871, %v1885
      %v1889 = vsub.f32 %v1872, %v1886
      %v1890 = vsub.f32 %v1873, %v1887
      %v1891 = vmul.f32 %v1888, %v1888
      %v1892 = vmul.f32 %v1889, %v1889
      %v1893 = vmul.f32 %v1890, %v1890
      %v1894 = vsel %vm842, %v1891, 0.0
      %1895 = vadd.xlane.f32.xlu0 %v1894
      %v1896 = vpop.xlane.xlu0 %1895
      %v1897 = vsel %vm842, %v1892, 0.0
      %1898 = vadd.xlane.f32.xlu0 %v1897
      %v1899 = vpop.xlane.xlu0 %1898
      %v1900 = vsel %vm842, %v1893, 0.0
      %1901 = vadd.xlane.f32.xlu0 %v1900
      %v1902 = vpop.xlane.xlu0 %1901
      %v1903 = vmul.f32 %v1896, %v852
      %v1904 = vmul.f32 %v1899, %v852
      %v1905 = vmul.f32 %v1902, %v852
      %v1906 = vadd.f32 %v1903, 1e-06
      %v1907 = vadd.f32 %v1904, 1e-06
      %v1908 = vadd.f32 %v1905, 1e-06
      %v1909 = vrsqrt.pop %v1906
      %v1910 = vrsqrt.pop %v1907
      %v1911 = vrsqrt.pop %v1908
      %v1912 = vmul.f32 %v1888, %v1909
      %v1913 = vmul.f32 %v1889, %v1910
      %v1914 = vmul.f32 %v1890, %v1911
      %v1916 = vlaneseq
      %v1917 = vshrl.u32 %v1916, 7
      %v1918 = vsub.s32 0, %v1917
      %v1919 = vrot.slane %v1874, %v1918
      %v1921 = vmul.f32 %v1912, %v1919
      %v1922 = vmul.f32 %v1913, %v1919
      %v1923 = vmul.f32 %v1914, %v1919
      %v1925 = vlaneseq
      %v1926 = vshrl.u32 %v1925, 7
      %v1927 = vsub.s32 0, %v1926
      %v1928 = vrot.slane %v1875, %v1927
      %v1930 = vadd.f32 %v1921, %v1928
      %v1931 = vadd.f32 %v1922, %v1928
      %v1932 = vadd.f32 %v1923, %v1928
      %v1933 = vpack.c.bf16 %v1931, %v1930
      %v1934 = vpack.c.bf16 %v1932, %v1932
      %v1935 = vld [vmem:[%s17] sm:$0xf]
      %v1936 = vld [vmem:[%s17 + $0x4] sm:$0xf]
      %v1937 = vld [vmem:[%s17 + $0x8] sm:$0xf]
      %v1938 = vld [vmem:[%s17 + $0xc] sm:$0xf]
      %v1939 = vld [vmem:[%s18] sm:$0x1]
      %v1941 = vlaneseq
      %v1942 = vshrl.u32 %v1941, 7
      %v1943 = vsub.s32 0, %v1942
      %v1944 = vrot.slane %v1939, %v1943
      %v1950 = vunpack.c.l.b16 %v1935
      %v1951 = vunpack.c.l.b16 %v1936
      %v1952 = vunpack.c.l.b16 %v1937
      %v1953 = vunpack.c.l.b16 %v1938
      %v1954 = vpack.c.b16 %v1951, %v1950
      %v1955 = vpack.c.b16 %v1953, %v1952
      %v1959 = vsel %vm842, %v1933, 0
      %v1962 = vsel %vm842, %v1934, 0
      %1964 = vmatprep.subr.bf16.mxu0 0
      %1965 = vmatpush1.bf16.msra.mxu0 %v1954
      %1966 = vmatprep.subr.bf16.mxu0 0
      %1967 = vmatpush1.bf16.msra.mxu0 %v1955
      %1968 = vmatprep.subr.bf16.mxu0 0
      %1969 = vmatpush1.bf16.msra.mxu0 0
      %1970 = vmatprep.subr.bf16.mxu0 0
      %1971 = vmatpush1.bf16.msra.mxu0 0
      %1972 = vmatprep.subr.bf16.mxu0 0
      %1973 = vmatpush1.bf16.msra.mxu0 0
      %1974 = vmatprep.subr.bf16.mxu0 0
      %1975 = vmatpush1.bf16.msra.mxu0 0
      %1976 = vmatprep.subr.bf16.mxu0 0
      %1977 = vmatpush1.bf16.msra.mxu0 0
      %1978 = vmatprep.subr.bf16.mxu0 0
      %1979 = vmatpush1.bf16.msra.mxu0 0
      %1980 = vmatprep.subr.bf16.mxu0 0
      %1981 = vmatpush1.bf16.msra.mxu0 0
      %1982 = vmatprep.subr.bf16.mxu0 0
      %1983 = vmatpush1.bf16.msra.mxu0 0
      %1984 = vmatprep.subr.bf16.mxu0 0
      %1985 = vmatpush1.bf16.msra.mxu0 0
      %1986 = vmatprep.subr.bf16.mxu0 0
      %1987 = vmatpush1.bf16.msra.mxu0 0
      %1988 = vmatprep.subr.bf16.mxu0 0
      %1989 = vmatpush1.bf16.msra.mxu0 0
      %1990 = vmatprep.subr.bf16.mxu0 0
      %1991 = vmatpush1.bf16.msra.mxu0 0
      %1992 = vmatprep.subr.bf16.mxu0 0
      %1993 = vmatpush1.bf16.msra.mxu0 0
      %1994 = vmatprep.subr.bf16.mxu0 0
      %1995 = vmatpush1.bf16.msra.mxu0 0
      %1996 = vmatprep.mubr.bf16.mxu0 0
      %1997 = vmatmul.mubr.bf16.gmra.mrb[0].mxu0 %v1959
      %v1998 = vpop.f32.mrb[0].mxu0
      %v1999 = vadd.f32 %v1944, %v1998
      %v2000 = vpop.f32.mrb[0].mxu0
      %v2001 = vpop.f32.mrb[0].mxu0
      %v2002 = vadd.f32 %v1944, %v2001
      %v2003 = vpop.f32.mrb[0].mxu0
      %2004 = vmatprep.mubr.bf16.mxu0 0
      %2005 = vmatmul.mubr.bf16.gmra.mrb[0].mxu0 %v1962
      %v2006 = vpop.f32.mrb[0].mxu0
      %v2007 = vadd.f32 %v1944, %v2006
      %v2008 = vpop.f32.mrb[0].mxu0
      %v2009 = vpop.f32.mrb[0].mxu0
      %v2010 = vpop.f32.mrb[0].mxu0
      %2011 = vdwg.mxu0
      %v2012 = vmul.f32 %v1999, 0.5
      %v2013 = vmul.f32 %v2002, 0.5
      %v2014 = vmul.f32 %v2007, 0.5
      %v2015 = vmul.f32 %v1999, 0.044715
      %v2016 = vmul.f32 %v2002, 0.044715
      %v2017 = vmul.f32 %v2007, 0.044715
      %v2018 = vmul.f32 %v2015, %v1999
      %v2019 = vmul.f32 %v2016, %v2002
      %v2020 = vmul.f32 %v2017, %v2007
      %v2021 = vmul.f32 %v2018, %v1999
      %v2022 = vmul.f32 %v2019, %v2002
      %v2023 = vmul.f32 %v2020, %v2007
      %v2024 = vadd.f32 %v1999, %v2021
      %v2025 = vadd.f32 %v2002, %v2022
      %v2026 = vadd.f32 %v2007, %v2023
      %v2027 = vmul.f32 %v2024, 0.7978846
      %v2028 = vmul.f32 %v2025, 0.7978846
      %v2029 = vmul.f32 %v2026, 0.7978846
      %v2030 = vtanh.pop %v2027
      %v2031 = vtanh.pop %v2028
      %v2032 = vtanh.pop %v2029
      %v2033 = vadd.f32 %v2030, 1.0
      %v2034 = vadd.f32 %v2031, 1.0
      %v2035 = vadd.f32 %v2032, 1.0
      %v2036 = vmul.f32 %v2012, %v2033
      %v2037 = vmul.f32 %v2013, %v2034
      %v2038 = vmul.f32 %v2014, %v2035
      %v2039 = vpack.c.bf16 %v2037, %v2036
      %v2040 = vpack.c.bf16 %v2038, %v2038
      %v2041 = vld [vmem:[%s19] sm:$0xf]
      %v2042 = vld [vmem:[%s19 + $0x4] sm:$0xf]
      %v2043 = vld [vmem:[%s19 + $0x8] sm:$0xf]
      %v2044 = vld [vmem:[%s19 + $0xc] sm:$0xf]
      %v2045 = vld [vmem:[%s19 + $0x10] sm:$0xf]
      %v2046 = vld [vmem:[%s19 + $0x14] sm:$0xf]
      %v2047 = vld [vmem:[%s19 + $0x18] sm:$0xf]
      %v2048 = vld [vmem:[%s19 + $0x1c] sm:$0xf]
      %v2049 = vld [vmem:[%s19 + $0x20] sm:$0xf]
      %v2050 = vld [vmem:[%s19 + $0x24] sm:$0xf]
      %v2051 = vld [vmem:[%s19 + $0x28] sm:$0xf]
      %v2052 = vld [vmem:[%s19 + $0x2c] sm:$0xf]
      %v2053 = vld [vmem:[%s19 + $0x30] sm:$0xf]
      %v2054 = vld [vmem:[%s19 + $0x34] sm:$0xf]
      %v2055 = vld [vmem:[%s19 + $0x38] sm:$0xf]
      %v2056 = vld [vmem:[%s19 + $0x3c] sm:$0xf]
      %v2057 = vld [vmem:[%s20] sm:$0x1]
      %v2059 = vlaneseq
      %v2060 = vshrl.u32 %v2059, 7
      %v2061 = vsub.s32 0, %v2060
      %v2062 = vrot.slane %v2057, %v2061
      %v2080 = vunpack.c.l.b16 %v2041
      %v2081 = vunpack.c.l.b16 %v2042
      %v2082 = vunpack.c.l.b16 %v2043
      %v2083 = vunpack.c.l.b16 %v2044
      %v2084 = vunpack.c.l.b16 %v2045
      %v2085 = vunpack.c.l.b16 %v2046
      %v2086 = vunpack.c.l.b16 %v2047
      %v2087 = vunpack.c.l.b16 %v2048
      %v2088 = vunpack.c.l.b16 %v2049
      %v2089 = vunpack.c.l.b16 %v2050
      %v2090 = vunpack.c.l.b16 %v2051
      %v2091 = vunpack.c.l.b16 %v2052
      %v2092 = vunpack.c.l.b16 %v2053
      %v2093 = vunpack.c.l.b16 %v2054
      %v2094 = vunpack.c.l.b16 %v2055
      %v2095 = vunpack.c.l.b16 %v2056
      %v2096 = vpack.c.b16 %v2081, %v2080
      %v2097 = vpack.c.b16 %v2083, %v2082
      %v2098 = vpack.c.b16 %v2085, %v2084
      %v2099 = vpack.c.b16 %v2087, %v2086
      %v2100 = vpack.c.b16 %v2089, %v2088
      %v2101 = vpack.c.b16 %v2091, %v2090
      %v2102 = vpack.c.b16 %v2093, %v2092
      %v2103 = vpack.c.b16 %v2095, %v2094
      %2112 = vmatprep.subr.bf16.mxu0 0
      %2113 = vmatpush1.bf16.msra.mxu0 %v2096
      %2114 = vmatprep.subr.bf16.mxu0 0
      %2115 = vmatpush1.bf16.msra.mxu0 %v2097
      %2116 = vmatprep.subr.bf16.mxu0 0
      %2117 = vmatpush1.bf16.msra.mxu0 %v2098
      %2118 = vmatprep.subr.bf16.mxu0 0
      %2119 = vmatpush1.bf16.msra.mxu0 %v2099
      %2120 = vmatprep.subr.bf16.mxu0 0
      %2121 = vmatpush1.bf16.msra.mxu0 %v2100
      %2122 = vmatprep.subr.bf16.mxu0 0
      %2123 = vmatpush1.bf16.msra.mxu0 %v2101
      %2124 = vmatprep.subr.bf16.mxu0 0
      %2125 = vmatpush1.bf16.msra.mxu0 %v2102
      %2126 = vmatprep.subr.bf16.mxu0 0
      %2127 = vmatpush1.bf16.msra.mxu0 %v2103
      %2128 = vmatprep.subr.bf16.mxu0 0
      %2129 = vmatpush1.bf16.msra.mxu0 0
      %2130 = vmatprep.subr.bf16.mxu0 0
      %2131 = vmatpush1.bf16.msra.mxu0 0
      %2132 = vmatprep.subr.bf16.mxu0 0
      %2133 = vmatpush1.bf16.msra.mxu0 0
      %2134 = vmatprep.subr.bf16.mxu0 0
      %2135 = vmatpush1.bf16.msra.mxu0 0
      %2136 = vmatprep.subr.bf16.mxu0 0
      %2137 = vmatpush1.bf16.msra.mxu0 0
      %2138 = vmatprep.subr.bf16.mxu0 0
      %2139 = vmatpush1.bf16.msra.mxu0 0
      %2140 = vmatprep.subr.bf16.mxu0 0
      %2141 = vmatpush1.bf16.msra.mxu0 0
      %2142 = vmatprep.subr.bf16.mxu0 0
      %2143 = vmatpush1.bf16.msra.mxu0 0
      %2144 = vmatprep.mubr.bf16.mxu0 0
      %2145 = vmatmul.mubr.bf16.gmra.mrb[0].mxu0 %v2039
      %v2146 = vpop.f32.mrb[0].mxu0
      %v2147 = vadd.f32 %v2062, %v2146
      %v2148 = vpop.f32.mrb[0].mxu0
      %v2149 = vpop.f32.mrb[0].mxu0
      %v2150 = vadd.f32 %v2062, %v2149
      %v2151 = vpop.f32.mrb[0].mxu0
      %2152 = vmatprep.mubr.bf16.mxu0 0
      %2153 = vmatmul.mubr.bf16.gmra.mrb[0].mxu0 %v2040
      %v2154 = vpop.f32.mrb[0].mxu0
      %v2155 = vadd.f32 %v2062, %v2154
      %v2156 = vpop.f32.mrb[0].mxu0
      %v2157 = vpop.f32.mrb[0].mxu0
      %v2158 = vpop.f32.mrb[0].mxu0
      %2159 = vdwg.mxu0
      %v2160 = vld [vmem:[%s21] sm:$0x1]
      %v2162 = vlaneseq
      %v2163 = vshrl.u32 %v2162, 7
      %v2164 = vsub.s32 0, %v2163
      %v2165 = vrot.slane %v2160, %v2164
      %v2167 = vmul.f32 %v2165, %v2147
      %v2168 = vmul.f32 %v2165, %v2150
      %v2169 = vmul.f32 %v2165, %v2155
      %v2170 = vadd.f32 %v1871, %v2167
      %v2171 = vadd.f32 %v1872, %v2168
      %v2172 = vadd.f32 %v1873, %v2169
      %s2173 = scalar_lea.vmem %s4, 1
      %v2174 = vld [vmem:[%s2173] sm:$0x1]
      %s2175 = scalar_lea.vmem %s5, 1
      %v2176 = vld [vmem:[%s2175] sm:$0x1]
      %v2177 = vsel %vm842, %v2170, 0.0
      %2178 = vadd.xlane.f32.xlu0 %v2177
      %v2179 = vpop.xlane.xlu0 %2178
      %v2180 = vsel %vm842, %v2171, 0.0
      %2181 = vadd.xlane.f32.xlu0 %v2180
      %v2182 = vpop.xlane.xlu0 %2181
      %v2183 = vsel %vm842, %v2172, 0.0
      %2184 = vadd.xlane.f32.xlu0 %v2183
      %v2185 = vpop.xlane.xlu0 %2184
      %v2186 = vmul.f32 %v2179, %v852
      %v2187 = vmul.f32 %v2182, %v852
      %v2188 = vmul.f32 %v2185, %v852
      %v2189 = vsub.f32 %v2170, %v2186
      %v2190 = vsub.f32 %v2171, %v2187
      %v2191 = vsub.f32 %v2172, %v2188
      %v2192 = vmul.f32 %v2189, %v2189
      %v2193 = vmul.f32 %v2190, %v2190
      %v2194 = vmul.f32 %v2191, %v2191
      %v2195 = vsel %vm842, %v2192, 0.0
      %2196 = vadd.xlane.f32.xlu0 %v2195
      %v2197 = vpop.xlane.xlu0 %2196
      %v2198 = vsel %vm842, %v2193, 0.0
      %2199 = vadd.xlane.f32.xlu0 %v2198
      %v2200 = vpop.xlane.xlu0 %2199
      %v2201 = vsel %vm842, %v2194, 0.0
      %2202 = vadd.xlane.f32.xlu0 %v2201
      %v2203 = vpop.xlane.xlu0 %2202
      %v2204 = vmul.f32 %v2197, %v852
      %v2205 = vmul.f32 %v2200, %v852
      %v2206 = vmul.f32 %v2203, %v852
      %v2207 = vadd.f32 %v2204, 1e-06
      %v2208 = vadd.f32 %v2205, 1e-06
      %v2209 = vadd.f32 %v2206, 1e-06
      %v2210 = vrsqrt.pop %v2207
      %v2211 = vrsqrt.pop %v2208
      %v2212 = vrsqrt.pop %v2209
      %v2213 = vmul.f32 %v2189, %v2210
      %v2214 = vmul.f32 %v2190, %v2211
      %v2215 = vmul.f32 %v2191, %v2212
      %v2217 = vlaneseq
      %v2218 = vshrl.u32 %v2217, 7
      %v2219 = vsub.s32 0, %v2218
      %v2220 = vrot.slane %v2174, %v2219
      %v2222 = vmul.f32 %v2213, %v2220
      %v2223 = vmul.f32 %v2214, %v2220
      %v2224 = vmul.f32 %v2215, %v2220
      %v2226 = vlaneseq
      %v2227 = vshrl.u32 %v2226, 7
      %v2228 = vsub.s32 0, %v2227
      %v2229 = vrot.slane %v2176, %v2228
      %v2231 = vadd.f32 %v2222, %v2229
      %v2232 = vadd.f32 %v2223, %v2229
      %v2233 = vadd.f32 %v2224, %v2229
      %v2234 = vpack.c.bf16 %v2232, %v2231
      %v2235 = vpack.c.bf16 %v2233, %v2233
      %s2236 = scalar_lea.vmem %s6, 32
      %v2237 = vld [vmem:[%s2236] sm:$0xf]
      %v2238 = vld [vmem:[%s2236 + $0x4] sm:$0xf]
      %v2239 = vld [vmem:[%s2236 + $0x8] sm:$0xf]
      %v2240 = vld [vmem:[%s2236 + $0xc] sm:$0xf]
      %s2241 = scalar_lea.vmem %s7, 2
      %v2242 = vld [vmem:[%s2241] sm:$0x1]
      %v2244 = vlaneseq
      %v2245 = vshrl.u32 %v2244, 7
      %v2246 = vsub.s32 0, %v2245
      %v2247 = vrot.slane %v2242, %v2246
      %v2253 = vunpack.c.l.b16 %v2237
      %v2254 = vunpack.c.l.b16 %v2238
      %v2255 = vunpack.c.l.b16 %v2239
      %v2256 = vunpack.c.l.b16 %v2240
      %v2257 = vpack.c.b16 %v2254, %v2253
      %v2258 = vpack.c.b16 %v2256, %v2255
      %v2262 = vsel %vm842, %v2234, 0
      %v2265 = vsel %vm842, %v2235, 0
      %2267 = vmatprep.subr.bf16.mxu0 0
      %2268 = vmatpush1.bf16.msra.mxu0 %v2257
      %2269 = vmatprep.subr.bf16.mxu0 0
      %2270 = vmatpush1.bf16.msra.mxu0 %v2258
      %2271 = vmatprep.subr.bf16.mxu0 0
      %2272 = vmatpush1.bf16.msra.mxu0 0
      %2273 = vmatprep.subr.bf16.mxu0 0
      %2274 = vmatpush1.bf16.msra.mxu0 0
      %2275 = vmatprep.subr.bf16.mxu0 0
      %2276 = vmatpush1.bf16.msra.mxu0 0
      %2277 = vmatprep.subr.bf16.mxu0 0
      %2278 = vmatpush1.bf16.msra.mxu0 0
      %2279 = vmatprep.subr.bf16.mxu0 0
      %2280 = vmatpush1.bf16.msra.mxu0 0
      %2281 = vmatprep.subr.bf16.mxu0 0
      %2282 = vmatpush1.bf16.msra.mxu0 0
      %2283 = vmatprep.subr.bf16.mxu0 0
      %2284 = vmatpush1.bf16.msra.mxu0 0
      %2285 = vmatprep.subr.bf16.mxu0 0
      %2286 = vmatpush1.bf16.msra.mxu0 0
      %2287 = vmatprep.subr.bf16.mxu0 0
      %2288 = vmatpush1.bf16.msra.mxu0 0
      %2289 = vmatprep.subr.bf16.mxu0 0
      %2290 = vmatpush1.bf16.msra.mxu0 0
      %2291 = vmatprep.subr.bf16.mxu0 0
      %2292 = vmatpush1.bf16.msra.mxu0 0
      %2293 = vmatprep.subr.bf16.mxu0 0
      %2294 = vmatpush1.bf16.msra.mxu0 0
      %2295 = vmatprep.subr.bf16.mxu0 0
      %2296 = vmatpush1.bf16.msra.mxu0 0
      %2297 = vmatprep.subr.bf16.mxu0 0
      %2298 = vmatpush1.bf16.msra.mxu0 0
      %2299 = vmatprep.mubr.bf16.mxu0 0
      %2300 = vmatmul.mubr.bf16.gmra.mrb[0].mxu0 %v2262
      %v2301 = vpop.f32.mrb[0].mxu0
      %v2302 = vadd.f32 %v2247, %v2301
      %v2303 = vpop.f32.mrb[0].mxu0
      %v2304 = vpop.f32.mrb[0].mxu0
      %v2305 = vadd.f32 %v2247, %v2304
      %v2306 = vpop.f32.mrb[0].mxu0
      %2307 = vmatprep.mubr.bf16.mxu0 0
      %2308 = vmatmul.mubr.bf16.gmra.mrb[0].mxu0 %v2265
      %v2309 = vpop.f32.mrb[0].mxu0
      %v2310 = vadd.f32 %v2247, %v2309
      %v2311 = vpop.f32.mrb[0].mxu0
      %v2312 = vpop.f32.mrb[0].mxu0
      %v2313 = vpop.f32.mrb[0].mxu0
      %2314 = vdwg.mxu0
      %s2315 = scalar_lea.vmem %s8, 32
      %v2316 = vld [vmem:[%s2315] sm:$0xf]
      %v2317 = vld [vmem:[%s2315 + $0x4] sm:$0xf]
      %v2318 = vld [vmem:[%s2315 + $0x8] sm:$0xf]
      %v2319 = vld [vmem:[%s2315 + $0xc] sm:$0xf]
      %s2320 = scalar_lea.vmem %s9, 2
      %v2321 = vld [vmem:[%s2320] sm:$0x1]
      %v2323 = vlaneseq
      %v2324 = vshrl.u32 %v2323, 7
      %v2325 = vsub.s32 0, %v2324
      %v2326 = vrot.slane %v2321, %v2325
      %v2332 = vunpack.c.l.b16 %v2316
      %v2333 = vunpack.c.l.b16 %v2317
      %v2334 = vunpack.c.l.b16 %v2318
      %v2335 = vunpack.c.l.b16 %v2319
      %v2336 = vpack.c.b16 %v2333, %v2332
      %v2337 = vpack.c.b16 %v2335, %v2334
      %2340 = vmatprep.subr.bf16.mxu0 0
      %2341 = vmatpush1.bf16.msra.mxu0 %v2336
      %2342 = vmatprep.subr.bf16.mxu0 0
      %2343 = vmatpush1.bf16.msra.mxu0 %v2337
      %2344 = vmatprep.subr.bf16.mxu0 0
      %2345 = vmatpush1.bf16.msra.mxu0 0
      %2346 = vmatprep.subr.bf16.mxu0 0
      %2347 = vmatpush1.bf16.msra.mxu0 0
      %2348 = vmatprep.subr.bf16.mxu0 0
      %2349 = vmatpush1.bf16.msra.mxu0 0
      %2350 = vmatprep.subr.bf16.mxu0 0
      %2351 = vmatpush1.bf16.msra.mxu0 0
      %2352 = vmatprep.subr.bf16.mxu0 0
      %2353 = vmatpush1.bf16.msra.mxu0 0
      %2354 = vmatprep.subr.bf16.mxu0 0
      %2355 = vmatpush1.bf16.msra.mxu0 0
      %2356 = vmatprep.subr.bf16.mxu0 0
      %2357 = vmatpush1.bf16.msra.mxu0 0
      %2358 = vmatprep.subr.bf16.mxu0 0
      %2359 = vmatpush1.bf16.msra.mxu0 0
      %2360 = vmatprep.subr.bf16.mxu0 0
      %2361 = vmatpush1.bf16.msra.mxu0 0
      %2362 = vmatprep.subr.bf16.mxu0 0
      %2363 = vmatpush1.bf16.msra.mxu0 0
      %2364 = vmatprep.subr.bf16.mxu0 0
      %2365 = vmatpush1.bf16.msra.mxu0 0
      %2366 = vmatprep.subr.bf16.mxu0 0
      %2367 = vmatpush1.bf16.msra.mxu0 0
      %2368 = vmatprep.subr.bf16.mxu0 0
      %2369 = vmatpush1.bf16.msra.mxu0 0
      %2370 = vmatprep.subr.bf16.mxu0 0
      %2371 = vmatpush1.bf16.msra.mxu0 0
      %2372 = vmatprep.mubr.bf16.mxu0 0
      %2373 = vmatmul.mubr.bf16.gmra.mrb[0].mxu0 %v2262
      %v2374 = vpop.f32.mrb[0].mxu0
      %v2375 = vadd.f32 %v2326, %v2374
      %v2376 = vpop.f32.mrb[0].mxu0
      %v2377 = vpop.f32.mrb[0].mxu0
      %v2378 = vadd.f32 %v2326, %v2377
      %v2379 = vpop.f32.mrb[0].mxu0
      %2380 = vmatprep.mubr.bf16.mxu0 0
      %2381 = vmatmul.mubr.bf16.gmra.mrb[0].mxu0 %v2265
      %v2382 = vpop.f32.mrb[0].mxu0
      %v2383 = vadd.f32 %v2326, %v2382
      %v2384 = vpop.f32.mrb[0].mxu0
      %v2385 = vpop.f32.mrb[0].mxu0
      %v2386 = vpop.f32.mrb[0].mxu0
      %2387 = vdwg.mxu0
      %s2388 = scalar_lea.vmem %s10, 32
      %v2389 = vld [vmem:[%s2388] sm:$0xf]
      %v2390 = vld [vmem:[%s2388 + $0x4] sm:$0xf]
      %v2391 = vld [vmem:[%s2388 + $0x8] sm:$0xf]
      %v2392 = vld [vmem:[%s2388 + $0xc] sm:$0xf]
      %s2393 = scalar_lea.vmem %s11, 2
      %v2394 = vld [vmem:[%s2393] sm:$0x1]
      %v2396 = vlaneseq
      %v2397 = vshrl.u32 %v2396, 7
      %v2398 = vsub.s32 0, %v2397
      %v2399 = vrot.slane %v2394, %v2398
      %v2405 = vunpack.c.l.b16 %v2389
      %v2406 = vunpack.c.l.b16 %v2390
      %v2407 = vunpack.c.l.b16 %v2391
      %v2408 = vunpack.c.l.b16 %v2392
      %v2409 = vpack.c.b16 %v2406, %v2405
      %v2410 = vpack.c.b16 %v2408, %v2407
      %2413 = vmatprep.subr.bf16.mxu0 0
      %2414 = vmatpush1.bf16.msra.mxu0 %v2409
      %2415 = vmatprep.subr.bf16.mxu0 0
      %2416 = vmatpush1.bf16.msra.mxu0 %v2410
      %2417 = vmatprep.subr.bf16.mxu0 0
      %2418 = vmatpush1.bf16.msra.mxu0 0
      %2419 = vmatprep.subr.bf16.mxu0 0
      %2420 = vmatpush1.bf16.msra.mxu0 0
      %2421 = vmatprep.subr.bf16.mxu0 0
      %2422 = vmatpush1.bf16.msra.mxu0 0
      %2423 = vmatprep.subr.bf16.mxu0 0
      %2424 = vmatpush1.bf16.msra.mxu0 0
      %2425 = vmatprep.subr.bf16.mxu0 0
      %2426 = vmatpush1.bf16.msra.mxu0 0
      %2427 = vmatprep.subr.bf16.mxu0 0
      %2428 = vmatpush1.bf16.msra.mxu0 0
      %2429 = vmatprep.subr.bf16.mxu0 0
      %2430 = vmatpush1.bf16.msra.mxu0 0
      %2431 = vmatprep.subr.bf16.mxu0 0
      %2432 = vmatpush1.bf16.msra.mxu0 0
      %2433 = vmatprep.subr.bf16.mxu0 0
      %2434 = vmatpush1.bf16.msra.mxu0 0
      %2435 = vmatprep.subr.bf16.mxu0 0
      %2436 = vmatpush1.bf16.msra.mxu0 0
      %2437 = vmatprep.subr.bf16.mxu0 0
      %2438 = vmatpush1.bf16.msra.mxu0 0
      %2439 = vmatprep.subr.bf16.mxu0 0
      %2440 = vmatpush1.bf16.msra.mxu0 0
      %2441 = vmatprep.subr.bf16.mxu0 0
      %2442 = vmatpush1.bf16.msra.mxu0 0
      %2443 = vmatprep.subr.bf16.mxu0 0
      %2444 = vmatpush1.bf16.msra.mxu0 0
      %2445 = vmatprep.mubr.bf16.mxu0 0
      %2446 = vmatmul.mubr.bf16.gmra.mrb[0].mxu0 %v2262
      %v2447 = vpop.f32.mrb[0].mxu0
      %v2448 = vadd.f32 %v2399, %v2447
      %v2449 = vpop.f32.mrb[0].mxu0
      %v2450 = vpop.f32.mrb[0].mxu0
      %v2451 = vadd.f32 %v2399, %v2450
      %v2452 = vpop.f32.mrb[0].mxu0
      %2453 = vmatprep.mubr.bf16.mxu0 0
      %2454 = vmatmul.mubr.bf16.gmra.mrb[0].mxu0 %v2265
      %v2455 = vpop.f32.mrb[0].mxu0
      %v2456 = vadd.f32 %v2399, %v2455
      %v2457 = vpop.f32.mrb[0].mxu0
      %v2458 = vpop.f32.mrb[0].mxu0
      %v2459 = vpop.f32.mrb[0].mxu0
      %2460 = vdwg.mxu0
      %v2461 = vpack.c.bf16 %v2305, %v2302
      %v2462 = vpack.c.bf16 %v2310, %v2310
      %2463 = vxpose.xlu0.b32.start [1/16] %v2375, 128
      %2464 = vxpose.xlu0.b32.cont [2/16] %v2378, 128
      %2465 = vxpose.xlu0.b32.cont [3/16] %v2383, 128
      %2466 = vxpose.xlu0.b32.cont [4/16] 0.0, 128
      %2467 = vxpose.xlu0.b32.cont [5/16] 0.0, 128
      %2468 = vxpose.xlu0.b32.cont [6/16] 0.0, 128
      %2469 = vxpose.xlu0.b32.cont [7/16] 0.0, 128
      %2470 = vxpose.xlu0.b32.cont [8/16] 0.0, 128
      %2471 = vxpose.xlu0.b32.cont [9/16] 0.0, 128
      %2472 = vxpose.xlu0.b32.cont [10/16] 0.0, 128
      %2473 = vxpose.xlu0.b32.cont [11/16] 0.0, 128
      %2474 = vxpose.xlu0.b32.cont [12/16] 0.0, 128
      %2475 = vxpose.xlu0.b32.cont [13/16] 0.0, 128
      %2476 = vxpose.xlu0.b32.cont [14/16] 0.0, 128
      %2477 = vxpose.xlu0.b32.cont [15/16] 0.0, 128
      %2478 = vxpose.xlu0.b32.end [16/16] 0.0, 128
      %v2479 = vpop.trf.xlu0
      %v2480 = vpop.trf.xlu0
      %v2481 = vpop.trf.xlu0
      %v2482 = vpop.trf.xlu0
      %v2483 = vpop.trf.xlu0
      %v2484 = vpop.trf.xlu0
      %v2485 = vpop.trf.xlu0
      %v2486 = vpop.trf.xlu0
      %v2487 = vpop.trf.xlu0
      %v2488 = vpop.trf.xlu0
      %v2489 = vpop.trf.xlu0
      %v2490 = vpop.trf.xlu0
      %v2491 = vpop.trf.xlu0
      %v2492 = vpop.trf.xlu0
      %v2493 = vpop.trf.xlu0
      %v2494 = vpop.trf.xlu0
      %v2495 = vpack.c.bf16 %v2480, %v2479
      %v2497 = vsel %vm1157, %v2461, 0
      %v2500 = vsel %vm1157, %v2462, 0
      %2502 = vmatprep.subr.bf16.mxu0 0
      %2503 = vmatpush1.bf16.msra.mxu0 %v2495
      %2504 = vmatprep.subr.bf16.mxu0 0
      %2505 = vmatpush1.bf16.msra.mxu0 0
      %2506 = vmatprep.subr.bf16.mxu0 0
      %2507 = vmatpush1.bf16.msra.mxu0 0
      %2508 = vmatprep.subr.bf16.mxu0 0
      %2509 = vmatpush1.bf16.msra.mxu0 0
      %2510 = vmatprep.subr.bf16.mxu0 0
      %2511 = vmatpush1.bf16.msra.mxu0 0
      %2512 = vmatprep.subr.bf16.mxu0 0
      %2513 = vmatpush1.bf16.msra.mxu0 0
      %2514 = vmatprep.subr.bf16.mxu0 0
      %2515 = vmatpush1.bf16.msra.mxu0 0
      %2516 = vmatprep.subr.bf16.mxu0 0
      %2517 = vmatpush1.bf16.msra.mxu0 0
      %2518 = vmatprep.subr.bf16.mxu0 0
      %2519 = vmatpush1.bf16.msra.mxu0 0
      %2520 = vmatprep.subr.bf16.mxu0 0
      %2521 = vmatpush1.bf16.msra.mxu0 0
      %2522 = vmatprep.subr.bf16.mxu0 0
      %2523 = vmatpush1.bf16.msra.mxu0 0
      %2524 = vmatprep.subr.bf16.mxu0 0
      %2525 = vmatpush1.bf16.msra.mxu0 0
      %2526 = vmatprep.subr.bf16.mxu0 0
      %2527 = vmatpush1.bf16.msra.mxu0 0
      %2528 = vmatprep.subr.bf16.mxu0 0
      %2529 = vmatpush1.bf16.msra.mxu0 0
      %2530 = vmatprep.subr.bf16.mxu0 0
      %2531 = vmatpush1.bf16.msra.mxu0 0
      %2532 = vmatprep.subr.bf16.mxu0 0
      %2533 = vmatpush1.bf16.msra.mxu0 0
      %2534 = vmatprep.mubr.bf16.mxu0 0
      %2535 = vmatmul.mubr.bf16.gmra.mrb[0].mxu0 %v2497
      %v2536 = vpop.f32.mrb[0].mxu0
      %v2537 = vadd.f32 0.0, %v2536
      %v2538 = vpop.f32.mrb[0].mxu0
      %v2539 = vpop.f32.mrb[0].mxu0
      %v2540 = vadd.f32 0.0, %v2539
      %v2541 = vpop.f32.mrb[0].mxu0
      %2542 = vmatprep.mubr.bf16.mxu0 0
      %2543 = vmatmul.mubr.bf16.gmra.mrb[0].mxu0 %v2500
      %v2544 = vpop.f32.mrb[0].mxu0
      %v2545 = vadd.f32 0.0, %v2544
      %v2546 = vpop.f32.mrb[0].mxu0
      %v2547 = vpop.f32.mrb[0].mxu0
      %v2548 = vpop.f32.mrb[0].mxu0
      %2549 = vdwg.mxu0
      %v2550 = vmul.f32 %v2537, 0.25
      %v2551 = vmul.f32 %v2540, 0.25
      %v2552 = vmul.f32 %v2545, 0.25
      %v2553 = vadd.f32 %v2550, %v839
      %v2554 = vadd.f32 %v2551, %v839
      %v2555 = vadd.f32 %v2552, %v839
      %v2556 = vsel %vm1218, %v2553, -inf
      %2557 = vmax.xlane.f32.xlu0 %v2556
      %v2558 = vpop.xlane.xlu0 %2557
      %v2559 = vsel %vm1218, %v2554, -inf
      %2560 = vmax.xlane.f32.xlu0 %v2559
      %v2561 = vpop.xlane.xlu0 %2560
      %v2562 = vsel %vm1218, %v2555, -inf
      %2563 = vmax.xlane.f32.xlu0 %v2562
      %v2564 = vpop.xlane.xlu0 %2563
      %v2565 = vsub.f32 %v2553, %v2558
      %v2566 = vsub.f32 %v2554, %v2561
      %v2567 = vsub.f32 %v2555, %v2564
      %v2568 = vmul.f32 %v2565, 1.442695
      %v2569 = vpow.pop %v2568
      %v2570 = vmul.f32 %v2566, 1.442695
      %v2571 = vpow.pop %v2570
      %v2572 = vmul.f32 %v2567, 1.442695
      %v2573 = vpow.pop %v2572
      %v2574 = vsel %vm1218, %v2569, 0.0
      %2575 = vadd.xlane.f32.xlu0 %v2574
      %v2576 = vpop.xlane.xlu0 %2575
      %v2577 = vsel %vm1218, %v2571, 0.0
      %2578 = vadd.xlane.f32.xlu0 %v2577
      %v2579 = vpop.xlane.xlu0 %2578
      %v2580 = vsel %vm1218, %v2573, 0.0
      %2581 = vadd.xlane.f32.xlu0 %v2580
      %v2582 = vpop.xlane.xlu0 %2581
      %v2583 = vrcp.pop %v2576
      %v2584 = vrcp.pop %v2579
      %v2585 = vrcp.pop %v2582
      %v2586 = vmul.f32 %v2569, %v2583
      %v2587 = vmul.f32 %v2571, %v2584
      %v2588 = vmul.f32 %v2573, %v2585
      %v2589 = vpack.c.bf16 %v2587, %v2586
      %v2590 = vpack.c.bf16 %v2588, %v2588
      %v2591 = vpack.c.bf16 %v2451, %v2448
      %v2592 = vpack.c.bf16 %v2456, %v2456
      %v2594 = vsel %vm1218, %v2589, 0
      %v2597 = vsel %vm1218, %v2590, 0
      %v2600 = vsel %vm1262, %v2592, 0
      %2602 = vmatprep.subr.bf16.mxu0 0
      %2603 = vmatpush1.bf16.msra.mxu0 %v2591
      %2604 = vmatprep.subr.bf16.mxu0 0
      %2605 = vmatpush1.bf16.msra.mxu0 %v2600
      %2606 = vmatprep.subr.bf16.mxu0 0
      %2607 = vmatpush1.bf16.msra.mxu0 0
      %2608 = vmatprep.subr.bf16.mxu0 0
      %2609 = vmatpush1.bf16.msra.mxu0 0
      %2610 = vmatprep.subr.bf16.mxu0 0
      %2611 = vmatpush1.bf16.msra.mxu0 0
      %2612 = vmatprep.subr.bf16.mxu0 0
      %2613 = vmatpush1.bf16.msra.mxu0 0
      %2614 = vmatprep.subr.bf16.mxu0 0
      %2615 = vmatpush1.bf16.msra.mxu0 0
      %2616 = vmatprep.subr.bf16.mxu0 0
      %2617 = vmatpush1.bf16.msra.mxu0 0
      %2618 = vmatprep.subr.bf16.mxu0 0
      %2619 = vmatpush1.bf16.msra.mxu0 0
      %2620 = vmatprep.subr.bf16.mxu0 0
      %2621 = vmatpush1.bf16.msra.mxu0 0
      %2622 = vmatprep.subr.bf16.mxu0 0
      %2623 = vmatpush1.bf16.msra.mxu0 0
      %2624 = vmatprep.subr.bf16.mxu0 0
      %2625 = vmatpush1.bf16.msra.mxu0 0
      %2626 = vmatprep.subr.bf16.mxu0 0
      %2627 = vmatpush1.bf16.msra.mxu0 0
      %2628 = vmatprep.subr.bf16.mxu0 0
      %2629 = vmatpush1.bf16.msra.mxu0 0
      %2630 = vmatprep.subr.bf16.mxu0 0
      %2631 = vmatpush1.bf16.msra.mxu0 0
      %2632 = vmatprep.subr.bf16.mxu0 0
      %2633 = vmatpush1.bf16.msra.mxu0 0
      %2634 = vmatprep.mubr.bf16.mxu0 0
      %2635 = vmatmul.mubr.bf16.gmra.mrb[0].mxu0 %v2594
      %v2636 = vpop.f32.mrb[0].mxu0
      %v2637 = vadd.f32 0.0, %v2636
      %v2638 = vpop.f32.mrb[0].mxu0
      %v2639 = vpop.f32.mrb[0].mxu0
      %v2640 = vadd.f32 0.0, %v2639
      %v2641 = vpop.f32.mrb[0].mxu0
      %2642 = vmatprep.mubr.bf16.mxu0 0
      %2643 = vmatmul.mubr.bf16.gmra.mrb[0].mxu0 %v2597
      %v2644 = vpop.f32.mrb[0].mxu0
      %v2645 = vadd.f32 0.0, %v2644
      %v2646 = vpop.f32.mrb[0].mxu0
      %v2647 = vpop.f32.mrb[0].mxu0
      %v2648 = vpop.f32.mrb[0].mxu0
      %2649 = vdwg.mxu0
      %v2650 = vpack.c.bf16 %v2640, %v2637
      %v2651 = vpack.c.bf16 %v2645, %v2645
      %s2652 = scalar_lea.vmem %s12, 16
      %v2653 = vld [vmem:[%s2652] sm:$0xf]
      %v2654 = vld [vmem:[%s2652 + $0x4] sm:$0xf]
      %s2655 = scalar_lea.vmem %s6, 48
      %v2656 = vld [vmem:[%s2655] sm:$0xf]
      %v2657 = vld [vmem:[%s2655 + $0x4] sm:$0xf]
      %v2658 = vld [vmem:[%s2655 + $0x8] sm:$0xf]
      %v2659 = vld [vmem:[%s2655 + $0xc] sm:$0xf]
      %s2660 = scalar_lea.vmem %s7, 3
      %v2661 = vld [vmem:[%s2660] sm:$0x1]
      %v2663 = vlaneseq
      %v2664 = vshrl.u32 %v2663, 7
      %v2665 = vsub.s32 0, %v2664
      %v2666 = vrot.slane %v2661, %v2665
      %v2672 = vunpack.c.l.b16 %v2656
      %v2673 = vunpack.c.l.b16 %v2657
      %v2674 = vunpack.c.l.b16 %v2658
      %v2675 = vunpack.c.l.b16 %v2659
      %v2676 = vpack.c.b16 %v2673, %v2672
      %v2677 = vpack.c.b16 %v2675, %v2674
      %2680 = vmatprep.subr.bf16.mxu0 0
      %2681 = vmatpush1.bf16.msra.mxu0 %v2676
      %2682 = vmatprep.subr.bf16.mxu0 0
      %2683 = vmatpush1.bf16.msra.mxu0 %v2677
      %2684 = vmatprep.subr.bf16.mxu0 0
      %2685 = vmatpush1.bf16.msra.mxu0 0
      %2686 = vmatprep.subr.bf16.mxu0 0
      %2687 = vmatpush1.bf16.msra.mxu0 0
      %2688 = vmatprep.subr.bf16.mxu0 0
      %2689 = vmatpush1.bf16.msra.mxu0 0
      %2690 = vmatprep.subr.bf16.mxu0 0
      %2691 = vmatpush1.bf16.msra.mxu0 0
      %2692 = vmatprep.subr.bf16.mxu0 0
      %2693 = vmatpush1.bf16.msra.mxu0 0
      %2694 = vmatprep.subr.bf16.mxu0 0
      %2695 = vmatpush1.bf16.msra.mxu0 0
      %2696 = vmatprep.subr.bf16.mxu0 0
      %2697 = vmatpush1.bf16.msra.mxu0 0
      %2698 = vmatprep.subr.bf16.mxu0 0
      %2699 = vmatpush1.bf16.msra.mxu0 0
      %2700 = vmatprep.subr.bf16.mxu0 0
      %2701 = vmatpush1.bf16.msra.mxu0 0
      %2702 = vmatprep.subr.bf16.mxu0 0
      %2703 = vmatpush1.bf16.msra.mxu0 0
      %2704 = vmatprep.subr.bf16.mxu0 0
      %2705 = vmatpush1.bf16.msra.mxu0 0
      %2706 = vmatprep.subr.bf16.mxu0 0
      %2707 = vmatpush1.bf16.msra.mxu0 0
      %2708 = vmatprep.subr.bf16.mxu0 0
      %2709 = vmatpush1.bf16.msra.mxu0 0
      %2710 = vmatprep.subr.bf16.mxu0 0
      %2711 = vmatpush1.bf16.msra.mxu0 0
      %2712 = vmatprep.mubr.bf16.mxu0 0
      %2713 = vmatmul.mubr.bf16.gmra.mrb[0].mxu0 %v2262
      %v2714 = vpop.f32.mrb[0].mxu0
      %v2715 = vadd.f32 %v2666, %v2714
      %v2716 = vpop.f32.mrb[0].mxu0
      %v2717 = vpop.f32.mrb[0].mxu0
      %v2718 = vadd.f32 %v2666, %v2717
      %v2719 = vpop.f32.mrb[0].mxu0
      %2720 = vmatprep.mubr.bf16.mxu0 0
      %2721 = vmatmul.mubr.bf16.gmra.mrb[0].mxu0 %v2265
      %v2722 = vpop.f32.mrb[0].mxu0
      %v2723 = vadd.f32 %v2666, %v2722
      %v2724 = vpop.f32.mrb[0].mxu0
      %v2725 = vpop.f32.mrb[0].mxu0
      %v2726 = vpop.f32.mrb[0].mxu0
      %2727 = vdwg.mxu0
      %s2728 = scalar_lea.vmem %s8, 48
      %v2729 = vld [vmem:[%s2728] sm:$0xf]
      %v2730 = vld [vmem:[%s2728 + $0x4] sm:$0xf]
      %v2731 = vld [vmem:[%s2728 + $0x8] sm:$0xf]
      %v2732 = vld [vmem:[%s2728 + $0xc] sm:$0xf]
      %s2733 = scalar_lea.vmem %s9, 3
      %v2734 = vld [vmem:[%s2733] sm:$0x1]
      %v2736 = vlaneseq
      %v2737 = vshrl.u32 %v2736, 7
      %v2738 = vsub.s32 0, %v2737
      %v2739 = vrot.slane %v2734, %v2738
      %v2745 = vunpack.c.l.b16 %v2729
      %v2746 = vunpack.c.l.b16 %v2730
      %v2747 = vunpack.c.l.b16 %v2731
      %v2748 = vunpack.c.l.b16 %v2732
      %v2749 = vpack.c.b16 %v2746, %v2745
      %v2750 = vpack.c.b16 %v2748, %v2747
      %2753 = vmatprep.subr.bf16.mxu0 0
      %2754 = vmatpush1.bf16.msra.mxu0 %v2749
      %2755 = vmatprep.subr.bf16.mxu0 0
      %2756 = vmatpush1.bf16.msra.mxu0 %v2750
      %2757 = vmatprep.subr.bf16.mxu0 0
      %2758 = vmatpush1.bf16.msra.mxu0 0
      %2759 = vmatprep.subr.bf16.mxu0 0
      %2760 = vmatpush1.bf16.msra.mxu0 0
      %2761 = vmatprep.subr.bf16.mxu0 0
      %2762 = vmatpush1.bf16.msra.mxu0 0
      %2763 = vmatprep.subr.bf16.mxu0 0
      %2764 = vmatpush1.bf16.msra.mxu0 0
      %2765 = vmatprep.subr.bf16.mxu0 0
      %2766 = vmatpush1.bf16.msra.mxu0 0
      %2767 = vmatprep.subr.bf16.mxu0 0
      %2768 = vmatpush1.bf16.msra.mxu0 0
      %2769 = vmatprep.subr.bf16.mxu0 0
      %2770 = vmatpush1.bf16.msra.mxu0 0
      %2771 = vmatprep.subr.bf16.mxu0 0
      %2772 = vmatpush1.bf16.msra.mxu0 0
      %2773 = vmatprep.subr.bf16.mxu0 0
      %2774 = vmatpush1.bf16.msra.mxu0 0
      %2775 = vmatprep.subr.bf16.mxu0 0
      %2776 = vmatpush1.bf16.msra.mxu0 0
      %2777 = vmatprep.subr.bf16.mxu0 0
      %2778 = vmatpush1.bf16.msra.mxu0 0
      %2779 = vmatprep.subr.bf16.mxu0 0
      %2780 = vmatpush1.bf16.msra.mxu0 0
      %2781 = vmatprep.subr.bf16.mxu0 0
      %2782 = vmatpush1.bf16.msra.mxu0 0
      %2783 = vmatprep.subr.bf16.mxu0 0
      %2784 = vmatpush1.bf16.msra.mxu0 0
      %2785 = vmatprep.mubr.bf16.mxu0 0
      %2786 = vmatmul.mubr.bf16.gmra.mrb[0].mxu0 %v2262
      %v2787 = vpop.f32.mrb[0].mxu0
      %v2788 = vadd.f32 %v2739, %v2787
      %v2789 = vpop.f32.mrb[0].mxu0
      %v2790 = vpop.f32.mrb[0].mxu0
      %v2791 = vadd.f32 %v2739, %v2790
      %v2792 = vpop.f32.mrb[0].mxu0
      %2793 = vmatprep.mubr.bf16.mxu0 0
      %2794 = vmatmul.mubr.bf16.gmra.mrb[0].mxu0 %v2265
      %v2795 = vpop.f32.mrb[0].mxu0
      %v2796 = vadd.f32 %v2739, %v2795
      %v2797 = vpop.f32.mrb[0].mxu0
      %v2798 = vpop.f32.mrb[0].mxu0
      %v2799 = vpop.f32.mrb[0].mxu0
      %2800 = vdwg.mxu0
      %s2801 = scalar_lea.vmem %s10, 48
      %v2802 = vld [vmem:[%s2801] sm:$0xf]
      %v2803 = vld [vmem:[%s2801 + $0x4] sm:$0xf]
      %v2804 = vld [vmem:[%s2801 + $0x8] sm:$0xf]
      %v2805 = vld [vmem:[%s2801 + $0xc] sm:$0xf]
      %s2806 = scalar_lea.vmem %s11, 3
      %v2807 = vld [vmem:[%s2806] sm:$0x1]
      %v2809 = vlaneseq
      %v2810 = vshrl.u32 %v2809, 7
      %v2811 = vsub.s32 0, %v2810
      %v2812 = vrot.slane %v2807, %v2811
      %v2818 = vunpack.c.l.b16 %v2802
      %v2819 = vunpack.c.l.b16 %v2803
      %v2820 = vunpack.c.l.b16 %v2804
      %v2821 = vunpack.c.l.b16 %v2805
      %v2822 = vpack.c.b16 %v2819, %v2818
      %v2823 = vpack.c.b16 %v2821, %v2820
      %2826 = vmatprep.subr.bf16.mxu0 0
      %2827 = vmatpush1.bf16.msra.mxu0 %v2822
      %2828 = vmatprep.subr.bf16.mxu0 0
      %2829 = vmatpush1.bf16.msra.mxu0 %v2823
      %2830 = vmatprep.subr.bf16.mxu0 0
      %2831 = vmatpush1.bf16.msra.mxu0 0
      %2832 = vmatprep.subr.bf16.mxu0 0
      %2833 = vmatpush1.bf16.msra.mxu0 0
      %2834 = vmatprep.subr.bf16.mxu0 0
      %2835 = vmatpush1.bf16.msra.mxu0 0
      %2836 = vmatprep.subr.bf16.mxu0 0
      %2837 = vmatpush1.bf16.msra.mxu0 0
      %2838 = vmatprep.subr.bf16.mxu0 0
      %2839 = vmatpush1.bf16.msra.mxu0 0
      %2840 = vmatprep.subr.bf16.mxu0 0
      %2841 = vmatpush1.bf16.msra.mxu0 0
      %2842 = vmatprep.subr.bf16.mxu0 0
      %2843 = vmatpush1.bf16.msra.mxu0 0
      %2844 = vmatprep.subr.bf16.mxu0 0
      %2845 = vmatpush1.bf16.msra.mxu0 0
      %2846 = vmatprep.subr.bf16.mxu0 0
      %2847 = vmatpush1.bf16.msra.mxu0 0
      %2848 = vmatprep.subr.bf16.mxu0 0
      %2849 = vmatpush1.bf16.msra.mxu0 0
      %2850 = vmatprep.subr.bf16.mxu0 0
      %2851 = vmatpush1.bf16.msra.mxu0 0
      %2852 = vmatprep.subr.bf16.mxu0 0
      %2853 = vmatpush1.bf16.msra.mxu0 0
      %2854 = vmatprep.subr.bf16.mxu0 0
      %2855 = vmatpush1.bf16.msra.mxu0 0
      %2856 = vmatprep.subr.bf16.mxu0 0
      %2857 = vmatpush1.bf16.msra.mxu0 0
      %2858 = vmatprep.mubr.bf16.mxu0 0
      %2859 = vmatmul.mubr.bf16.gmra.mrb[0].mxu0 %v2262
      %v2860 = vpop.f32.mrb[0].mxu0
      %v2861 = vadd.f32 %v2812, %v2860
      %v2862 = vpop.f32.mrb[0].mxu0
      %v2863 = vpop.f32.mrb[0].mxu0
      %v2864 = vadd.f32 %v2812, %v2863
      %v2865 = vpop.f32.mrb[0].mxu0
      %2866 = vmatprep.mubr.bf16.mxu0 0
      %2867 = vmatmul.mubr.bf16.gmra.mrb[0].mxu0 %v2265
      %v2868 = vpop.f32.mrb[0].mxu0
      %v2869 = vadd.f32 %v2812, %v2868
      %v2870 = vpop.f32.mrb[0].mxu0
      %v2871 = vpop.f32.mrb[0].mxu0
      %v2872 = vpop.f32.mrb[0].mxu0
      %2873 = vdwg.mxu0
      %v2874 = vpack.c.bf16 %v2718, %v2715
      %v2875 = vpack.c.bf16 %v2723, %v2723
      %2876 = vxpose.xlu0.b32.start [1/16] %v2788, 128
      %2877 = vxpose.xlu0.b32.cont [2/16] %v2791, 128
      %2878 = vxpose.xlu0.b32.cont [3/16] %v2796, 128
      %2879 = vxpose.xlu0.b32.cont [4/16] 0.0, 128
      %2880 = vxpose.xlu0.b32.cont [5/16] 0.0, 128
      %2881 = vxpose.xlu0.b32.cont [6/16] 0.0, 128
      %2882 = vxpose.xlu0.b32.cont [7/16] 0.0, 128
      %2883 = vxpose.xlu0.b32.cont [8/16] 0.0, 128
      %2884 = vxpose.xlu0.b32.cont [9/16] 0.0, 128
      %2885 = vxpose.xlu0.b32.cont [10/16] 0.0, 128
      %2886 = vxpose.xlu0.b32.cont [11/16] 0.0, 128
      %2887 = vxpose.xlu0.b32.cont [12/16] 0.0, 128
      %2888 = vxpose.xlu0.b32.cont [13/16] 0.0, 128
      %2889 = vxpose.xlu0.b32.cont [14/16] 0.0, 128
      %2890 = vxpose.xlu0.b32.cont [15/16] 0.0, 128
      %2891 = vxpose.xlu0.b32.end [16/16] 0.0, 128
      %v2892 = vpop.trf.xlu0
      %v2893 = vpop.trf.xlu0
      %v2894 = vpop.trf.xlu0
      %v2895 = vpop.trf.xlu0
      %v2896 = vpop.trf.xlu0
      %v2897 = vpop.trf.xlu0
      %v2898 = vpop.trf.xlu0
      %v2899 = vpop.trf.xlu0
      %v2900 = vpop.trf.xlu0
      %v2901 = vpop.trf.xlu0
      %v2902 = vpop.trf.xlu0
      %v2903 = vpop.trf.xlu0
      %v2904 = vpop.trf.xlu0
      %v2905 = vpop.trf.xlu0
      %v2906 = vpop.trf.xlu0
      %v2907 = vpop.trf.xlu0
      %v2908 = vpack.c.bf16 %v2893, %v2892
      %v2910 = vsel %vm1157, %v2874, 0
      %v2913 = vsel %vm1157, %v2875, 0
      %2915 = vmatprep.subr.bf16.mxu0 0
      %2916 = vmatpush1.bf16.msra.mxu0 %v2908
      %2917 = vmatprep.subr.bf16.mxu0 0
      %2918 = vmatpush1.bf16.msra.mxu0 0
      %2919 = vmatprep.subr.bf16.mxu0 0
      %2920 = vmatpush1.bf16.msra.mxu0 0
      %2921 = vmatprep.subr.bf16.mxu0 0
      %2922 = vmatpush1.bf16.msra.mxu0 0
      %2923 = vmatprep.subr.bf16.mxu0 0
      %2924 = vmatpush1.bf16.msra.mxu0 0
      %2925 = vmatprep.subr.bf16.mxu0 0
      %2926 = vmatpush1.bf16.msra.mxu0 0
      %2927 = vmatprep.subr.bf16.mxu0 0
      %2928 = vmatpush1.bf16.msra.mxu0 0
      %2929 = vmatprep.subr.bf16.mxu0 0
      %2930 = vmatpush1.bf16.msra.mxu0 0
      %2931 = vmatprep.subr.bf16.mxu0 0
      %2932 = vmatpush1.bf16.msra.mxu0 0
      %2933 = vmatprep.subr.bf16.mxu0 0
      %2934 = vmatpush1.bf16.msra.mxu0 0
      %2935 = vmatprep.subr.bf16.mxu0 0
      %2936 = vmatpush1.bf16.msra.mxu0 0
      %2937 = vmatprep.subr.bf16.mxu0 0
      %2938 = vmatpush1.bf16.msra.mxu0 0
      %2939 = vmatprep.subr.bf16.mxu0 0
      %2940 = vmatpush1.bf16.msra.mxu0 0
      %2941 = vmatprep.subr.bf16.mxu0 0
      %2942 = vmatpush1.bf16.msra.mxu0 0
      %2943 = vmatprep.subr.bf16.mxu0 0
      %2944 = vmatpush1.bf16.msra.mxu0 0
      %2945 = vmatprep.subr.bf16.mxu0 0
      %2946 = vmatpush1.bf16.msra.mxu0 0
      %2947 = vmatprep.mubr.bf16.mxu0 0
      %2948 = vmatmul.mubr.bf16.gmra.mrb[0].mxu0 %v2910
      %v2949 = vpop.f32.mrb[0].mxu0
      %v2950 = vadd.f32 0.0, %v2949
      %v2951 = vpop.f32.mrb[0].mxu0
      %v2952 = vpop.f32.mrb[0].mxu0
      %v2953 = vadd.f32 0.0, %v2952
      %v2954 = vpop.f32.mrb[0].mxu0
      %2955 = vmatprep.mubr.bf16.mxu0 0
      %2956 = vmatmul.mubr.bf16.gmra.mrb[0].mxu0 %v2913
      %v2957 = vpop.f32.mrb[0].mxu0
      %v2958 = vadd.f32 0.0, %v2957
      %v2959 = vpop.f32.mrb[0].mxu0
      %v2960 = vpop.f32.mrb[0].mxu0
      %v2961 = vpop.f32.mrb[0].mxu0
      %2962 = vdwg.mxu0
      %v2963 = vmul.f32 %v2950, 0.25
      %v2964 = vmul.f32 %v2953, 0.25
      %v2965 = vmul.f32 %v2958, 0.25
      %v2966 = vadd.f32 %v2963, %v839
      %v2967 = vadd.f32 %v2964, %v839
      %v2968 = vadd.f32 %v2965, %v839
      %v2969 = vsel %vm1218, %v2966, -inf
      %2970 = vmax.xlane.f32.xlu0 %v2969
      %v2971 = vpop.xlane.xlu0 %2970
      %v2972 = vsel %vm1218, %v2967, -inf
      %2973 = vmax.xlane.f32.xlu0 %v2972
      %v2974 = vpop.xlane.xlu0 %2973
      %v2975 = vsel %vm1218, %v2968, -inf
      %2976 = vmax.xlane.f32.xlu0 %v2975
      %v2977 = vpop.xlane.xlu0 %2976
      %v2978 = vsub.f32 %v2966, %v2971
      %v2979 = vsub.f32 %v2967, %v2974
      %v2980 = vsub.f32 %v2968, %v2977
      %v2981 = vmul.f32 %v2978, 1.442695
      %v2982 = vpow.pop %v2981
      %v2983 = vmul.f32 %v2979, 1.442695
      %v2984 = vpow.pop %v2983
      %v2985 = vmul.f32 %v2980, 1.442695
      %v2986 = vpow.pop %v2985
      %v2987 = vsel %vm1218, %v2982, 0.0
      %2988 = vadd.xlane.f32.xlu0 %v2987
      %v2989 = vpop.xlane.xlu0 %2988
      %v2990 = vsel %vm1218, %v2984, 0.0
      %2991 = vadd.xlane.f32.xlu0 %v2990
      %v2992 = vpop.xlane.xlu0 %2991
      %v2993 = vsel %vm1218, %v2986, 0.0
      %2994 = vadd.xlane.f32.xlu0 %v2993
      %v2995 = vpop.xlane.xlu0 %2994
      %v2996 = vrcp.pop %v2989
      %v2997 = vrcp.pop %v2992
      %v2998 = vrcp.pop %v2995
      %v2999 = vmul.f32 %v2982, %v2996
      %v3000 = vmul.f32 %v2984, %v2997
      %v3001 = vmul.f32 %v2986, %v2998
      %v3002 = vpack.c.bf16 %v3000, %v2999
      %v3003 = vpack.c.bf16 %v3001, %v3001
      %v3004 = vpack.c.bf16 %v2864, %v2861
      %v3005 = vpack.c.bf16 %v2869, %v2869
      %v3007 = vsel %vm1218, %v3002, 0
      %v3010 = vsel %vm1218, %v3003, 0
      %v3013 = vsel %vm1262, %v3005, 0
      %3015 = vmatprep.subr.bf16.mxu0 0
      %3016 = vmatpush1.bf16.msra.mxu0 %v3004
      %3017 = vmatprep.subr.bf16.mxu0 0
      %3018 = vmatpush1.bf16.msra.mxu0 %v3013
      %3019 = vmatprep.subr.bf16.mxu0 0
      %3020 = vmatpush1.bf16.msra.mxu0 0
      %3021 = vmatprep.subr.bf16.mxu0 0
      %3022 = vmatpush1.bf16.msra.mxu0 0
      %3023 = vmatprep.subr.bf16.mxu0 0
      %3024 = vmatpush1.bf16.msra.mxu0 0
      %3025 = vmatprep.subr.bf16.mxu0 0
      %3026 = vmatpush1.bf16.msra.mxu0 0
      %3027 = vmatprep.subr.bf16.mxu0 0
      %3028 = vmatpush1.bf16.msra.mxu0 0
      %3029 = vmatprep.subr.bf16.mxu0 0
      %3030 = vmatpush1.bf16.msra.mxu0 0
      %3031 = vmatprep.subr.bf16.mxu0 0
      %3032 = vmatpush1.bf16.msra.mxu0 0
      %3033 = vmatprep.subr.bf16.mxu0 0
      %3034 = vmatpush1.bf16.msra.mxu0 0
      %3035 = vmatprep.subr.bf16.mxu0 0
      %3036 = vmatpush1.bf16.msra.mxu0 0
      %3037 = vmatprep.subr.bf16.mxu0 0
      %3038 = vmatpush1.bf16.msra.mxu0 0
      %3039 = vmatprep.subr.bf16.mxu0 0
      %3040 = vmatpush1.bf16.msra.mxu0 0
      %3041 = vmatprep.subr.bf16.mxu0 0
      %3042 = vmatpush1.bf16.msra.mxu0 0
      %3043 = vmatprep.subr.bf16.mxu0 0
      %3044 = vmatpush1.bf16.msra.mxu0 0
      %3045 = vmatprep.subr.bf16.mxu0 0
      %3046 = vmatpush1.bf16.msra.mxu0 0
      %3047 = vmatprep.mubr.bf16.mxu0 0
      %3048 = vmatmul.mubr.bf16.gmra.mrb[0].mxu0 %v3007
      %v3049 = vpop.f32.mrb[0].mxu0
      %v3050 = vadd.f32 0.0, %v3049
      %v3051 = vpop.f32.mrb[0].mxu0
      %v3052 = vpop.f32.mrb[0].mxu0
      %v3053 = vadd.f32 0.0, %v3052
      %v3054 = vpop.f32.mrb[0].mxu0
      %3055 = vmatprep.mubr.bf16.mxu0 0
      %3056 = vmatmul.mubr.bf16.gmra.mrb[0].mxu0 %v3010
      %v3057 = vpop.f32.mrb[0].mxu0
      %v3058 = vadd.f32 0.0, %v3057
      %v3059 = vpop.f32.mrb[0].mxu0
      %v3060 = vpop.f32.mrb[0].mxu0
      %v3061 = vpop.f32.mrb[0].mxu0
      %3062 = vdwg.mxu0
      %v3063 = vpack.c.bf16 %v3053, %v3050
      %v3064 = vpack.c.bf16 %v3058, %v3058
      %s3065 = scalar_lea.vmem %s12, 24
      %v3066 = vld [vmem:[%s3065] sm:$0xf]
      %v3067 = vld [vmem:[%s3065 + $0x4] sm:$0xf]
      %v3070 = vunpack.c.l.b16 %v3066
      %v3071 = vunpack.c.l.b16 %v3067
      %v3072 = vpack.c.b16 %v3071, %v3070
      %v3075 = vsel %vm1157, %v3063, 0
      %v3078 = vsel %vm1157, %v3064, 0
      %3080 = vmatprep.subr.bf16.mxu0 0
      %3081 = vmatpush1.bf16.msra.mxu0 %v3072
      %3082 = vmatprep.subr.bf16.mxu0 0
      %3083 = vmatpush1.bf16.msra.mxu0 0
      %3084 = vmatprep.subr.bf16.mxu0 0
      %3085 = vmatpush1.bf16.msra.mxu0 0
      %3086 = vmatprep.subr.bf16.mxu0 0
      %3087 = vmatpush1.bf16.msra.mxu0 0
      %3088 = vmatprep.subr.bf16.mxu0 0
      %3089 = vmatpush1.bf16.msra.mxu0 0
      %3090 = vmatprep.subr.bf16.mxu0 0
      %3091 = vmatpush1.bf16.msra.mxu0 0
      %3092 = vmatprep.subr.bf16.mxu0 0
      %3093 = vmatpush1.bf16.msra.mxu0 0
      %3094 = vmatprep.subr.bf16.mxu0 0
      %3095 = vmatpush1.bf16.msra.mxu0 0
      %3096 = vmatprep.subr.bf16.mxu0 0
      %3097 = vmatpush1.bf16.msra.mxu0 0
      %3098 = vmatprep.subr.bf16.mxu0 0
      %3099 = vmatpush1.bf16.msra.mxu0 0
      %3100 = vmatprep.subr.bf16.mxu0 0
      %3101 = vmatpush1.bf16.msra.mxu0 0
      %3102 = vmatprep.subr.bf16.mxu0 0
      %3103 = vmatpush1.bf16.msra.mxu0 0
      %3104 = vmatprep.subr.bf16.mxu0 0
      %3105 = vmatpush1.bf16.msra.mxu0 0
      %3106 = vmatprep.subr.bf16.mxu0 0
      %3107 = vmatpush1.bf16.msra.mxu0 0
      %3108 = vmatprep.subr.bf16.mxu0 0
      %3109 = vmatpush1.bf16.msra.mxu0 0
      %3110 = vmatprep.subr.bf16.mxu0 0
      %3111 = vmatpush1.bf16.msra.mxu0 0
      %3112 = vmatprep.mubr.bf16.mxu0 0
      %3113 = vmatmul.mubr.bf16.gmra.mrb[0].mxu0 %v3075
      %v3114 = vpop.f32.mrb[0].mxu0
      %v3115 = vadd.f32 0.0, %v3114
      %v3116 = vpop.f32.mrb[0].mxu0
      %v3117 = vpop.f32.mrb[0].mxu0
      %v3118 = vadd.f32 0.0, %v3117
      %v3119 = vpop.f32.mrb[0].mxu0
      %3120 = vmatprep.mubr.bf16.mxu0 0
      %3121 = vmatmul.mubr.bf16.gmra.mrb[0].mxu0 %v3078
      %v3122 = vpop.f32.mrb[0].mxu0
      %v3123 = vadd.f32 0.0, %v3122
      %v3124 = vpop.f32.mrb[0].mxu0
      %v3125 = vpop.f32.mrb[0].mxu0
      %v3126 = vpop.f32.mrb[0].mxu0
      %3127 = vdwg.mxu0
      %v3130 = vunpack.c.l.b16 %v2653
      %v3131 = vunpack.c.l.b16 %v2654
      %v3132 = vpack.c.b16 %v3131, %v3130
      %v3135 = vsel %vm1157, %v2650, 0
      %v3138 = vsel %vm1157, %v2651, 0
      %3140 = vmatprep.subr.bf16.mxu0 0
      %3141 = vmatpush1.bf16.msra.mxu0 %v3132
      %3142 = vmatprep.subr.bf16.mxu0 0
      %3143 = vmatpush1.bf16.msra.mxu0 0
      %3144 = vmatprep.subr.bf16.mxu0 0
      %3145 = vmatpush1.bf16.msra.mxu0 0
      %3146 = vmatprep.subr.bf16.mxu0 0
      %3147 = vmatpush1.bf16.msra.mxu0 0
      %3148 = vmatprep.subr.bf16.mxu0 0
      %3149 = vmatpush1.bf16.msra.mxu0 0
      %3150 = vmatprep.subr.bf16.mxu0 0
      %3151 = vmatpush1.bf16.msra.mxu0 0
      %3152 = vmatprep.subr.bf16.mxu0 0
      %3153 = vmatpush1.bf16.msra.mxu0 0
      %3154 = vmatprep.subr.bf16.mxu0 0
      %3155 = vmatpush1.bf16.msra.mxu0 0
      %3156 = vmatprep.subr.bf16.mxu0 0
      %3157 = vmatpush1.bf16.msra.mxu0 0
      %3158 = vmatprep.subr.bf16.mxu0 0
      %3159 = vmatpush1.bf16.msra.mxu0 0
      %3160 = vmatprep.subr.bf16.mxu0 0
      %3161 = vmatpush1.bf16.msra.mxu0 0
      %3162 = vmatprep.subr.bf16.mxu0 0
      %3163 = vmatpush1.bf16.msra.mxu0 0
      %3164 = vmatprep.subr.bf16.mxu0 0
      %3165 = vmatpush1.bf16.msra.mxu0 0
      %3166 = vmatprep.subr.bf16.mxu0 0
      %3167 = vmatpush1.bf16.msra.mxu0 0
      %3168 = vmatprep.subr.bf16.mxu0 0
      %3169 = vmatpush1.bf16.msra.mxu0 0
      %3170 = vmatprep.subr.bf16.mxu0 0
      %3171 = vmatpush1.bf16.msra.mxu0 0
      %3172 = vmatprep.mubr.bf16.mxu0 0
      %3173 = vmatmul.mubr.bf16.gmra.mrb[0].mxu0 %v3135
      %v3174 = vpop.f32.mrb[0].mxu0
      %v3175 = vadd.f32 %v3115, %v3174
      %v3176 = vpop.f32.mrb[0].mxu0
      %v3177 = vpop.f32.mrb[0].mxu0
      %v3178 = vadd.f32 %v3118, %v3177
      %v3179 = vpop.f32.mrb[0].mxu0
      %3180 = vmatprep.mubr.bf16.mxu0 0
      %3181 = vmatmul.mubr.bf16.gmra.mrb[0].mxu0 %v3138
      %v3182 = vpop.f32.mrb[0].mxu0
      %v3183 = vadd.f32 %v3123, %v3182
      %v3184 = vpop.f32.mrb[0].mxu0
      %v3185 = vpop.f32.mrb[0].mxu0
      %v3186 = vpop.f32.mrb[0].mxu0
      %3187 = vdwg.mxu0
      %s3188 = scalar_lea.vmem %s14, 1
      %v3189 = vld [vmem:[%s3188] sm:$0x1]
      %s3190 = scalar_lea.vmem %s13, 1
      %v3191 = vld [vmem:[%s3190] sm:$0x1]
      %v3193 = vlaneseq
      %v3194 = vshrl.u32 %v3193, 7
      %v3195 = vsub.s32 0, %v3194
      %v3196 = vrot.slane %v3191, %v3195
      %v3198 = vadd.f32 %v3175, %v3196
      %v3199 = vadd.f32 %v3178, %v3196
      %v3200 = vadd.f32 %v3183, %v3196
      %v3202 = vlaneseq
      %v3203 = vshrl.u32 %v3202, 7
      %v3204 = vsub.s32 0, %v3203
      %v3205 = vrot.slane %v3189, %v3204
      %v3207 = vmul.f32 %v3205, %v3198
      %v3208 = vmul.f32 %v3205, %v3199
      %v3209 = vmul.f32 %v3205, %v3200
      %v3210 = vadd.f32 %v2170, %v3207
      %v3211 = vadd.f32 %v2171, %v3208
      %v3212 = vadd.f32 %v2172, %v3209
      %s3213 = scalar_lea.vmem %s15, 1
      %v3214 = vld [vmem:[%s3213] sm:$0x1]
      %s3215 = scalar_lea.vmem %s16, 1
      %v3216 = vld [vmem:[%s3215] sm:$0x1]
      %v3217 = vsel %vm842, %v3210, 0.0
      %3218 = vadd.xlane.f32.xlu0 %v3217
      %v3219 = vpop.xlane.xlu0 %3218
      %v3220 = vsel %vm842, %v3211, 0.0
      %3221 = vadd.xlane.f32.xlu0 %v3220
      %v3222 = vpop.xlane.xlu0 %3221
      %v3223 = vsel %vm842, %v3212, 0.0
      %3224 = vadd.xlane.f32.xlu0 %v3223
      %v3225 = vpop.xlane.xlu0 %3224
      %v3226 = vmul.f32 %v3219, %v852
      %v3227 = vmul.f32 %v3222, %v852
      %v3228 = vmul.f32 %v3225, %v852
      %v3229 = vsub.f32 %v3210, %v3226
      %v3230 = vsub.f32 %v3211, %v3227
      %v3231 = vsub.f32 %v3212, %v3228
      %v3232 = vmul.f32 %v3229, %v3229
      %v3233 = vmul.f32 %v3230, %v3230
      %v3234 = vmul.f32 %v3231, %v3231
      %v3235 = vsel %vm842, %v3232, 0.0
      %3236 = vadd.xlane.f32.xlu0 %v3235
      %v3237 = vpop.xlane.xlu0 %3236
      %v3238 = vsel %vm842, %v3233, 0.0
      %3239 = vadd.xlane.f32.xlu0 %v3238
      %v3240 = vpop.xlane.xlu0 %3239
      %v3241 = vsel %vm842, %v3234, 0.0
      %3242 = vadd.xlane.f32.xlu0 %v3241
      %v3243 = vpop.xlane.xlu0 %3242
      %v3244 = vmul.f32 %v3237, %v852
      %v3245 = vmul.f32 %v3240, %v852
      %v3246 = vmul.f32 %v3243, %v852
      %v3247 = vadd.f32 %v3244, 1e-06
      %v3248 = vadd.f32 %v3245, 1e-06
      %v3249 = vadd.f32 %v3246, 1e-06
      %v3250 = vrsqrt.pop %v3247
      %v3251 = vrsqrt.pop %v3248
      %v3252 = vrsqrt.pop %v3249
      %v3253 = vmul.f32 %v3229, %v3250
      %v3254 = vmul.f32 %v3230, %v3251
      %v3255 = vmul.f32 %v3231, %v3252
      %v3257 = vlaneseq
      %v3258 = vshrl.u32 %v3257, 7
      %v3259 = vsub.s32 0, %v3258
      %v3260 = vrot.slane %v3214, %v3259
      %v3262 = vmul.f32 %v3253, %v3260
      %v3263 = vmul.f32 %v3254, %v3260
      %v3264 = vmul.f32 %v3255, %v3260
      %v3266 = vlaneseq
      %v3267 = vshrl.u32 %v3266, 7
      %v3268 = vsub.s32 0, %v3267
      %v3269 = vrot.slane %v3216, %v3268
      %v3271 = vadd.f32 %v3262, %v3269
      %v3272 = vadd.f32 %v3263, %v3269
      %v3273 = vadd.f32 %v3264, %v3269
      %v3274 = vpack.c.bf16 %v3272, %v3271
      %v3275 = vpack.c.bf16 %v3273, %v3273
      %s3276 = scalar_lea.vmem %s17, 16
      %v3277 = vld [vmem:[%s3276] sm:$0xf]
      %v3278 = vld [vmem:[%s3276 + $0x4] sm:$0xf]
      %v3279 = vld [vmem:[%s3276 + $0x8] sm:$0xf]
      %v3280 = vld [vmem:[%s3276 + $0xc] sm:$0xf]
      %s3281 = scalar_lea.vmem %s18, 1
      %v3282 = vld [vmem:[%s3281] sm:$0x1]
      %v3284 = vlaneseq
      %v3285 = vshrl.u32 %v3284, 7
      %v3286 = vsub.s32 0, %v3285
      %v3287 = vrot.slane %v3282, %v3286
      %v3293 = vunpack.c.l.b16 %v3277
      %v3294 = vunpack.c.l.b16 %v3278
      %v3295 = vunpack.c.l.b16 %v3279
      %v3296 = vunpack.c.l.b16 %v3280
      %v3297 = vpack.c.b16 %v3294, %v3293
      %v3298 = vpack.c.b16 %v3296, %v3295
      %v3302 = vsel %vm842, %v3274, 0
      %v3305 = vsel %vm842, %v3275, 0
      %3307 = vmatprep.subr.bf16.mxu0 0
      %3308 = vmatpush1.bf16.msra.mxu0 %v3297
      %3309 = vmatprep.subr.bf16.mxu0 0
      %3310 = vmatpush1.bf16.msra.mxu0 %v3298
      %3311 = vmatprep.subr.bf16.mxu0 0
      %3312 = vmatpush1.bf16.msra.mxu0 0
      %3313 = vmatprep.subr.bf16.mxu0 0
      %3314 = vmatpush1.bf16.msra.mxu0 0
      %3315 = vmatprep.subr.bf16.mxu0 0
      %3316 = vmatpush1.bf16.msra.mxu0 0
      %3317 = vmatprep.subr.bf16.mxu0 0
      %3318 = vmatpush1.bf16.msra.mxu0 0
      %3319 = vmatprep.subr.bf16.mxu0 0
      %3320 = vmatpush1.bf16.msra.mxu0 0
      %3321 = vmatprep.subr.bf16.mxu0 0
      %3322 = vmatpush1.bf16.msra.mxu0 0
      %3323 = vmatprep.subr.bf16.mxu0 0
      %3324 = vmatpush1.bf16.msra.mxu0 0
      %3325 = vmatprep.subr.bf16.mxu0 0
      %3326 = vmatpush1.bf16.msra.mxu0 0
      %3327 = vmatprep.subr.bf16.mxu0 0
      %3328 = vmatpush1.bf16.msra.mxu0 0
      %3329 = vmatprep.subr.bf16.mxu0 0
      %3330 = vmatpush1.bf16.msra.mxu0 0
      %3331 = vmatprep.subr.bf16.mxu0 0
      %3332 = vmatpush1.bf16.msra.mxu0 0
      %3333 = vmatprep.subr.bf16.mxu0 0
      %3334 = vmatpush1.bf16.msra.mxu0 0
      %3335 = vmatprep.subr.bf16.mxu0 0
      %3336 = vmatpush1.bf16.msra.mxu0 0
      %3337 = vmatprep.subr.bf16.mxu0 0
      %3338 = vmatpush1.bf16.msra.mxu0 0
      %3339 = vmatprep.mubr.bf16.mxu0 0
      %3340 = vmatmul.mubr.bf16.gmra.mrb[0].mxu0 %v3302
      %v3341 = vpop.f32.mrb[0].mxu0
      %v3342 = vadd.f32 %v3287, %v3341
      %v3343 = vpop.f32.mrb[0].mxu0
      %v3344 = vpop.f32.mrb[0].mxu0
      %v3345 = vadd.f32 %v3287, %v3344
      %v3346 = vpop.f32.mrb[0].mxu0
      %3347 = vmatprep.mubr.bf16.mxu0 0
      %3348 = vmatmul.mubr.bf16.gmra.mrb[0].mxu0 %v3305
      %v3349 = vpop.f32.mrb[0].mxu0
      %v3350 = vadd.f32 %v3287, %v3349
      %v3351 = vpop.f32.mrb[0].mxu0
      %v3352 = vpop.f32.mrb[0].mxu0
      %v3353 = vpop.f32.mrb[0].mxu0
      %3354 = vdwg.mxu0
      %v3355 = vmul.f32 %v3342, 0.5
      %v3356 = vmul.f32 %v3345, 0.5
      %v3357 = vmul.f32 %v3350, 0.5
      %v3358 = vmul.f32 %v3342, 0.044715
      %v3359 = vmul.f32 %v3345, 0.044715
      %v3360 = vmul.f32 %v3350, 0.044715
      %v3361 = vmul.f32 %v3358, %v3342
      %v3362 = vmul.f32 %v3359, %v3345
      %v3363 = vmul.f32 %v3360, %v3350
      %v3364 = vmul.f32 %v3361, %v3342
      %v3365 = vmul.f32 %v3362, %v3345
      %v3366 = vmul.f32 %v3363, %v3350
      %v3367 = vadd.f32 %v3342, %v3364
      %v3368 = vadd.f32 %v3345, %v3365
      %v3369 = vadd.f32 %v3350, %v3366
      %v3370 = vmul.f32 %v3367, 0.7978846
      %v3371 = vmul.f32 %v3368, 0.7978846
      %v3372 = vmul.f32 %v3369, 0.7978846
      %v3373 = vtanh.pop %v3370
      %v3374 = vtanh.pop %v3371
      %v3375 = vtanh.pop %v3372
      %v3376 = vadd.f32 %v3373, 1.0
      %v3377 = vadd.f32 %v3374, 1.0
      %v3378 = vadd.f32 %v3375, 1.0
      %v3379 = vmul.f32 %v3355, %v3376
      %v3380 = vmul.f32 %v3356, %v3377
      %v3381 = vmul.f32 %v3357, %v3378
      %v3382 = vpack.c.bf16 %v3380, %v3379
      %v3383 = vpack.c.bf16 %v3381, %v3381
      %s3384 = scalar_lea.vmem %s19, 64
      %v3385 = vld [vmem:[%s3384] sm:$0xf]
      %v3386 = vld [vmem:[%s3384 + $0x4] sm:$0xf]
      %v3387 = vld [vmem:[%s3384 + $0x8] sm:$0xf]
      %v3388 = vld [vmem:[%s3384 + $0xc] sm:$0xf]
      %v3389 = vld [vmem:[%s3384 + $0x10] sm:$0xf]
      %v3390 = vld [vmem:[%s3384 + $0x14] sm:$0xf]
      %v3391 = vld [vmem:[%s3384 + $0x18] sm:$0xf]
      %v3392 = vld [vmem:[%s3384 + $0x1c] sm:$0xf]
      %v3393 = vld [vmem:[%s3384 + $0x20] sm:$0xf]
      %v3394 = vld [vmem:[%s3384 + $0x24] sm:$0xf]
      %v3395 = vld [vmem:[%s3384 + $0x28] sm:$0xf]
      %v3396 = vld [vmem:[%s3384 + $0x2c] sm:$0xf]
      %v3397 = vld [vmem:[%s3384 + $0x30] sm:$0xf]
      %v3398 = vld [vmem:[%s3384 + $0x34] sm:$0xf]
      %v3399 = vld [vmem:[%s3384 + $0x38] sm:$0xf]
      %v3400 = vld [vmem:[%s3384 + $0x3c] sm:$0xf]
      %s3401 = scalar_lea.vmem %s20, 1
      %v3402 = vld [vmem:[%s3401] sm:$0x1]
      %v3404 = vlaneseq
      %v3405 = vshrl.u32 %v3404, 7
      %v3406 = vsub.s32 0, %v3405
      %v3407 = vrot.slane %v3402, %v3406
      %v3425 = vunpack.c.l.b16 %v3385
      %v3426 = vunpack.c.l.b16 %v3386
      %v3427 = vunpack.c.l.b16 %v3387
      %v3428 = vunpack.c.l.b16 %v3388
      %v3429 = vunpack.c.l.b16 %v3389
      %v3430 = vunpack.c.l.b16 %v3390
      %v3431 = vunpack.c.l.b16 %v3391
      %v3432 = vunpack.c.l.b16 %v3392
      %v3433 = vunpack.c.l.b16 %v3393
      %v3434 = vunpack.c.l.b16 %v3394
      %v3435 = vunpack.c.l.b16 %v3395
      %v3436 = vunpack.c.l.b16 %v3396
      %v3437 = vunpack.c.l.b16 %v3397
      %v3438 = vunpack.c.l.b16 %v3398
      %v3439 = vunpack.c.l.b16 %v3399
      %v3440 = vunpack.c.l.b16 %v3400
      %v3441 = vpack.c.b16 %v3426, %v3425
      %v3442 = vpack.c.b16 %v3428, %v3427
      %v3443 = vpack.c.b16 %v3430, %v3429
      %v3444 = vpack.c.b16 %v3432, %v3431
      %v3445 = vpack.c.b16 %v3434, %v3433
      %v3446 = vpack.c.b16 %v3436, %v3435
      %v3447 = vpack.c.b16 %v3438, %v3437
      %v3448 = vpack.c.b16 %v3440, %v3439
      %3457 = vmatprep.subr.bf16.mxu0 0
      %3458 = vmatpush1.bf16.msra.mxu0 %v3441
      %3459 = vmatprep.subr.bf16.mxu0 0
      %3460 = vmatpush1.bf16.msra.mxu0 %v3442
      %3461 = vmatprep.subr.bf16.mxu0 0
      %3462 = vmatpush1.bf16.msra.mxu0 %v3443
      %3463 = vmatprep.subr.bf16.mxu0 0
      %3464 = vmatpush1.bf16.msra.mxu0 %v3444
      %3465 = vmatprep.subr.bf16.mxu0 0
      %3466 = vmatpush1.bf16.msra.mxu0 %v3445
      %3467 = vmatprep.subr.bf16.mxu0 0
      %3468 = vmatpush1.bf16.msra.mxu0 %v3446
      %3469 = vmatprep.subr.bf16.mxu0 0
      %3470 = vmatpush1.bf16.msra.mxu0 %v3447
      %3471 = vmatprep.subr.bf16.mxu0 0
      %3472 = vmatpush1.bf16.msra.mxu0 %v3448
      %3473 = vmatprep.subr.bf16.mxu0 0
      %3474 = vmatpush1.bf16.msra.mxu0 0
      %3475 = vmatprep.subr.bf16.mxu0 0
      %3476 = vmatpush1.bf16.msra.mxu0 0
      %3477 = vmatprep.subr.bf16.mxu0 0
      %3478 = vmatpush1.bf16.msra.mxu0 0
      %3479 = vmatprep.subr.bf16.mxu0 0
      %3480 = vmatpush1.bf16.msra.mxu0 0
      %3481 = vmatprep.subr.bf16.mxu0 0
      %3482 = vmatpush1.bf16.msra.mxu0 0
      %3483 = vmatprep.subr.bf16.mxu0 0
      %3484 = vmatpush1.bf16.msra.mxu0 0
      %3485 = vmatprep.subr.bf16.mxu0 0
      %3486 = vmatpush1.bf16.msra.mxu0 0
      %3487 = vmatprep.subr.bf16.mxu0 0
      %3488 = vmatpush1.bf16.msra.mxu0 0
      %3489 = vmatprep.mubr.bf16.mxu0 0
      %3490 = vmatmul.mubr.bf16.gmra.mrb[0].mxu0 %v3382
      %v3491 = vpop.f32.mrb[0].mxu0
      %v3492 = vadd.f32 %v3407, %v3491
      %v3493 = vpop.f32.mrb[0].mxu0
      %v3494 = vpop.f32.mrb[0].mxu0
      %v3495 = vadd.f32 %v3407, %v3494
      %v3496 = vpop.f32.mrb[0].mxu0
      %3497 = vmatprep.mubr.bf16.mxu0 0
      %3498 = vmatmul.mubr.bf16.gmra.mrb[0].mxu0 %v3383
      %v3499 = vpop.f32.mrb[0].mxu0
      %v3500 = vadd.f32 %v3407, %v3499
      %v3501 = vpop.f32.mrb[0].mxu0
      %v3502 = vpop.f32.mrb[0].mxu0
      %v3503 = vpop.f32.mrb[0].mxu0
      %3504 = vdwg.mxu0
      %s3505 = scalar_lea.vmem %s21, 1
      %v3506 = vld [vmem:[%s3505] sm:$0x1]
      %v3508 = vlaneseq
      %v3509 = vshrl.u32 %v3508, 7
      %v3510 = vsub.s32 0, %v3509
      %v3511 = vrot.slane %v3506, %v3510
      %v3513 = vmul.f32 %v3511, %v3492
      %v3514 = vmul.f32 %v3511, %v3495
      %v3515 = vmul.f32 %v3511, %v3500
      %v3516 = vadd.f32 %v3210, %v3513
      %v3517 = vadd.f32 %v3211, %v3514
      %v3518 = vadd.f32 %v3212, %v3515
      %v3519 = vld [vmem:[%s22] sm:$0x1]
      %v3520 = vld [vmem:[%s23] sm:$0x1]
      %v3521 = vsel %vm842, %v3516, 0.0
      %3522 = vadd.xlane.f32.xlu0 %v3521
      %v3523 = vpop.xlane.xlu0 %3522
      %v3524 = vsel %vm842, %v3517, 0.0
      %3525 = vadd.xlane.f32.xlu0 %v3524
      %v3526 = vpop.xlane.xlu0 %3525
      %v3527 = vsel %vm842, %v3518, 0.0
      %3528 = vadd.xlane.f32.xlu0 %v3527
      %v3529 = vpop.xlane.xlu0 %3528
      %v3530 = vmul.f32 %v3523, %v852
      %v3531 = vmul.f32 %v3526, %v852
      %v3532 = vmul.f32 %v3529, %v852
      %v3533 = vsub.f32 %v3516, %v3530
      %v3534 = vsub.f32 %v3517, %v3531
      %v3535 = vsub.f32 %v3518, %v3532
      %v3536 = vmul.f32 %v3533, %v3533
      %v3537 = vmul.f32 %v3534, %v3534
      %v3538 = vmul.f32 %v3535, %v3535
      %v3539 = vsel %vm842, %v3536, 0.0
      %3540 = vadd.xlane.f32.xlu0 %v3539
      %v3541 = vpop.xlane.xlu0 %3540
      %v3542 = vsel %vm842, %v3537, 0.0
      %3543 = vadd.xlane.f32.xlu0 %v3542
      %v3544 = vpop.xlane.xlu0 %3543
      %v3545 = vsel %vm842, %v3538, 0.0
      %3546 = vadd.xlane.f32.xlu0 %v3545
      %v3547 = vpop.xlane.xlu0 %3546
      %v3548 = vmul.f32 %v3541, %v852
      %v3549 = vmul.f32 %v3544, %v852
      %v3550 = vmul.f32 %v3547, %v852
      %v3551 = vadd.f32 %v3548, 1e-06
      %v3552 = vadd.f32 %v3549, 1e-06
      %v3553 = vadd.f32 %v3550, 1e-06
      %v3554 = vrsqrt.pop %v3551
      %v3555 = vrsqrt.pop %v3552
      %v3556 = vrsqrt.pop %v3553
      %v3557 = vmul.f32 %v3533, %v3554
      %v3558 = vmul.f32 %v3534, %v3555
      %v3559 = vmul.f32 %v3535, %v3556
      %v3561 = vlaneseq
      %v3562 = vshrl.u32 %v3561, 7
      %v3563 = vsub.s32 0, %v3562
      %v3564 = vrot.slane %v3519, %v3563
      %v3566 = vmul.f32 %v3557, %v3564
      %v3567 = vmul.f32 %v3558, %v3564
      %v3568 = vmul.f32 %v3559, %v3564
      %v3570 = vlaneseq
      %v3571 = vshrl.u32 %v3570, 7
      %v3572 = vsub.s32 0, %v3571
      %v3573 = vrot.slane %v3520, %v3572
      %v3575 = vadd.f32 %v3566, %v3573
      %v3576 = vadd.f32 %v3567, %v3573
      %v3577 = vadd.f32 %v3568, %v3573
      %3578 = vst.msk [vmem:[%s737] sm:$0xff] %vm842, %v3575
      %3579 = vst.msk [vmem:[%s737 + $0x8] sm:$0xff] %vm842, %v3576
      %3580 = vst.msk [vmem:[%s737 + $0x10] sm:$0xff] %vm842, %v3577
      %p3581 = scmp.lt.s32.totalorder %s35, 1
      %s3582 = scalar_select %p3581, %s35, 1
      %s3583 = smul.addr %s3582, 3
      %s3584 = smul.addr %s3583, 8
      %s3585 = scalar_lea.vmem %s24, %s3584
      // Predicated region
      $region117: #{dinov2_backbone_forward.1} parent=115 // pred_check
        %p3586 = pneg %p562
      $region118: #{dinov2_backbone_forward.1} parent=115 // pred_check_branch
        %3588 = sbr.rel (%p3586) target = $region120
      $region119: #{dinov2_backbone_forward.1} parent=115 // pred_region
        _
      $region120: #{dinov2_backbone_forward.1} parent=115 // pred_fallthru
        _
    $region116: #{dinov2_backbone_forward.1} parent=5 // pred_fallthru
      _
    %p3589 = scmp.le.s32.totalorder 2, %s30
    // Predicated region
    $region121: #{dinov2_backbone_forward.1} parent=5 // pred_check
      %p3590 = pneg %p3589
    $region122: #{dinov2_backbone_forward.1} parent=5 // pred_check_branch
      %3592 = sbr.rel (%p3590) target = $region124
    $region123: #{dinov2_backbone_forward.1} parent=5 // pred_region
      %s3593 = ssub.s32 %s30, 2
      // Predicated region
      $region125: #{dinov2_backbone_forward.1} parent=123 // pred_check
        %p3594 = pneg %p568
      $region126: #{dinov2_backbone_forward.1} parent=123 // pred_check_branch
        %3596 = sbr.rel (%p3594) target = $region128
      $region127: #{dinov2_backbone_forward.1} parent=123 // pred_region
        %p3597 = scmp.lt.s32.totalorder %s36, 1
        %s3598 = scalar_select %p3597, %s36, 1
        %s3599 = smul.addr %s3598, 3
        %s3600 = smul.addr %s3599, 8
        %s3601 = scalar_lea.vmem %s24, %s3600
      $region128: #{dinov2_backbone_forward.1} parent=123 // pred_fallthru
        _
    $region124: #{dinov2_backbone_forward.1} parent=5 // pred_fallthru
      _
  $region6: #{dinov2_backbone_forward.1} parent=0 // loop_footer
    %s34 = sadd.s32 1, %s30
  $region7: #{dinov2_backbone_forward.1} parent=0 // loop_footer_branch
    %29 = sbr.rel target = $region3
  $region8: #{dinov2_backbone_forward.1} parent=0 // loop_exit
    _

</llo_original>
